<compile_context>
chip_gen: v7x
topology: tpu7x:2x2x1
jax: 0.10.0
libtpu: 0.0.40
codegen_flags: <defaults>
</compile_context>

<pallas_src>
import jax
import jax.numpy as jnp
from jax import lax
from jax.experimental import pallas as pl
from jax.experimental.pallas import tpu as pltpu


def _round_up(x, m):
    return ((x + m - 1) // m) * m


# ----------------------------------------------------------------------------
# Pallas kernels
# ----------------------------------------------------------------------------

def _pw_kernel(x_ref, w_ref, b_ref, o_ref):
    """1x1 conv == matmul over channels + bias. x:(tm,Cin) w:(Cin,Cout) b:(1,Cout)."""
    y = jnp.dot(x_ref[...], w_ref[...], preferred_element_type=jnp.float32)
    o_ref[...] = (y + b_ref[...]).astype(o_ref.dtype)


def _pw_res_relu_kernel(x_ref, w_ref, b_ref, r_ref, o_ref):
    """Fused bypass 1x1 conv + spectral-branch residual + ReLU activation."""
    y = jnp.dot(x_ref[...], w_ref[...], preferred_element_type=jnp.float32)
    y = y + b_ref[...] + r_ref[...]
    o_ref[...] = jnp.maximum(y, 0.0).astype(o_ref.dtype)


def _make_spectral_kernel(mb):
    """Per-mode complex channel mix with real/imag fused into the kernel.

    xr,xi:(B,mb,I)  wr,wi:(mb,I,O)  ->  yr,yi:(B,mb,O)
      yr = xr@wr - xi@wi ; yi = xr@wi + xi@wr   (per mode)
    Implemented as statically-unrolled 2-D MXU dots (no batched dot_general /
    in-kernel transposes, so lowering stays simple and robust)."""
    def kernel(xr_ref, xi_ref, wr_ref, wi_ref, yr_ref, yi_ref):
        xr = xr_ref[...]
        xi = xi_ref[...]
        wr = wr_ref[...]
        wi = wi_ref[...]
        for m in range(mb):                       # mb is small -> static unroll
            xrm = xr[:, m, :]                     # (B, I)
            xim = xi[:, m, :]
            wrm = wr[m]                           # (I, O)
            wim = wi[m]
            yr_ref[:, m, :] = (
                jnp.dot(xrm, wrm, preferred_element_type=jnp.float32)
                - jnp.dot(xim, wim, preferred_element_type=jnp.float32)
            ).astype(yr_ref.dtype)
            yi_ref[:, m, :] = (
                jnp.dot(xrm, wim, preferred_element_type=jnp.float32)
                + jnp.dot(xim, wrm, preferred_element_type=jnp.float32)
            ).astype(yi_ref.dtype)
    return kernel


# ----------------------------------------------------------------------------
# Wrappers around pallas_call
# ----------------------------------------------------------------------------

def _pw_matmul(x_flat, w, b, residual=None, tm_max=2048):
    """x_flat:(N,Cin) @ w:(Cin,Cout) + b; optional fused residual:(N,Cout) + ReLU."""
    N, Cin = x_flat.shape
    Cout = w.shape[1]

    # Row-tile choice: big enough to amortize the ~0.35us/step pipeline overhead,
    # but capped so the grid keeps >= 2 "parallel" steps (v7x has 2 TensorCores).
    tm = min(tm_max, max(8, _round_up(pl.cdiv(N, 2), 8)), N)
    grid = (pl.cdiv(N, tm),)
    b2 = b.reshape(1, Cout)

    in_specs = [
        pl.BlockSpec((tm, Cin), lambda i: (i, 0)),
        pl.BlockSpec((Cin, Cout), lambda i: (0, 0)),
        pl.BlockSpec((1, Cout), lambda i: (0, 0)),
    ]
    out_spec = pl.BlockSpec((tm, Cout), lambda i: (i, 0))
    out_shape = jax.ShapeDtypeStruct((N, Cout), x_flat.dtype)

    if residual is None:
        kernel = _pw_kernel
        args = (x_flat, w, b2)
        out_tiles = 1
    else:
        kernel = _pw_res_relu_kernel
        in_specs.append(pl.BlockSpec((tm, Cout), lambda i: (i, 0)))
        args = (x_flat, w, b2, residual)
        out_tiles = 2   # residual tile + output tile

    # Explicit VMEM budget: double-buffered f32 tiles with headroom, capped at
    # 48 MiB so the same tiling also fits v7x's 64 MiB VMEM (128 MiB v5e/v6e).
    words = tm * Cin + Cin * Cout + Cout + out_tiles * tm * Cout
    need = 2 * 4 * words                      # double-buffered f32
    vmem_limit = int(min(48 * 2**20, max(4 * need, 16 * 2**20)))

    return pl.pallas_call(
        kernel,
        grid=grid,
        in_specs=in_specs,
        out_specs=out_spec,
        out_shape=out_shape,
        compiler_params=pltpu.CompilerParams(
            dimension_semantics=("parallel",),
            vmem_limit_bytes=vmem_limit,
        ),
    )(*args)


def _spectral_mix(xr, xi, wr, wi):
    """xr,xi:(B,M,I); wr,wi:(M,I,O) -> yr,yi:(B,M,O). Gridded over mode blocks."""
    B, M, I = xr.shape
    O = wr.shape[2]
    # Coarse mode blocks (per-mode work is tiny) while keeping >= 2 parallel grid
    # steps once M >= 16 so v7x's two TensorCores split the modes; cap the block
    # (and hence the static unroll) at 32 modes.
    if M < 16:
        mb = M
    else:
        mb = min(M, max(8, _round_up(pl.cdiv(M, 2), 8)), 32)
    grid = (pl.cdiv(M, mb),)

    return pl.pallas_call(
        _make_spectral_kernel(mb),
        grid=grid,
        in_specs=[
            pl.BlockSpec((B, mb, I), lambda i: (0, i, 0)),
            pl.BlockSpec((B, mb, I), lambda i: (0, i, 0)),
            pl.BlockSpec((mb, I, O), lambda i: (i, 0, 0)),
            pl.BlockSpec((mb, I, O), lambda i: (i, 0, 0)),
        ],
        out_specs=(
            pl.BlockSpec((B, mb, O), lambda i: (0, i, 0)),
            pl.BlockSpec((B, mb, O), lambda i: (0, i, 0)),
        ),
        out_shape=(
            jax.ShapeDtypeStruct((B, M, O), jnp.float32),
            jax.ShapeDtypeStruct((B, M, O), jnp.float32),
        ),
        compiler_params=pltpu.CompilerParams(dimension_semantics=("parallel",)),
    )(xr, xi, wr, wi)


# ----------------------------------------------------------------------------
# Model forward (channels-last inside; NCHW only at the model boundary)
# ----------------------------------------------------------------------------

def pointwise_nhwc(x, w, b, residual=None):
    """1x1 conv on channels-last x:(B,H,W,Cin)->(B,H,W,Cout). Pure reshape, no transpose."""
    B, H, W, Cin = x.shape
    Cout = w.shape[1]
    x_flat = x.reshape(B * H * W, Cin)

    if residual is not None:
        # Hot path: bypass conv fused with spectral residual + ReLU.
        # (For fully lane-dense stores here, pick width as a multiple of 128.)
        r_flat = residual.reshape(B * H * W, Cout)
        y_flat = _pw_matmul(x_flat, w, b, residual=r_flat)
    else:
        # Boundary convs (lift / proj): pad output channels to a multiple of 128
        # so Pallas stores are full-lane vst instead of masked vst.msk; slice the
        # padding off outside.  Params are jit constants -> the pad is folded.
        c_pad = _round_up(Cout, 128)
        if c_pad != Cout:
            w_p = jnp.pad(w, ((0, 0), (0, c_pad - Cout)))
            b_p = jnp.pad(b, (0, c_pad - Cout))
            y_flat = _pw_matmul(x_flat, w_p, b_p)[:, :Cout]
        else:
            y_flat = _pw_matmul(x_flat, w, b)
    return y_flat.reshape(B, H, W, Cout)


def fno_block(x, blk, modes):
    """One FNOBlockNd: spectral conv + 1x1 bypass; residual add + ReLU fused in Pallas."""
    B, H, W, C = x.shape
    m1, m2 = modes
    M = m1 * m2
    O = blk["bypass_w"].shape[1]

    # --- spectral branch ---
    # TODO(synk): rfftn / irfftn have no Pallas TPU primitive; they stay in XLA.
    xf = jnp.fft.rfftn(x, axes=(1, 2), norm="ortho")[:, :m1, :m2, :]   # (B,m1,m2,C) c64
    xr = jnp.real(xf).reshape(B, M, C)                                  # (B,M,C) f32
    xi = jnp.imag(xf).reshape(B, M, C)
    yr, yi = _spectral_mix(xr, xi, blk["wr"], blk["wi"])                # (B,M,O) f32
    of = lax.complex(yr, yi).reshape(B, m1, m2, O)                      # (B,m1,m2,O) c64
    # irfftn with s zero-pads the truncated spectrum back to full size (as torch does)
    x_spec = jnp.fft.irfftn(of, s=(H, W), axes=(1, 2), norm="ortho").astype(jnp.float32)

    # --- bypass 1x1 conv + residual add + ReLU fused in one Pallas kernel ---
    return pointwise_nhwc(x, blk["bypass_w"], blk["bypass_b"], residual=x_spec)


def fno_forward(x_nchw, params, modes):
    x = jnp.transpose(x_nchw, (0, 2, 3, 1))     # NCHW -> NHWC once
    x = pointwise_nhwc(x, params["lift_w"], params["lift_b"])
    for blk in params["blocks"]:
        x = fno_block(x, blk, modes)
    x = pointwise_nhwc(x, params["proj_w"], params["proj_b"])
    return jnp.transpose(x, (0, 3, 1, 2))       # NHWC -> NCHW once


# ----------------------------------------------------------------------------
# Deterministic parameter initialization (shapes mirror the PyTorch module)
# ----------------------------------------------------------------------------

def init_params(key, in_c, out_c, modes, width, n_blocks):
    m1, m2 = modes
    M = m1 * m2
    keys = iter(jax.random.split(key, 4 + 4 * n_blocks))
    spec_scale = 1.0 / (width * width)   # scale = 1/(in_c*out_c); in_c=out_c=width in blocks

    params = {
        # conv weights stored as (Cin, Cout) so x_flat @ w reproduces a 1x1 conv
        "lift_w": jax.random.normal(next(keys), (in_c, width), jnp.float32)
        / jnp.sqrt(jnp.float32(in_c)),
        "lift_b": jax.random.normal(next(keys), (width,), jnp.float32) * 0.01,
        "proj_w": jax.random.normal(next(keys), (width, out_c), jnp.float32)
        / jnp.sqrt(jnp.float32(width)),
        "proj_b": jax.random.normal(next(keys), (out_c,), jnp.float32) * 0.01,
        "blocks": [],
    }
    for _ in range(n_blocks):
        # spec weight = randn(cfloat) * 2*scale - scale (real/imag parts kept separate)
        wr = (jax.random.normal(next(keys), (width, width, m1, m2), jnp.float32)
              * 2.0 * spec_scale - spec_scale)
        wi = (jax.random.normal(next(keys), (width, width, m1, m2), jnp.float32)
              * 2.0 * spec_scale - spec_scale)
        # (I, O, m1, m2) -> (M, I, O): the spectral kernel consumes the per-mode
        # complex weight as two real tensors (no duplicated block matrix).
        wr_m = jnp.transpose(wr.reshape(width, width, M), (2, 0, 1))
        wi_m = jnp.transpose(wi.reshape(width, width, M), (2, 0, 1))
        bw = (jax.random.normal(next(keys), (width, width), jnp.float32)
              / jnp.sqrt(jnp.float32(width)))
        bb = jax.random.normal(next(keys), (width,), jnp.float32) * 0.01
        params["blocks"].append(
            {"wr": wr_m, "wi": wi_m, "bypass_w": bw, "bypass_b": bb})
    return params


# ----------------------------------------------------------------------------
# Main
# ----------------------------------------------------------------------------

if __name__ == "__main__":
    key = jax.random.PRNGKey(0)
    k_param, k_input = jax.random.split(key)

    # Small 2-D FNO configuration
    B, in_c, out_c = 2, 4, 3
    H, W = 16, 16
    modes = [4, 4]          # Fourier modes kept per spatial dim
    width = 32
    n_blocks = 2            # activation = ReLU (fused in the bypass kernel)

    params = init_params(k_param, in_c, out_c, modes, width, n_blocks)
    x = jax.random.normal(k_input, (B, in_c, H, W), jnp.float32)

    fwd = jax.jit(lambda xin: fno_forward(xin, params, modes))
    y = fwd(x)
    jax.block_until_ready(y)

    assert y.shape == (B, out_c, H, W), y.shape
    assert y.dtype == jnp.float32
    assert bool(jnp.all(jnp.isfinite(y)))
    print("KERNEL_OK")
</pallas_src>

<mosaic_0001>
module attributes {stable_mosaic.version = 11 : i64} {
  func.func @_pw_kernel(%arg0: i32, %arg1: memref<256x4xf32, #tpu.memory_space<vmem>>, %arg2: memref<4x128xf32, #tpu.memory_space<vmem>>, %arg3: memref<1x128xf32, #tpu.memory_space<vmem>>, %arg4: memref<256x128xf32, #tpu.memory_space<vmem>>) attributes {dimension_semantics = [#tpu.dimension_semantics<parallel>], iteration_bounds = array<i64: 2>, scalar_prefetch = 0 : i64, scratch_operands = 0 : i64, tpu.core_type = #tpu.core_type<tc>, window_params = [{transform_indices = @transform_0, window_bounds = array<i64: 256, 4>}, {pipeline_mode = #tpu.pipeline_mode<synchronous>, transform_indices = @transform_1, window_bounds = array<i64: 4, 128>}, {pipeline_mode = #tpu.pipeline_mode<synchronous>, transform_indices = @transform_2, window_bounds = array<i64: 1, 128>}, {transform_indices = @transform_3, window_bounds = array<i64: 256, 128>}]} {
    %c0 = arith.constant 0 : index
    %c0_0 = arith.constant 0 : index
    %0 = vector.load %arg1[%c0, %c0_0] : memref<256x4xf32, #tpu.memory_space<vmem>>, vector<256x4xf32>
    %c0_1 = arith.constant 0 : index
    %c0_2 = arith.constant 0 : index
    %1 = vector.load %arg2[%c0_1, %c0_2] : memref<4x128xf32, #tpu.memory_space<vmem>>, vector<4x128xf32>
    %cst = arith.constant dense<0.000000e+00> : vector<256x128xf32>
    %2 = tpu.matmul %0, %1, %cst {dimension_numbers = #tpu.dot_dimension_numbers<[1], [0], [0], [1], [0, 0, 1, 1], [], []>} : vector<256x4xf32>, vector<4x128xf32>, vector<256x128xf32> -> vector<256x128xf32>
    %c0_3 = arith.constant 0 : index
    %c0_4 = arith.constant 0 : index
    %3 = vector.load %arg3[%c0_3, %c0_4] : memref<1x128xf32, #tpu.memory_space<vmem>>, vector<1x128xf32>
    %4 = vector.broadcast %3 : vector<1x128xf32> to vector<256x128xf32>
    %5 = arith.addf %2, %4 : vector<256x128xf32>
    %c0_5 = arith.constant 0 : index
    %c0_6 = arith.constant 0 : index
    %6 = vector.load %arg4[%c0_5, %c0_6] : memref<256x128xf32, #tpu.memory_space<vmem>>, vector<256x128xf32>
    tpu.vector_store %arg4[%c0_5, %c0_6], %5 {strides = array<i32>} : memref<256x128xf32, #tpu.memory_space<vmem>>, vector<256x128xf32>,
    return
  }
  func.func @transform_0(%arg0: i32) -> (i32, i32) {
    %c0_i32 = arith.constant 0 : i32
    %c0_i32_0 = arith.constant 0 : i32
    return %arg0, %c0_i32 : i32, i32
  }
  func.func @transform_1(%arg0: i32) -> (i32, i32) {
    %c0_i32 = arith.constant 0 : i32
    %c0_i32_0 = arith.constant 0 : i32
    %c0_i32_1 = arith.constant 0 : i32
    return %c0_i32, %c0_i32_0 : i32, i32
  }
  func.func @transform_2(%arg0: i32) -> (i32, i32) {
    %c0_i32 = arith.constant 0 : i32
    %c0_i32_0 = arith.constant 0 : i32
    %c0_i32_1 = arith.constant 0 : i32
    return %c0_i32, %c0_i32_0 : i32, i32
  }
  func.func @transform_3(%arg0: i32) -> (i32, i32) {
    %c0_i32 = arith.constant 0 : i32
    %c0_i32_0 = arith.constant 0 : i32
    return %arg0, %c0_i32 : i32, i32
  }
}

module attributes {stable_mosaic.version = 11 : i64} {
  func.func @kernel(%arg0: i32, %arg1: memref<2x8x32xf32, #tpu.memory_space<vmem>>, %arg2: memref<2x8x32xf32, #tpu.memory_space<vmem>>, %arg3: memref<8x32x32xf32, #tpu.memory_space<vmem>>, %arg4: memref<8x32x32xf32, #tpu.memory_space<vmem>>, %arg5: memref<2x8x32xf32, #tpu.memory_space<vmem>>, %arg6: memref<2x8x32xf32, #tpu.memory_space<vmem>>) attributes {dimension_semantics = [#tpu.dimension_semantics<parallel>], iteration_bounds = array<i64: 2>, scalar_prefetch = 0 : i64, scratch_operands = 0 : i64, tpu.core_type = #tpu.core_type<tc>, window_params = [{transform_indices = @transform_0, window_bounds = array<i64: 2, 8, 32>}, {transform_indices = @transform_1, window_bounds = array<i64: 2, 8, 32>}, {transform_indices = @transform_2, window_bounds = array<i64: 8, 32, 32>}, {transform_indices = @transform_3, window_bounds = array<i64: 8, 32, 32>}, {transform_indices = @transform_4, window_bounds = array<i64: 2, 8, 32>}, {transform_indices = @transform_5, window_bounds = array<i64: 2, 8, 32>}]} {
    %c0 = arith.constant 0 : index
    %c0_0 = arith.constant 0 : index
    %c0_1 = arith.constant 0 : index
    %0 = vector.load %arg1[%c0, %c0_0, %c0_1] : memref<2x8x32xf32, #tpu.memory_space<vmem>>, vector<2x8x32xf32>
    %c0_2 = arith.constant 0 : index
    %c0_3 = arith.constant 0 : index
    %c0_4 = arith.constant 0 : index
    %1 = vector.load %arg2[%c0_2, %c0_3, %c0_4] : memref<2x8x32xf32, #tpu.memory_space<vmem>>, vector<2x8x32xf32>
    %c0_5 = arith.constant 0 : index
    %c0_6 = arith.constant 0 : index
    %c0_7 = arith.constant 0 : index
    %2 = vector.load %arg3[%c0_5, %c0_6, %c0_7] : memref<8x32x32xf32, #tpu.memory_space<vmem>>, vector<8x32x32xf32>
    %c0_8 = arith.constant 0 : index
    %c0_9 = arith.constant 0 : index
    %c0_10 = arith.constant 0 : index
    %3 = vector.load %arg4[%c0_8, %c0_9, %c0_10] : memref<8x32x32xf32, #tpu.memory_space<vmem>>, vector<8x32x32xf32>
    %4 = vector.extract_strided_slice %0 {offsets = [0, 0, 0], sizes = [2, 1, 32], strides = [1, 1, 1]} : vector<2x8x32xf32> to vector<2x1x32xf32>
    %5 = vector.shape_cast %4 : vector<2x1x32xf32> to vector<2x32xf32>
    %6 = vector.extract_strided_slice %1 {offsets = [0, 0, 0], sizes = [2, 1, 32], strides = [1, 1, 1]} : vector<2x8x32xf32> to vector<2x1x32xf32>
    %7 = vector.shape_cast %6 : vector<2x1x32xf32> to vector<2x32xf32>
    %8 = vector.extract_strided_slice %2 {offsets = [0, 0, 0], sizes = [1, 32, 32], strides = [1, 1, 1]} : vector<8x32x32xf32> to vector<1x32x32xf32>
    %9 = vector.shape_cast %8 : vector<1x32x32xf32> to vector<32x32xf32>
    %10 = vector.extract_strided_slice %3 {offsets = [0, 0, 0], sizes = [1, 32, 32], strides = [1, 1, 1]} : vector<8x32x32xf32> to vector<1x32x32xf32>
    %11 = vector.shape_cast %10 : vector<1x32x32xf32> to vector<32x32xf32>
    %cst = arith.constant dense<0.000000e+00> : vector<2x32xf32>
    %12 = tpu.matmul %5, %9, %cst {dimension_numbers = #tpu.dot_dimension_numbers<[1], [0], [0], [1], [0, 0, 1, 1], [], []>} : vector<2x32xf32>, vector<32x32xf32>, vector<2x32xf32> -> vector<2x32xf32>
    %cst_11 = arith.constant dense<0.000000e+00> : vector<2x32xf32>
    %13 = tpu.matmul %7, %11, %cst_11 {dimension_numbers = #tpu.dot_dimension_numbers<[1], [0], [0], [1], [0, 0, 1, 1], [], []>} : vector<2x32xf32>, vector<32x32xf32>, vector<2x32xf32> -> vector<2x32xf32>
    %14 = arith.subf %12, %13 : vector<2x32xf32>
    %c0_12 = arith.constant 0 : index
    %c0_13 = arith.constant 0 : index
    %c0_14 = arith.constant 0 : index
    %15 = vector.load %arg5[%c0_12, %c0_13, %c0_14] : memref<2x8x32xf32, #tpu.memory_space<vmem>>, vector<2x1x32xf32>
    %16 = vector.shape_cast %15 : vector<2x1x32xf32> to vector<2x32xf32>
    %17 = vector.shape_cast %14 : vector<2x32xf32> to vector<2x1x32xf32>
    tpu.vector_store %arg5[%c0_12, %c0_13, %c0_14], %17 {strides = array<i32>} : memref<2x8x32xf32, #tpu.memory_space<vmem>>, vector<2x1x32xf32>,
    %cst_15 = arith.constant dense<0.000000e+00> : vector<2x32xf32>
    %18 = tpu.matmul %5, %11, %cst_15 {dimension_numbers = #tpu.dot_dimension_numbers<[1], [0], [0], [1], [0, 0, 1, 1], [], []>} : vector<2x32xf32>, vector<32x32xf32>, vector<2x32xf32> -> vector<2x32xf32>
    %cst_16 = arith.constant dense<0.000000e+00> : vector<2x32xf32>
    %19 = tpu.matmul %7, %9, %cst_16 {dimension_numbers = #tpu.dot_dimension_numbers<[1], [0], [0], [1], [0, 0, 1, 1], [], []>} : vector<2x32xf32>, vector<32x32xf32>, vector<2x32xf32> -> vector<2x32xf32>
    %20 = arith.addf %18, %19 : vector<2x32xf32>
    %c0_17 = arith.constant 0 : index
    %c0_18 = arith.constant 0 : index
    %c0_19 = arith.constant 0 : index
    %21 = vector.load %arg6[%c0_17, %c0_18, %c0_19] : memref<2x8x32xf32, #tpu.memory_space<vmem>>, vector<2x1x32xf32>
    %22 = vector.shape_cast %21 : vector<2x1x32xf32> to vector<2x32xf32>
    %23 = vector.shape_cast %20 : vector<2x32xf32> to vector<2x1x32xf32>
    tpu.vector_store %arg6[%c0_17, %c0_18, %c0_19], %23 {strides = array<i32>} : memref<2x8x32xf32, #tpu.memory_space<vmem>>, vector<2x1x32xf32>,
    %24 = vector.extract_strided_slice %0 {offsets = [0, 1, 0], sizes = [2, 1, 32], strides = [1, 1, 1]} : vector<2x8x32xf32> to vector<2x1x32xf32>
    %25 = vector.shape_cast %24 : vector<2x1x32xf32> to vector<2x32xf32>
    %26 = vector.extract_strided_slice %1 {offsets = [0, 1, 0], sizes = [2, 1, 32], strides = [1, 1, 1]} : vector<2x8x32xf32> to vector<2x1x32xf32>
    %27 = vector.shape_cast %26 : vector<2x1x32xf32> to vector<2x32xf32>
    %28 = vector.extract_strided_slice %2 {offsets = [1, 0, 0], sizes = [1, 32, 32], strides = [1, 1, 1]} : vector<8x32x32xf32> to vector<1x32x32xf32>
    %29 = vector.shape_cast %28 : vector<1x32x32xf32> to vector<32x32xf32>
    %30 = vector.extract_strided_slice %3 {offsets = [1, 0, 0], sizes = [1, 32, 32], strides = [1, 1, 1]} : vector<8x32x32xf32> to vector<1x32x32xf32>
    %31 = vector.shape_cast %30 : vector<1x32x32xf32> to vector<32x32xf32>
    %cst_20 = arith.constant dense<0.000000e+00> : vector<2x32xf32>
    %32 = tpu.matmul %25, %29, %cst_20 {dimension_numbers = #tpu.dot_dimension_numbers<[1], [0], [0], [1], [0, 0, 1, 1], [], []>} : vector<2x32xf32>, vector<32x32xf32>, vector<2x32xf32> -> vector<2x32xf32>
    %cst_21 = arith.constant dense<0.000000e+00> : vector<2x32xf32>
    %33 = tpu.matmul %27, %31, %cst_21 {dimension_numbers = #tpu.dot_dimension_numbers<[1], [0], [0], [1], [0, 0, 1, 1], [], []>} : vector<2x32xf32>, vector<32x32xf32>, vector<2x32xf32> -> vector<2x32xf32>
    %34 = arith.subf %32, %33 : vector<2x32xf32>
    %c0_22 = arith.constant 0 : index
    %c1 = arith.constant 1 : index
    %c0_23 = arith.constant 0 : index
    %35 = vector.load %arg5[%c0_22, %c1, %c0_23] : memref<2x8x32xf32, #tpu.memory_space<vmem>>, vector<2x1x32xf32>
    %36 = vector.shape_cast %35 : vector<2x1x32xf32> to vector<2x32xf32>
    %37 = vector.shape_cast %34 : vector<2x32xf32> to vector<2x1x32xf32>
    tpu.vector_store %arg5[%c0_22, %c1, %c0_23], %37 {strides = array<i32>} : memref<2x8x32xf32, #tpu.memory_space<vmem>>, vector<2x1x32xf32>,
    %cst_24 = arith.constant dense<0.000000e+00> : vector<2x32xf32>
    %38 = tpu.matmul %25, %31, %cst_24 {dimension_numbers = #tpu.dot_dimension_numbers<[1], [0], [0], [1], [0, 0, 1, 1], [], []>} : vector<2x32xf32>, vector<32x32xf32>, vector<2x32xf32> -> vector<2x32xf32>
    %cst_25 = arith.constant dense<0.000000e+00> : vector<2x32xf32>
    %39 = tpu.matmul %27, %29, %cst_25 {dimension_numbers = #tpu.dot_dimension_numbers<[1], [0], [0], [1], [0, 0, 1, 1], [], []>} : vector<2x32xf32>, vector<32x32xf32>, vector<2x32xf32> -> vector<2x32xf32>
    %40 = arith.addf %38, %39 : vector<2x32xf32>
    %c0_26 = arith.constant 0 : index
    %c1_27 = arith.constant 1 : index
    %c0_28 = arith.constant 0 : index
    %41 = vector.load %arg6[%c0_26, %c1_27, %c0_28] : memref<2x8x32xf32, #tpu.memory_space<vmem>>, vector<2x1x32xf32>
    %42 = vector.shape_cast %41 : vector<2x1x32xf32> to vector<2x32xf32>
    %43 = vector.shape_cast %40 : vector<2x32xf32> to vector<2x1x32xf32>
    tpu.vector_store %arg6[%c0_26, %c1_27, %c0_28], %43 {strides = array<i32>} : memref<2x8x32xf32, #tpu.memory_space<vmem>>, vector<2x1x32xf32>,
    %44 = vector.extract_strided_slice %0 {offsets = [0, 2, 0], sizes = [2, 1, 32], strides = [1, 1, 1]} : vector<2x8x32xf32> to vector<2x1x32xf32>
    %45 = vector.shape_cast %44 : vector<2x1x32xf32> to vector<2x32xf32>
    %46 = vector.extract_strided_slice %1 {offsets = [0, 2, 0], sizes = [2, 1, 32], strides = [1, 1, 1]} : vector<2x8x32xf32> to vector<2x1x32xf32>
    %47 = vector.shape_cast %46 : vector<2x1x32xf32> to vector<2x32xf32>
    %48 = vector.extract_strided_slice %2 {offsets = [2, 0, 0], sizes = [1, 32, 32], strides = [1, 1, 1]} : vector<8x32x32xf32> to vector<1x32x32xf32>
    %49 = vector.shape_cast %48 : vector<1x32x32xf32> to vector<32x32xf32>
    %50 = vector.extract_strided_slice %3 {offsets = [2, 0, 0], sizes = [1, 32, 32], strides = [1, 1, 1]} : vector<8x32x32xf32> to vector<1x32x32xf32>
    %51 = vector.shape_cast %50 : vector<1x32x32xf32> to vector<32x32xf32>
    %cst_29 = arith.constant dense<0.000000e+00> : vector<2x32xf32>
    %52 = tpu.matmul %45, %49, %cst_29 {dimension_numbers = #tpu.dot_dimension_numbers<[1], [0], [0], [1], [0, 0, 1, 1], [], []>} : vector<2x32xf32>, vector<32x32xf32>, vector<2x32xf32> -> vector<2x32xf32>
    %cst_30 = arith.constant dense<0.000000e+00> : vector<2x32xf32>
    %53 = tpu.matmul %47, %51, %cst_30 {dimension_numbers = #tpu.dot_dimension_numbers<[1], [0], [0], [1], [0, 0, 1, 1], [], []>} : vector<2x32xf32>, vector<32x32xf32>, vector<2x32xf32> -> vector<2x32xf32>
    %54 = arith.subf %52, %53 : vector<2x32xf32>
    %c0_31 = arith.constant 0 : index
    %c2 = arith.constant 2 : index
    %c0_32 = arith.constant 0 : index
    %55 = vector.load %arg5[%c0_31, %c2, %c0_32] : memref<2x8x32xf32, #tpu.memory_space<vmem>>, vector<2x1x32xf32>
    %56 = vector.shape_cast %55 : vector<2x1x32xf32> to vector<2x32xf32>
    %57 = vector.shape_cast %54 : vector<2x32xf32> to vector<2x1x32xf32>
    tpu.vector_store %arg5[%c0_31, %c2, %c0_32], %57 {strides = array<i32>} : memref<2x8x32xf32, #tpu.memory_space<vmem>>, vector<2x1x32xf32>,
    %cst_33 = arith.constant dense<0.000000e+00> : vector<2x32xf32>
    %58 = tpu.matmul %45, %51, %cst_33 {dimension_numbers = #tpu.dot_dimension_numbers<[1], [0], [0], [1], [0, 0, 1, 1], [], []>} : vector<2x32xf32>, vector<32x32xf32>, vector<2x32xf32> -> vector<2x32xf32>
    %cst_34 = arith.constant dense<0.000000e+00> : vector<2x32xf32>
    %59 = tpu.matmul %47, %49, %cst_34 {dimension_numbers = #tpu.dot_dimension_numbers<[1], [0], [0], [1], [0, 0, 1, 1], [], []>} : vector<2x32xf32>, vector<32x32xf32>, vector<2x32xf32> -> vector<2x32xf32>
    %60 = arith.addf %58, %59 : vector<2x32xf32>
    %c0_35 = arith.constant 0 : index
    %c2_36 = arith.constant 2 : index
    %c0_37 = arith.constant 0 : index
    %61 = vector.load %arg6[%c0_35, %c2_36, %c0_37] : memref<2x8x32xf32, #tpu.memory_space<vmem>>, vector<2x1x32xf32>
    %62 = vector.shape_cast %61 : vector<2x1x32xf32> to vector<2x32xf32>
    %63 = vector.shape_cast %60 : vector<2x32xf32> to vector<2x1x32xf32>
    tpu.vector_store %arg6[%c0_35, %c2_36, %c0_37], %63 {strides = array<i32>} : memref<2x8x32xf32, #tpu.memory_space<vmem>>, vector<2x1x32xf32>,
    %64 = vector.extract_strided_slice %0 {offsets = [0, 3, 0], sizes = [2, 1, 32], strides = [1, 1, 1]} : vector<2x8x32xf32> to vector<2x1x32xf32>
    %65 = vector.shape_cast %64 : vector<2x1x32xf32> to vector<2x32xf32>
    %66 = vector.extract_strided_slice %1 {offsets = [0, 3, 0], sizes = [2, 1, 32], strides = [1, 1, 1]} : vector<2x8x32xf32> to vector<2x1x32xf32>
    %67 = vector.shape_cast %66 : vector<2x1x32xf32> to vector<2x32xf32>
    %68 = vector.extract_strided_slice %2 {offsets = [3, 0, 0], sizes = [1, 32, 32], strides = [1, 1, 1]} : vector<8x32x32xf32> to vector<1x32x32xf32>
    %69 = vector.shape_cast %68 : vector<1x32x32xf32> to vector<32x32xf32>
    %70 = vector.extract_strided_slice %3 {offsets = [3, 0, 0], sizes = [1, 32, 32], strides = [1, 1, 1]} : vector<8x32x32xf32> to vector<1x32x32xf32>
    %71 = vector.shape_cast %70 : vector<1x32x32xf32> to vector<32x32xf32>
    %cst_38 = arith.constant dense<0.000000e+00> : vector<2x32xf32>
    %72 = tpu.matmul %65, %69, %cst_38 {dimension_numbers = #tpu.dot_dimension_numbers<[1], [0], [0], [1], [0, 0, 1, 1], [], []>} : vector<2x32xf32>, vector<32x32xf32>, vector<2x32xf32> -> vector<2x32xf32>
    %cst_39 = arith.constant dense<0.000000e+00> : vector<2x32xf32>
    %73 = tpu.matmul %67, %71, %cst_39 {dimension_numbers = #tpu.dot_dimension_numbers<[1], [0], [0], [1], [0, 0, 1, 1], [], []>} : vector<2x32xf32>, vector<32x32xf32>, vector<2x32xf32> -> vector<2x32xf32>
    %74 = arith.subf %72, %73 : vector<2x32xf32>
    %c0_40 = arith.constant 0 : index
    %c3 = arith.constant 3 : index
    %c0_41 = arith.constant 0 : index
    %75 = vector.load %arg5[%c0_40, %c3, %c0_41] : memref<2x8x32xf32, #tpu.memory_space<vmem>>, vector<2x1x32xf32>
    %76 = vector.shape_cast %75 : vector<2x1x32xf32> to vector<2x32xf32>
    %77 = vector.shape_cast %74 : vector<2x32xf32> to vector<2x1x32xf32>
    tpu.vector_store %arg5[%c0_40, %c3, %c0_41], %77 {strides = array<i32>} : memref<2x8x32xf32, #tpu.memory_space<vmem>>, vector<2x1x32xf32>,
    %cst_42 = arith.constant dense<0.000000e+00> : vector<2x32xf32>
    %78 = tpu.matmul %65, %71, %cst_42 {dimension_numbers = #tpu.dot_dimension_numbers<[1], [0], [0], [1], [0, 0, 1, 1], [], []>} : vector<2x32xf32>, vector<32x32xf32>, vector<2x32xf32> -> vector<2x32xf32>
    %cst_43 = arith.constant dense<0.000000e+00> : vector<2x32xf32>
    %79 = tpu.matmul %67, %69, %cst_43 {dimension_numbers = #tpu.dot_dimension_numbers<[1], [0], [0], [1], [0, 0, 1, 1], [], []>} : vector<2x32xf32>, vector<32x32xf32>, vector<2x32xf32> -> vector<2x32xf32>
    %80 = arith.addf %78, %79 : vector<2x32xf32>
    %c0_44 = arith.constant 0 : index
    %c3_45 = arith.constant 3 : index
    %c0_46 = arith.constant 0 : index
    %81 = vector.load %arg6[%c0_44, %c3_45, %c0_46] : memref<2x8x32xf32, #tpu.memory_space<vmem>>, vector<2x1x32xf32>
    %82 = vector.shape_cast %81 : vector<2x1x32xf32> to vector<2x32xf32>
    %83 = vector.shape_cast %80 : vector<2x32xf32> to vector<2x1x32xf32>
    tpu.vector_store %arg6[%c0_44, %c3_45, %c0_46], %83 {strides = array<i32>} : memref<2x8x32xf32, #tpu.memory_space<vmem>>, vector<2x1x32xf32>,
    %84 = vector.extract_strided_slice %0 {offsets = [0, 4, 0], sizes = [2, 1, 32], strides = [1, 1, 1]} : vector<2x8x32xf32> to vector<2x1x32xf32>
    %85 = vector.shape_cast %84 : vector<2x1x32xf32> to vector<2x32xf32>
    %86 = vector.extract_strided_slice %1 {offsets = [0, 4, 0], sizes = [2, 1, 32], strides = [1, 1, 1]} : vector<2x8x32xf32> to vector<2x1x32xf32>
    %87 = vector.shape_cast %86 : vector<2x1x32xf32> to vector<2x32xf32>
    %88 = vector.extract_strided_slice %2 {offsets = [4, 0, 0], sizes = [1, 32, 32], strides = [1, 1, 1]} : vector<8x32x32xf32> to vector<1x32x32xf32>
    %89 = vector.shape_cast %88 : vector<1x32x32xf32> to vector<32x32xf32>
    %90 = vector.extract_strided_slice %3 {offsets = [4, 0, 0], sizes = [1, 32, 32], strides = [1, 1, 1]} : vector<8x32x32xf32> to vector<1x32x32xf32>
    %91 = vector.shape_cast %90 : vector<1x32x32xf32> to vector<32x32xf32>
    %cst_47 = arith.constant dense<0.000000e+00> : vector<2x32xf32>
    %92 = tpu.matmul %85, %89, %cst_47 {dimension_numbers = #tpu.dot_dimension_numbers<[1], [0], [0], [1], [0, 0, 1, 1], [], []>} : vector<2x32xf32>, vector<32x32xf32>, vector<2x32xf32> -> vector<2x32xf32>
    %cst_48 = arith.constant dense<0.000000e+00> : vector<2x32xf32>
    %93 = tpu.matmul %87, %91, %cst_48 {dimension_numbers = #tpu.dot_dimension_numbers<[1], [0], [0], [1], [0, 0, 1, 1], [], []>} : vector<2x32xf32>, vector<32x32xf32>, vector<2x32xf32> -> vector<2x32xf32>
    %94 = arith.subf %92, %93 : vector<2x32xf32>
    %c0_49 = arith.constant 0 : index
    %c4 = arith.constant 4 : index
    %c0_50 = arith.constant 0 : index
    %95 = vector.load %arg5[%c0_49, %c4, %c0_50] : memref<2x8x32xf32, #tpu.memory_space<vmem>>, vector<2x1x32xf32>
    %96 = vector.shape_cast %95 : vector<2x1x32xf32> to vector<2x32xf32>
    %97 = vector.shape_cast %94 : vector<2x32xf32> to vector<2x1x32xf32>
    tpu.vector_store %arg5[%c0_49, %c4, %c0_50], %97 {strides = array<i32>} : memref<2x8x32xf32, #tpu.memory_space<vmem>>, vector<2x1x32xf32>,
    %cst_51 = arith.constant dense<0.000000e+00> : vector<2x32xf32>
    %98 = tpu.matmul %85, %91, %cst_51 {dimension_numbers = #tpu.dot_dimension_numbers<[1], [0], [0], [1], [0, 0, 1, 1], [], []>} : vector<2x32xf32>, vector<32x32xf32>, vector<2x32xf32> -> vector<2x32xf32>
    %cst_52 = arith.constant dense<0.000000e+00> : vector<2x32xf32>
    %99 = tpu.matmul %87, %89, %cst_52 {dimension_numbers = #tpu.dot_dimension_numbers<[1], [0], [0], [1], [0, 0, 1, 1], [], []>} : vector<2x32xf32>, vector<32x32xf32>, vector<2x32xf32> -> vector<2x32xf32>
    %100 = arith.addf %98, %99 : vector<2x32xf32>
    %c0_53 = arith.constant 0 : index
    %c4_54 = arith.constant 4 : index
    %c0_55 = arith.constant 0 : index
    %101 = vector.load %arg6[%c0_53, %c4_54, %c0_55] : memref<2x8x32xf32, #tpu.memory_space<vmem>>, vector<2x1x32xf32>
    %102 = vector.shape_cast %101 : vector<2x1x32xf32> to vector<2x32xf32>
    %103 = vector.shape_cast %100 : vector<2x32xf32> to vector<2x1x32xf32>
    tpu.vector_store %arg6[%c0_53, %c4_54, %c0_55], %103 {strides = array<i32>} : memref<2x8x32xf32, #tpu.memory_space<vmem>>, vector<2x1x32xf32>,
    %104 = vector.extract_strided_slice %0 {offsets = [0, 5, 0], sizes = [2, 1, 32], strides = [1, 1, 1]} : vector<2x8x32xf32> to vector<2x1x32xf32>
    %105 = vector.shape_cast %104 : vector<2x1x32xf32> to vector<2x32xf32>
    %106 = vector.extract_strided_slice %1 {offsets = [0, 5, 0], sizes = [2, 1, 32], strides = [1, 1, 1]} : vector<2x8x32xf32> to vector<2x1x32xf32>
    %107 = vector.shape_cast %106 : vector<2x1x32xf32> to vector<2x32xf32>
    %108 = vector.extract_strided_slice %2 {offsets = [5, 0, 0], sizes = [1, 32, 32], strides = [1, 1, 1]} : vector<8x32x32xf32> to vector<1x32x32xf32>
    %109 = vector.shape_cast %108 : vector<1x32x32xf32> to vector<32x32xf32>
    %110 = vector.extract_strided_slice %3 {offsets = [5, 0, 0], sizes = [1, 32, 32], strides = [1, 1, 1]} : vector<8x32x32xf32> to vector<1x32x32xf32>
    %111 = vector.shape_cast %110 : vector<1x32x32xf32> to vector<32x32xf32>
    %cst_56 = arith.constant dense<0.000000e+00> : vector<2x32xf32>
    %112 = tpu.matmul %105, %109, %cst_56 {dimension_numbers = #tpu.dot_dimension_numbers<[1], [0], [0], [1], [0, 0, 1, 1], [], []>} : vector<2x32xf32>, vector<32x32xf32>, vector<2x32xf32> -> vector<2x32xf32>
    %cst_57 = arith.constant dense<0.000000e+00> : vector<2x32xf32>
    %113 = tpu.matmul %107, %111, %cst_57 {dimension_numbers = #tpu.dot_dimension_numbers<[1], [0], [0], [1], [0, 0, 1, 1], [], []>} : vector<2x32xf32>, vector<32x32xf32>, vector<2x32xf32> -> vector<2x32xf32>
    %114 = arith.subf %112, %113 : vector<2x32xf32>
    %c0_58 = arith.constant 0 : index
    %c5 = arith.constant 5 : index
    %c0_59 = arith.constant 0 : index
    %115 = vector.load %arg5[%c0_58, %c5, %c0_59] : memref<2x8x32xf32, #tpu.memory_space<vmem>>, vector<2x1x32xf32>
    %116 = vector.shape_cast %115 : vector<2x1x32xf32> to vector<2x32xf32>
    %117 = vector.shape_cast %114 : vector<2x32xf32> to vector<2x1x32xf32>
    tpu.vector_store %arg5[%c0_58, %c5, %c0_59], %117 {strides = array<i32>} : memref<2x8x32xf32, #tpu.memory_space<vmem>>, vector<2x1x32xf32>,
    %cst_60 = arith.constant dense<0.000000e+00> : vector<2x32xf32>
    %118 = tpu.matmul %105, %111, %cst_60 {dimension_numbers = #tpu.dot_dimension_numbers<[1], [0], [0], [1], [0, 0, 1, 1], [], []>} : vector<2x32xf32>, vector<32x32xf32>, vector<2x32xf32> -> vector<2x32xf32>
    %cst_61 = arith.constant dense<0.000000e+00> : vector<2x32xf32>
    %119 = tpu.matmul %107, %109, %cst_61 {dimension_numbers = #tpu.dot_dimension_numbers<[1], [0], [0], [1], [0, 0, 1, 1], [], []>} : vector<2x32xf32>, vector<32x32xf32>, vector<2x32xf32> -> vector<2x32xf32>
    %120 = arith.addf %118, %119 : vector<2x32xf32>
    %c0_62 = arith.constant 0 : index
    %c5_63 = arith.constant 5 : index
    %c0_64 = arith.constant 0 : index
    %121 = vector.load %arg6[%c0_62, %c5_63, %c0_64] : memref<2x8x32xf32, #tpu.memory_space<vmem>>, vector<2x1x32xf32>
    %122 = vector.shape_cast %121 : vector<2x1x32xf32> to vector<2x32xf32>
    %123 = vector.shape_cast %120 : vector<2x32xf32> to vector<2x1x32xf32>
    tpu.vector_store %arg6[%c0_62, %c5_63, %c0_64], %123 {strides = array<i32>} : memref<2x8x32xf32, #tpu.memory_space<vmem>>, vector<2x1x32xf32>,
    %124 = vector.extract_strided_slice %0 {offsets = [0, 6, 0], sizes = [2, 1, 32], strides = [1, 1, 1]} : vector<2x8x32xf32> to vector<2x1x32xf32>
    %125 = vector.shape_cast %124 : vector<2x1x32xf32> to vector<2x32xf32>
    %126 = vector.extract_strided_slice %1 {offsets = [0, 6, 0], sizes = [2, 1, 32], strides = [1, 1, 1]} : vector<2x8x32xf32> to vector<2x1x32xf32>
    %127 = vector.shape_cast %126 : vector<2x1x32xf32> to vector<2x32xf32>
    %128 = vector.extract_strided_slice %2 {offsets = [6, 0, 0], sizes = [1, 32, 32], strides = [1, 1, 1]} : vector<8x32x32xf32> to vector<1x32x32xf32>
    %129 = vector.shape_cast %128 : vector<1x32x32xf32> to vector<32x32xf32>
    %130 = vector.extract_strided_slice %3 {offsets = [6, 0, 0], sizes = [1, 32, 32], strides = [1, 1, 1]} : vector<8x32x32xf32> to vector<1x32x32xf32>
    %131 = vector.shape_cast %130 : vector<1x32x32xf32> to vector<32x32xf32>
    %cst_65 = arith.constant dense<0.000000e+00> : vector<2x32xf32>
    %132 = tpu.matmul %125, %129, %cst_65 {dimension_numbers = #tpu.dot_dimension_numbers<[1], [0], [0], [1], [0, 0, 1, 1], [], []>} : vector<2x32xf32>, vector<32x32xf32>, vector<2x32xf32> -> vector<2x32xf32>
    %cst_66 = arith.constant dense<0.000000e+00> : vector<2x32xf32>
    %133 = tpu.matmul %127, %131, %cst_66 {dimension_numbers = #tpu.dot_dimension_numbers<[1], [0], [0], [1], [0, 0, 1, 1], [], []>} : vector<2x32xf32>, vector<32x32xf32>, vector<2x32xf32> -> vector<2x32xf32>
    %134 = arith.subf %132, %133 : vector<2x32xf32>
    %c0_67 = arith.constant 0 : index
    %c6 = arith.constant 6 : index
    %c0_68 = arith.constant 0 : index
    %135 = vector.load %arg5[%c0_67, %c6, %c0_68] : memref<2x8x32xf32, #tpu.memory_space<vmem>>, vector<2x1x32xf32>
    %136 = vector.shape_cast %135 : vector<2x1x32xf32> to vector<2x32xf32>
    %137 = vector.shape_cast %134 : vector<2x32xf32> to vector<2x1x32xf32>
    tpu.vector_store %arg5[%c0_67, %c6, %c0_68], %137 {strides = array<i32>} : memref<2x8x32xf32, #tpu.memory_space<vmem>>, vector<2x1x32xf32>,
    %cst_69 = arith.constant dense<0.000000e+00> : vector<2x32xf32>
    %138 = tpu.matmul %125, %131, %cst_69 {dimension_numbers = #tpu.dot_dimension_numbers<[1], [0], [0], [1], [0, 0, 1, 1], [], []>} : vector<2x32xf32>, vector<32x32xf32>, vector<2x32xf32> -> vector<2x32xf32>
    %cst_70 = arith.constant dense<0.000000e+00> : vector<2x32xf32>
    %139 = tpu.matmul %127, %129, %cst_70 {dimension_numbers = #tpu.dot_dimension_numbers<[1], [0], [0], [1], [0, 0, 1, 1], [], []>} : vector<2x32xf32>, vector<32x32xf32>, vector<2x32xf32> -> vector<2x32xf32>
    %140 = arith.addf %138, %139 : vector<2x32xf32>
    %c0_71 = arith.constant 0 : index
    %c6_72 = arith.constant 6 : index
    %c0_73 = arith.constant 0 : index
    %141 = vector.load %arg6[%c0_71, %c6_72, %c0_73] : memref<2x8x32xf32, #tpu.memory_space<vmem>>, vector<2x1x32xf32>
    %142 = vector.shape_cast %141 : vector<2x1x32xf32> to vector<2x32xf32>
    %143 = vector.shape_cast %140 : vector<2x32xf32> to vector<2x1x32xf32>
    tpu.vector_store %arg6[%c0_71, %c6_72, %c0_73], %143 {strides = array<i32>} : memref<2x8x32xf32, #tpu.memory_space<vmem>>, vector<2x1x32xf32>,
    %144 = vector.extract_strided_slice %0 {offsets = [0, 7, 0], sizes = [2, 1, 32], strides = [1, 1, 1]} : vector<2x8x32xf32> to vector<2x1x32xf32>
    %145 = vector.shape_cast %144 : vector<2x1x32xf32> to vector<2x32xf32>
    %146 = vector.extract_strided_slice %1 {offsets = [0, 7, 0], sizes = [2, 1, 32], strides = [1, 1, 1]} : vector<2x8x32xf32> to vector<2x1x32xf32>
    %147 = vector.shape_cast %146 : vector<2x1x32xf32> to vector<2x32xf32>
    %148 = vector.extract_strided_slice %2 {offsets = [7, 0, 0], sizes = [1, 32, 32], strides = [1, 1, 1]} : vector<8x32x32xf32> to vector<1x32x32xf32>
    %149 = vector.shape_cast %148 : vector<1x32x32xf32> to vector<32x32xf32>
    %150 = vector.extract_strided_slice %3 {offsets = [7, 0, 0], sizes = [1, 32, 32], strides = [1, 1, 1]} : vector<8x32x32xf32> to vector<1x32x32xf32>
    %151 = vector.shape_cast %150 : vector<1x32x32xf32> to vector<32x32xf32>
    %cst_74 = arith.constant dense<0.000000e+00> : vector<2x32xf32>
    %152 = tpu.matmul %145, %149, %cst_74 {dimension_numbers = #tpu.dot_dimension_numbers<[1], [0], [0], [1], [0, 0, 1, 1], [], []>} : vector<2x32xf32>, vector<32x32xf32>, vector<2x32xf32> -> vector<2x32xf32>
    %cst_75 = arith.constant dense<0.000000e+00> : vector<2x32xf32>
    %153 = tpu.matmul %147, %151, %cst_75 {dimension_numbers = #tpu.dot_dimension_numbers<[1], [0], [0], [1], [0, 0, 1, 1], [], []>} : vector<2x32xf32>, vector<32x32xf32>, vector<2x32xf32> -> vector<2x32xf32>
    %154 = arith.subf %152, %153 : vector<2x32xf32>
    %c0_76 = arith.constant 0 : index
    %c7 = arith.constant 7 : index
    %c0_77 = arith.constant 0 : index
    %155 = vector.load %arg5[%c0_76, %c7, %c0_77] : memref<2x8x32xf32, #tpu.memory_space<vmem>>, vector<2x1x32xf32>
    %156 = vector.shape_cast %155 : vector<2x1x32xf32> to vector<2x32xf32>
    %157 = vector.shape_cast %154 : vector<2x32xf32> to vector<2x1x32xf32>
    tpu.vector_store %arg5[%c0_76, %c7, %c0_77], %157 {strides = array<i32>} : memref<2x8x32xf32, #tpu.memory_space<vmem>>, vector<2x1x32xf32>,
    %cst_78 = arith.constant dense<0.000000e+00> : vector<2x32xf32>
    %158 = tpu.matmul %145, %151, %cst_78 {dimension_numbers = #tpu.dot_dimension_numbers<[1], [0], [0], [1], [0, 0, 1, 1], [], []>} : vector<2x32xf32>, vector<32x32xf32>, vector<2x32xf32> -> vector<2x32xf32>
    %cst_79 = arith.constant dense<0.000000e+00> : vector<2x32xf32>
    %159 = tpu.matmul %147, %149, %cst_79 {dimension_numbers = #tpu.dot_dimension_numbers<[1], [0], [0], [1], [0, 0, 1, 1], [], []>} : vector<2x32xf32>, vector<32x32xf32>, vector<2x32xf32> -> vector<2x32xf32>
    %160 = arith.addf %158, %159 : vector<2x32xf32>
    %c0_80 = arith.constant 0 : index
    %c7_81 = arith.constant 7 : index
    %c0_82 = arith.constant 0 : index
    %161 = vector.load %arg6[%c0_80, %c7_81, %c0_82] : memref<2x8x32xf32, #tpu.memory_space<vmem>>, vector<2x1x32xf32>
    %162 = vector.shape_cast %161 : vector<2x1x32xf32> to vector<2x32xf32>
    %163 = vector.shape_cast %160 : vector<2x32xf32> to vector<2x1x32xf32>
    tpu.vector_store %arg6[%c0_80, %c7_81, %c0_82], %163 {strides = array<i32>} : memref<2x8x32xf32, #tpu.memory_space<vmem>>, vector<2x1x32xf32>,
    return
  }
  func.func @transform_0(%arg0: i32) -> (i32, i32, i32) {
    %c0_i32 = arith.constant 0 : i32
    %c0_i32_0 = arith.constant 0 : i32
    %c0_i32_1 = arith.constant 0 : i32
    return %c0_i32, %arg0, %c0_i32_0 : i32, i32, i32
  }
  func.func @transform_1(%arg0: i32) -> (i32, i32, i32) {
    %c0_i32 = arith.constant 0 : i32
    %c0_i32_0 = arith.constant 0 : i32
    %c0_i32_1 = arith.constant 0 : i32
    return %c0_i32, %arg0, %c0_i32_0 : i32, i32, i32
  }
  func.func @transform_2(%arg0: i32) -> (i32, i32, i32) {
    %c0_i32 = arith.constant 0 : i32
    %c0_i32_0 = arith.constant 0 : i32
    %c0_i32_1 = arith.constant 0 : i32
    return %arg0, %c0_i32, %c0_i32_0 : i32, i32, i32
  }
  func.func @transform_3(%arg0: i32) -> (i32, i32, i32) {
    %c0_i32 = arith.constant 0 : i32
    %c0_i32_0 = arith.constant 0 : i32
    %c0_i32_1 = arith.constant 0 : i32
    return %arg0, %c0_i32, %c0_i32_0 : i32, i32, i32
  }
  func.func @transform_4(%arg0: i32) -> (i32, i32, i32) {
    %c0_i32 = arith.constant 0 : i32
    %c0_i32_0 = arith.constant 0 : i32
    %c0_i32_1 = arith.constant 0 : i32
    return %c0_i32, %arg0, %c0_i32_0 : i32, i32, i32
  }
  func.func @transform_5(%arg0: i32) -> (i32, i32, i32) {
    %c0_i32 = arith.constant 0 : i32
    %c0_i32_0 = arith.constant 0 : i32
    %c0_i32_1 = arith.constant 0 : i32
    return %c0_i32, %arg0, %c0_i32_0 : i32, i32, i32
  }
}

module attributes {stable_mosaic.version = 11 : i64} {
  func.func @_pw_res_relu_kernel(%arg0: i32, %arg1: memref<256x32xf32, #tpu.memory_space<vmem>>, %arg2: memref<32x32xf32, #tpu.memory_space<vmem>>, %arg3: memref<1x32xf32, #tpu.memory_space<vmem>>, %arg4: memref<256x32xf32, #tpu.memory_space<vmem>>, %arg5: memref<256x32xf32, #tpu.memory_space<vmem>>) attributes {dimension_semantics = [#tpu.dimension_semantics<parallel>], iteration_bounds = array<i64: 2>, scalar_prefetch = 0 : i64, scratch_operands = 0 : i64, tpu.core_type = #tpu.core_type<tc>, window_params = [{transform_indices = @transform_0, window_bounds = array<i64: 256, 32>}, {pipeline_mode = #tpu.pipeline_mode<synchronous>, transform_indices = @transform_1, window_bounds = array<i64: 32, 32>}, {pipeline_mode = #tpu.pipeline_mode<synchronous>, transform_indices = @transform_2, window_bounds = array<i64: 1, 32>}, {transform_indices = @transform_3, window_bounds = array<i64: 256, 32>}, {transform_indices = @transform_4, window_bounds = array<i64: 256, 32>}]} {
    %c0 = arith.constant 0 : index
    %c0_0 = arith.constant 0 : index
    %0 = vector.load %arg1[%c0, %c0_0] : memref<256x32xf32, #tpu.memory_space<vmem>>, vector<256x32xf32>
    %c0_1 = arith.constant 0 : index
    %c0_2 = arith.constant 0 : index
    %1 = vector.load %arg2[%c0_1, %c0_2] : memref<32x32xf32, #tpu.memory_space<vmem>>, vector<32x32xf32>
    %cst = arith.constant dense<0.000000e+00> : vector<256x32xf32>
    %2 = tpu.matmul %0, %1, %cst {dimension_numbers = #tpu.dot_dimension_numbers<[1], [0], [0], [1], [0, 0, 1, 1], [], []>} : vector<256x32xf32>, vector<32x32xf32>, vector<256x32xf32> -> vector<256x32xf32>
    %c0_3 = arith.constant 0 : index
    %c0_4 = arith.constant 0 : index
    %3 = vector.load %arg3[%c0_3, %c0_4] : memref<1x32xf32, #tpu.memory_space<vmem>>, vector<1x32xf32>
    %4 = vector.broadcast %3 : vector<1x32xf32> to vector<256x32xf32>
    %5 = arith.addf %2, %4 : vector<256x32xf32>
    %c0_5 = arith.constant 0 : index
    %c0_6 = arith.constant 0 : index
    %6 = vector.load %arg4[%c0_5, %c0_6] : memref<256x32xf32, #tpu.memory_space<vmem>>, vector<256x32xf32>
    %7 = arith.addf %5, %6 : vector<256x32xf32>
    %cst_7 = arith.constant 0.000000e+00 : f32
    %8 = vector.broadcast %cst_7 : f32 to vector<256x32xf32>
    %9 = arith.maximumf %7, %8 : vector<256x32xf32>
    %c0_8 = arith.constant 0 : index
    %c0_9 = arith.constant 0 : index
    %10 = vector.load %arg5[%c0_8, %c0_9] : memref<256x32xf32, #tpu.memory_space<vmem>>, vector<256x32xf32>
    tpu.vector_store %arg5[%c0_8, %c0_9], %9 {strides = array<i32>} : memref<256x32xf32, #tpu.memory_space<vmem>>, vector<256x32xf32>,
    return
  }
  func.func @transform_0(%arg0: i32) -> (i32, i32) {
    %c0_i32 = arith.constant 0 : i32
    %c0_i32_0 = arith.constant 0 : i32
    return %arg0, %c0_i32 : i32, i32
  }
  func.func @transform_1(%arg0: i32) -> (i32, i32) {
    %c0_i32 = arith.constant 0 : i32
    %c0_i32_0 = arith.constant 0 : i32
    %c0_i32_1 = arith.constant 0 : i32
    return %c0_i32, %c0_i32_0 : i32, i32
  }
  func.func @transform_2(%arg0: i32) -> (i32, i32) {
    %c0_i32 = arith.constant 0 : i32
    %c0_i32_0 = arith.constant 0 : i32
    %c0_i32_1 = arith.constant 0 : i32
    return %c0_i32, %c0_i32_0 : i32, i32
  }
  func.func @transform_3(%arg0: i32) -> (i32, i32) {
    %c0_i32 = arith.constant 0 : i32
    %c0_i32_0 = arith.constant 0 : i32
    return %arg0, %c0_i32 : i32, i32
  }
  func.func @transform_4(%arg0: i32) -> (i32, i32) {
    %c0_i32 = arith.constant 0 : i32
    %c0_i32_0 = arith.constant 0 : i32
    return %arg0, %c0_i32 : i32, i32
  }
}

module attributes {stable_mosaic.version = 11 : i64} {
  func.func @_pw_kernel(%arg0: i32, %arg1: memref<256x32xf32, #tpu.memory_space<vmem>>, %arg2: memref<32x128xf32, #tpu.memory_space<vmem>>, %arg3: memref<1x128xf32, #tpu.memory_space<vmem>>, %arg4: memref<256x128xf32, #tpu.memory_space<vmem>>) attributes {dimension_semantics = [#tpu.dimension_semantics<parallel>], iteration_bounds = array<i64: 2>, scalar_prefetch = 0 : i64, scratch_operands = 0 : i64, tpu.core_type = #tpu.core_type<tc>, window_params = [{transform_indices = @transform_0, window_bounds = array<i64: 256, 32>}, {pipeline_mode = #tpu.pipeline_mode<synchronous>, transform_indices = @transform_1, window_bounds = array<i64: 32, 128>}, {pipeline_mode = #tpu.pipeline_mode<synchronous>, transform_indices = @transform_2, window_bounds = array<i64: 1, 128>}, {transform_indices = @transform_3, window_bounds = array<i64: 256, 128>}]} {
    %c0 = arith.constant 0 : index
    %c0_0 = arith.constant 0 : index
    %0 = vector.load %arg1[%c0, %c0_0] : memref<256x32xf32, #tpu.memory_space<vmem>>, vector<256x32xf32>
    %c0_1 = arith.constant 0 : index
    %c0_2 = arith.constant 0 : index
    %1 = vector.load %arg2[%c0_1, %c0_2] : memref<32x128xf32, #tpu.memory_space<vmem>>, vector<32x128xf32>
    %cst = arith.constant dense<0.000000e+00> : vector<256x128xf32>
    %2 = tpu.matmul %0, %1, %cst {dimension_numbers = #tpu.dot_dimension_numbers<[1], [0], [0], [1], [0, 0, 1, 1], [], []>} : vector<256x32xf32>, vector<32x128xf32>, vector<256x128xf32> -> vector<256x128xf32>
    %c0_3 = arith.constant 0 : index
    %c0_4 = arith.constant 0 : index
    %3 = vector.load %arg3[%c0_3, %c0_4] : memref<1x128xf32, #tpu.memory_space<vmem>>, vector<1x128xf32>
    %4 = vector.broadcast %3 : vector<1x128xf32> to vector<256x128xf32>
    %5 = arith.addf %2, %4 : vector<256x128xf32>
    %c0_5 = arith.constant 0 : index
    %c0_6 = arith.constant 0 : index
    %6 = vector.load %arg4[%c0_5, %c0_6] : memref<256x128xf32, #tpu.memory_space<vmem>>, vector<256x128xf32>
    tpu.vector_store %arg4[%c0_5, %c0_6], %5 {strides = array<i32>} : memref<256x128xf32, #tpu.memory_space<vmem>>, vector<256x128xf32>,
    return
  }
  func.func @transform_0(%arg0: i32) -> (i32, i32) {
    %c0_i32 = arith.constant 0 : i32
    %c0_i32_0 = arith.constant 0 : i32
    return %arg0, %c0_i32 : i32, i32
  }
  func.func @transform_1(%arg0: i32) -> (i32, i32) {
    %c0_i32 = arith.constant 0 : i32
    %c0_i32_0 = arith.constant 0 : i32
    %c0_i32_1 = arith.constant 0 : i32
    return %c0_i32, %c0_i32_0 : i32, i32
  }
  func.func @transform_2(%arg0: i32) -> (i32, i32) {
    %c0_i32 = arith.constant 0 : i32
    %c0_i32_0 = arith.constant 0 : i32
    %c0_i32_1 = arith.constant 0 : i32
    return %c0_i32, %c0_i32_0 : i32, i32
  }
  func.func @transform_3(%arg0: i32) -> (i32, i32) {
    %c0_i32 = arith.constant 0 : i32
    %c0_i32_0 = arith.constant 0 : i32
    return %arg0, %c0_i32 : i32, i32
  }
}

</mosaic_0001>

<llo_original>
// kernel: _lambda_.6
$region0: #{_lambda_.6}
  #allocation0 [shape = 'u32[]', space=smem, size = 0x4, offset = 0x4, fixed_abs, tag = 'smem constant byte address 0x4 - core index']
  #allocation1 [shape = 'u32[144,128]{1,0:T(1,128)}', space=vmem, size = 0x12000, scoped, tag = 'internal scratch']
  %s0 = inlined_call_operand.vmem [shape: f32[512,4], index: 0, kind: input, shape index: {}]
  %s1 = inlined_call_operand.vmem [shape: f32[4,128], index: 1, kind: input, shape index: {}]
  %s2 = inlined_call_operand.vmem [shape: f32[1,128], index: 2, kind: input, shape index: {}]
  %s3 = inlined_call_operand.vmem [shape: f32[512,128], index: 3, kind: output, shape index: {}]
  %s4 = sld [smem:[#allocation0]]
  $region45: #{_lambda_.6} parent=0
    _
  %s6 = ssub.s32 1, %s4
  %s7 = scalar_select 0, %s6, %s4
  loop: start=0, step=1, limit=4
  $region2: #{_lambda_.6} parent=0 // loop_pre_header
    _
  $region3: #{_lambda_.6} parent=0 // loop_header
    %s9 = sphi 0, %s13
    %p10 = scmp.ge.s32.totalorder %s9, 4
    %s19 = sphi 0, %s21
    %s22 = sphi 0, %s19
    %s23 = sphi 0, %s22
    %s39 = sphi 0, %s23
    %s43 = sphi 0, %s43
    %s45 = sphi 0, %s43
    %s46 = sphi 0, %s45
    %s60 = sphi 0, %s46
    %s64 = sphi 0, %s64
    %s66 = sphi 0, %s64
    %s67 = sphi 0, %s66
    %s81 = sphi 0, %s67
    %s87 = sphi 0, %s89
    %s90 = sphi 0, %s87
    %s91 = sphi 0, %s90
    %s107 = sphi 0, %s91
  $region4: #{_lambda_.6} parent=0 // loop_header_branch
    %12 = sbr.rel (%p10) target = $region8
  $region5: #{_lambda_.6} parent=0 // loop_body
    %s14 = ssub.s32 %s9, 1
    %s15 = ssub.s32 %s9, 2
    %s16 = sadd.s32 %s9, 1
    %s17 = ssub.s32 %s9, %s16
    %p18 = scmp.eq.s32.totalorder %s17, 0
    %s20 = sadd.s32 %s19, 1
    %s21 = scalar_select %p18, %s19, %s20
    %p24 = pneg %p18
    %p25 = scmp.eq.s32.totalorder %s9, 1
    %p26 = por %p24, %p25
    %p27 = scmp.ne.s32.totalorder %s19, %s22
    %p28 = scmp.eq.s32.totalorder %s9, 0
    %p29 = por %p27, %p28
    %p30 = scmp.ne.s32.totalorder %s19, %s22
    %p31 = scmp.eq.s32.totalorder %s14, 1
    %p32 = por %p30, %p31
    %p33 = scmp.ne.s32.totalorder %s22, %s23
    %p34 = scmp.eq.s32.totalorder %s14, 0
    %p35 = por %p33, %p34
    %p36 = scmp.ne.s32.totalorder %s22, %s23
    %p37 = scmp.eq.s32.totalorder %s15, 1
    %p38 = por %p36, %p37
    %p40 = scmp.ne.s32.totalorder %s23, %s39
    %p41 = scmp.eq.s32.totalorder %s15, 0
    %p42 = por %p40, %p41
    %s44 = sadd.s32 %s43, 1
    %p47 = scmp.eq.s32.totalorder %s9, 1
    %p48 = scmp.ne.s32.totalorder %s43, %s45
    %p49 = scmp.eq.s32.totalorder %s9, 0
    %p50 = por %p48, %p49
    %p51 = scmp.ne.s32.totalorder %s43, %s45
    %p52 = scmp.eq.s32.totalorder %s14, 1
    %p53 = por %p51, %p52
    %p54 = scmp.ne.s32.totalorder %s45, %s46
    %p55 = scmp.eq.s32.totalorder %s14, 0
    %p56 = por %p54, %p55
    %p57 = scmp.ne.s32.totalorder %s45, %s46
    %p58 = scmp.eq.s32.totalorder %s15, 1
    %p59 = por %p57, %p58
    %p61 = scmp.ne.s32.totalorder %s46, %s60
    %p62 = scmp.eq.s32.totalorder %s15, 0
    %p63 = por %p61, %p62
    %s65 = sadd.s32 %s64, 1
    %p68 = scmp.eq.s32.totalorder %s9, 1
    %p69 = scmp.ne.s32.totalorder %s64, %s66
    %p70 = scmp.eq.s32.totalorder %s9, 0
    %p71 = por %p69, %p70
    %p72 = scmp.ne.s32.totalorder %s64, %s66
    %p73 = scmp.eq.s32.totalorder %s14, 1
    %p74 = por %p72, %p73
    %p75 = scmp.ne.s32.totalorder %s66, %s67
    %p76 = scmp.eq.s32.totalorder %s14, 0
    %p77 = por %p75, %p76
    %p78 = scmp.ne.s32.totalorder %s66, %s67
    %p79 = scmp.eq.s32.totalorder %s15, 1
    %p80 = por %p78, %p79
    %p82 = scmp.ne.s32.totalorder %s67, %s81
    %p83 = scmp.eq.s32.totalorder %s15, 0
    %p84 = por %p82, %p83
    %s85 = ssub.s32 %s9, %s16
    %p86 = scmp.eq.s32.totalorder %s85, 0
    %s88 = sadd.s32 %s87, 1
    %s89 = scalar_select %p86, %s87, %s88
    %p92 = pneg %p86
    %p93 = scmp.eq.s32.totalorder %s9, 1
    %p94 = por %p92, %p93
    %p95 = scmp.ne.s32.totalorder %s87, %s90
    %p96 = scmp.eq.s32.totalorder %s9, 0
    %p97 = por %p95, %p96
    %p98 = scmp.ne.s32.totalorder %s87, %s90
    %p99 = scmp.eq.s32.totalorder %s14, 1
    %p100 = por %p98, %p99
    %p101 = scmp.ne.s32.totalorder %s90, %s91
    %p102 = scmp.eq.s32.totalorder %s14, 0
    %p103 = por %p101, %p102
    %p104 = scmp.ne.s32.totalorder %s90, %s91
    %p105 = scmp.eq.s32.totalorder %s15, 1
    %p106 = por %p104, %p105
    %p108 = scmp.ne.s32.totalorder %s91, %s107
    %p109 = scmp.eq.s32.totalorder %s15, 0
    %p110 = por %p108, %p109
    %p111 = scmp.le.s32.totalorder 1, %s9
    %p112 = scmp.lt.s32.totalorder %s9, 3
    %p113 = pnand %p111, %p112
    %p114 = pneg %p113
    // Predicated region
    $region9: #{_lambda_.6} parent=5 // pred_check
      _
    $region10: #{_lambda_.6} parent=5 // pred_check_branch
      %116 = sbr.rel (%p113) target = $region12
    $region11: #{_lambda_.6} parent=5 // pred_region
      %s117 = ssub.s32 %s9, 1
      // Predicated region
      $region13: #{_lambda_.6} parent=11 // pred_check
        %p118 = pneg %p56
      $region14: #{_lambda_.6} parent=11 // pred_check_branch
        %120 = sbr.rel (%p118) target = $region16
      $region15: #{_lambda_.6} parent=11 // pred_region
        _
      $region16: #{_lambda_.6} parent=11 // pred_fallthru
        _
      // Predicated region
      $region17: #{_lambda_.6} parent=11 // pred_check
        %p121 = pneg %p77
      $region18: #{_lambda_.6} parent=11 // pred_check_branch
        %123 = sbr.rel (%p121) target = $region20
      $region19: #{_lambda_.6} parent=11 // pred_region
        _
      $region20: #{_lambda_.6} parent=11 // pred_fallthru
        _
    $region12: #{_lambda_.6} parent=5 // pred_fallthru
      _
    %p124 = scmp.lt.s32.totalorder %s9, 2
    // Predicated region
    $region21: #{_lambda_.6} parent=5 // pred_check
      %p125 = pneg %p124
    $region22: #{_lambda_.6} parent=5 // pred_check_branch
      %127 = sbr.rel (%p125) target = $region24
    $region23: #{_lambda_.6} parent=5 // pred_region
      // Predicated region
      $region25: #{_lambda_.6} parent=23 // pred_check
        %p128 = pneg %p29
      $region26: #{_lambda_.6} parent=23 // pred_check_branch
        %130 = sbr.rel (%p128) target = $region28
      $region27: #{_lambda_.6} parent=23 // pred_region
        %s131 = smul.u32 32, %s9
        %p132 = scmp.lt.s32.totalorder %s131, 63
        %s133 = scalar_select %p132, %s131, 63
        %s134 = smul.addr %s133, 8
        %s135 = scalar_lea.vmem %s0, %s134
        %s136 = smul.u32 32, %s9
      $region28: #{_lambda_.6} parent=23 // pred_fallthru
        _
    $region24: #{_lambda_.6} parent=5 // pred_fallthru
      _
    %p137 = scmp.le.s32.totalorder 1, %s9
    %p138 = scmp.lt.s32.totalorder %s9, 3
    %p139 = pnand %p137, %p138
    %p140 = pneg %p139
    // Predicated region
    $region29: #{_lambda_.6} parent=5 // pred_check
      _
    $region30: #{_lambda_.6} parent=5 // pred_check_branch
      %142 = sbr.rel (%p139) target = $region32
    $region31: #{_lambda_.6} parent=5 // pred_region
      %s143 = ssub.s32 %s9, 1
      %s144 = smul.u32 32, %s14
      %p145 = scmp.lt.s32.totalorder %s144, 63
      %s146 = scalar_select %p145, %s144, 63
      %s147 = smul.addr %s146, 8
      %s148 = scalar_lea.vmem %s0, %s147
      %p149 = pneg %p35
      %p150 = pneg %p32
      %p151 = pneg %p56
      %p152 = pneg %p53
      %p153 = pneg %p77
      %p154 = pneg %p74
      %p155 = pneg %p103
      %p156 = pneg %p100
      %s157 = smul.u32 32, %s14
      %p158 = scmp.lt.s32.totalorder %s157, 63
      %s159 = scalar_select %p158, %s157, 63
      %s160 = smul.addr %s159, 8
      %s161 = scalar_lea.vmem %s3, %s160
      %s162 = smul.u32 32, %s14
      %p163 = scmp.lt.s32.totalorder %s162, 63
      %s164 = scalar_select %p163, %s162, 63
      %s165 = smul.addr %s164, 8
      %s166 = scalar_lea.vmem %s0, %s165
      %s167 = smul.u32 32, %s14
      %s168 = smul.u32 32, %s14
      %p169 = scmp.lt.s32.totalorder %s168, 63
      %s170 = scalar_select %p169, %s168, 63
      %s171 = smul.addr %s170, 8
      %s172 = scalar_lea.vmem %s3, %s171
      %s173 = smul.u32 32, %s14
      %v174 = vld [vmem:[%s166] sm:$0xff]
      %v175 = vld [vmem:[%s166 + $0x8] sm:$0xff]
      %v176 = vld [vmem:[%s166 + $0x10] sm:$0xff]
      %v177 = vld [vmem:[%s166 + $0x18] sm:$0xff]
      %v178 = vld [vmem:[%s166 + $0x20] sm:$0xff]
      %v179 = vld [vmem:[%s166 + $0x28] sm:$0xff]
      %v180 = vld [vmem:[%s166 + $0x30] sm:$0xff]
      %v181 = vld [vmem:[%s166 + $0x38] sm:$0xff]
      %v182 = vld [vmem:[%s166 + $0x40] sm:$0xff]
      %v183 = vld [vmem:[%s166 + $0x48] sm:$0xff]
      %v184 = vld [vmem:[%s166 + $0x50] sm:$0xff]
      %v185 = vld [vmem:[%s166 + $0x58] sm:$0xff]
      %v186 = vld [vmem:[%s166 + $0x60] sm:$0xff]
      %v187 = vld [vmem:[%s166 + $0x68] sm:$0xff]
      %v188 = vld [vmem:[%s166 + $0x70] sm:$0xff]
      %v189 = vld [vmem:[%s166 + $0x78] sm:$0xff]
      %v190 = vld [vmem:[%s166 + $0x80] sm:$0xff]
      %v191 = vld [vmem:[%s166 + $0x88] sm:$0xff]
      %v192 = vld [vmem:[%s166 + $0x90] sm:$0xff]
      %v193 = vld [vmem:[%s166 + $0x98] sm:$0xff]
      %v194 = vld [vmem:[%s166 + $0xa0] sm:$0xff]
      %v195 = vld [vmem:[%s166 + $0xa8] sm:$0xff]
      %v196 = vld [vmem:[%s166 + $0xb0] sm:$0xff]
      %v197 = vld [vmem:[%s166 + $0xb8] sm:$0xff]
      %v198 = vld [vmem:[%s166 + $0xc0] sm:$0xff]
      %v199 = vld [vmem:[%s166 + $0xc8] sm:$0xff]
      %v200 = vld [vmem:[%s166 + $0xd0] sm:$0xff]
      %v201 = vld [vmem:[%s166 + $0xd8] sm:$0xff]
      %v202 = vld [vmem:[%s166 + $0xe0] sm:$0xff]
      %v203 = vld [vmem:[%s166 + $0xe8] sm:$0xff]
      %v204 = vld [vmem:[%s166 + $0xf0] sm:$0xff]
      %v205 = vld [vmem:[%s166 + $0xf8] sm:$0xff]
      %v206 = vld [vmem:[%s1] sm:$0xf]
      %v207 = vld [vmem:[%s2] sm:$0x1]
      %v209 = vlaneseq
      %v210 = vshrl.u32 %v209, 7
      %v211 = vsub.s32 0, %v210
      %v212 = vrot.slane %v207, %v211
      %vm214 = vcmask 31744
      %v216 = vsel %vm214, %v174, 0
      %v219 = vsel %vm214, %v175, 0
      %v222 = vsel %vm214, %v176, 0
      %v225 = vsel %vm214, %v177, 0
      %v228 = vsel %vm214, %v178, 0
      %v231 = vsel %vm214, %v179, 0
      %v234 = vsel %vm214, %v180, 0
      %v237 = vsel %vm214, %v181, 0
      %v240 = vsel %vm214, %v182, 0
      %v243 = vsel %vm214, %v183, 0
      %v246 = vsel %vm214, %v184, 0
      %v249 = vsel %vm214, %v185, 0
      %v252 = vsel %vm214, %v186, 0
      %v255 = vsel %vm214, %v187, 0
      %v258 = vsel %vm214, %v188, 0
      %v261 = vsel %vm214, %v189, 0
      %v264 = vsel %vm214, %v190, 0
      %v267 = vsel %vm214, %v191, 0
      %v270 = vsel %vm214, %v192, 0
      %v273 = vsel %vm214, %v193, 0
      %v276 = vsel %vm214, %v194, 0
      %v279 = vsel %vm214, %v195, 0
      %v282 = vsel %vm214, %v196, 0
      %v285 = vsel %vm214, %v197, 0
      %v288 = vsel %vm214, %v198, 0
      %v291 = vsel %vm214, %v199, 0
      %v294 = vsel %vm214, %v200, 0
      %v297 = vsel %vm214, %v201, 0
      %v300 = vsel %vm214, %v202, 0
      %v303 = vsel %vm214, %v203, 0
      %v306 = vsel %vm214, %v204, 0
      %v309 = vsel %vm214, %v205, 0
      %vm311 = vcmask 1043456
      %v313 = vsel %vm311, %v206, 0
      %315 = vmatprep.subr.mxu0 0.0
      %316 = vmatpush1.msra.mxu0 %v313
      %317 = vmatprep.subr.mxu0 0.0
      %318 = vmatpush1.msra.mxu0 0.0
      %319 = vmatprep.subr.mxu0 0.0
      %320 = vmatpush1.msra.mxu0 0.0
      %321 = vmatprep.subr.mxu0 0.0
      %322 = vmatpush1.msra.mxu0 0.0
      %323 = vmatprep.subr.mxu0 0.0
      %324 = vmatpush1.msra.mxu0 0.0
      %325 = vmatprep.subr.mxu0 0.0
      %326 = vmatpush1.msra.mxu0 0.0
      %327 = vmatprep.subr.mxu0 0.0
      %328 = vmatpush1.msra.mxu0 0.0
      %329 = vmatprep.subr.mxu0 0.0
      %330 = vmatpush1.msra.mxu0 0.0
      %331 = vmatprep.subr.mxu0 0.0
      %332 = vmatpush1.msra.mxu0 0.0
      %333 = vmatprep.subr.mxu0 0.0
      %334 = vmatpush1.msra.mxu0 0.0
      %335 = vmatprep.subr.mxu0 0.0
      %336 = vmatpush1.msra.mxu0 0.0
      %337 = vmatprep.subr.mxu0 0.0
      %338 = vmatpush1.msra.mxu0 0.0
      %339 = vmatprep.subr.mxu0 0.0
      %340 = vmatpush1.msra.mxu0 0.0
      %341 = vmatprep.subr.mxu0 0.0
      %342 = vmatpush1.msra.mxu0 0.0
      %343 = vmatprep.subr.mxu0 0.0
      %344 = vmatpush1.msra.mxu0 0.0
      %345 = vmatprep.subr.mxu0 0.0
      %346 = vmatpush1.msra.mxu0 0.0
      %347 = vmatprep.subr.mxu0 0.0
      %348 = vmatpush1.msra.mxu0 0.0
      %349 = vmatprep.subr.mxu0 0.0
      %350 = vmatpush1.msra.mxu0 0.0
      %351 = vmatprep.subr.mxu0 0.0
      %352 = vmatpush1.msra.mxu0 0.0
      %353 = vmatprep.subr.mxu0 0.0
      %354 = vmatpush1.msra.mxu0 0.0
      %355 = vmatprep.subr.mxu0 0.0
      %356 = vmatpush1.msra.mxu0 0.0
      %357 = vmatprep.subr.mxu0 0.0
      %358 = vmatpush1.msra.mxu0 0.0
      %359 = vmatprep.subr.mxu0 0.0
      %360 = vmatpush1.msra.mxu0 0.0
      %361 = vmatprep.subr.mxu0 0.0
      %362 = vmatpush1.msra.mxu0 0.0
      %363 = vmatprep.subr.mxu0 0.0
      %364 = vmatpush1.msra.mxu0 0.0
      %365 = vmatprep.subr.mxu0 0.0
      %366 = vmatpush1.msra.mxu0 0.0
      %367 = vmatprep.subr.mxu0 0.0
      %368 = vmatpush1.msra.mxu0 0.0
      %369 = vmatprep.subr.mxu0 0.0
      %370 = vmatpush1.msra.mxu0 0.0
      %371 = vmatprep.subr.mxu0 0.0
      %372 = vmatpush1.msra.mxu0 0.0
      %373 = vmatprep.subr.mxu0 0.0
      %374 = vmatpush1.msra.mxu0 0.0
      %375 = vmatprep.subr.mxu0 0.0
      %376 = vmatpush1.msra.mxu0 0.0
      %377 = vmatprep.subr.mxu0 0.0
      %378 = vmatpush1.msra.mxu0 0.0
      %379 = vmatprep.mubr.f32.mxu0 0.0
      %380 = vmatmul.mubr.f32.gmra.mrb[0].mxu0 %v216
      %v381 = vpop.f32.mrb[0].mxu0
      %v382 = vadd.f32 %v212, %v381
      %v383 = vpop.f32.mrb[0].mxu0
      %384 = vmatprep.mubr.f32.mxu0 0.0
      %385 = vmatmul.mubr.f32.gmra.mrb[0].mxu0 %v219
      %v386 = vpop.f32.mrb[0].mxu0
      %v387 = vadd.f32 %v212, %v386
      %v388 = vpop.f32.mrb[0].mxu0
      %389 = vmatprep.mubr.f32.mxu0 0.0
      %390 = vmatmul.mubr.f32.gmra.mrb[0].mxu0 %v222
      %v391 = vpop.f32.mrb[0].mxu0
      %v392 = vadd.f32 %v212, %v391
      %v393 = vpop.f32.mrb[0].mxu0
      %394 = vmatprep.mubr.f32.mxu0 0.0
      %395 = vmatmul.mubr.f32.gmra.mrb[0].mxu0 %v225
      %v396 = vpop.f32.mrb[0].mxu0
      %v397 = vadd.f32 %v212, %v396
      %v398 = vpop.f32.mrb[0].mxu0
      %399 = vmatprep.mubr.f32.mxu0 0.0
      %400 = vmatmul.mubr.f32.gmra.mrb[0].mxu0 %v228
      %v401 = vpop.f32.mrb[0].mxu0
      %v402 = vadd.f32 %v212, %v401
      %v403 = vpop.f32.mrb[0].mxu0
      %404 = vmatprep.mubr.f32.mxu0 0.0
      %405 = vmatmul.mubr.f32.gmra.mrb[0].mxu0 %v231
      %v406 = vpop.f32.mrb[0].mxu0
      %v407 = vadd.f32 %v212, %v406
      %v408 = vpop.f32.mrb[0].mxu0
      %409 = vmatprep.mubr.f32.mxu0 0.0
      %410 = vmatmul.mubr.f32.gmra.mrb[0].mxu0 %v234
      %v411 = vpop.f32.mrb[0].mxu0
      %v412 = vadd.f32 %v212, %v411
      %v413 = vpop.f32.mrb[0].mxu0
      %414 = vmatprep.mubr.f32.mxu0 0.0
      %415 = vmatmul.mubr.f32.gmra.mrb[0].mxu0 %v237
      %v416 = vpop.f32.mrb[0].mxu0
      %v417 = vadd.f32 %v212, %v416
      %v418 = vpop.f32.mrb[0].mxu0
      %419 = vmatprep.mubr.f32.mxu0 0.0
      %420 = vmatmul.mubr.f32.gmra.mrb[0].mxu0 %v240
      %v421 = vpop.f32.mrb[0].mxu0
      %v422 = vadd.f32 %v212, %v421
      %v423 = vpop.f32.mrb[0].mxu0
      %424 = vmatprep.mubr.f32.mxu0 0.0
      %425 = vmatmul.mubr.f32.gmra.mrb[0].mxu0 %v243
      %v426 = vpop.f32.mrb[0].mxu0
      %v427 = vadd.f32 %v212, %v426
      %v428 = vpop.f32.mrb[0].mxu0
      %429 = vmatprep.mubr.f32.mxu0 0.0
      %430 = vmatmul.mubr.f32.gmra.mrb[0].mxu0 %v246
      %v431 = vpop.f32.mrb[0].mxu0
      %v432 = vadd.f32 %v212, %v431
      %v433 = vpop.f32.mrb[0].mxu0
      %434 = vmatprep.mubr.f32.mxu0 0.0
      %435 = vmatmul.mubr.f32.gmra.mrb[0].mxu0 %v249
      %v436 = vpop.f32.mrb[0].mxu0
      %v437 = vadd.f32 %v212, %v436
      %v438 = vpop.f32.mrb[0].mxu0
      %439 = vmatprep.mubr.f32.mxu0 0.0
      %440 = vmatmul.mubr.f32.gmra.mrb[0].mxu0 %v252
      %v441 = vpop.f32.mrb[0].mxu0
      %v442 = vadd.f32 %v212, %v441
      %v443 = vpop.f32.mrb[0].mxu0
      %444 = vmatprep.mubr.f32.mxu0 0.0
      %445 = vmatmul.mubr.f32.gmra.mrb[0].mxu0 %v255
      %v446 = vpop.f32.mrb[0].mxu0
      %v447 = vadd.f32 %v212, %v446
      %v448 = vpop.f32.mrb[0].mxu0
      %449 = vmatprep.mubr.f32.mxu0 0.0
      %450 = vmatmul.mubr.f32.gmra.mrb[0].mxu0 %v258
      %v451 = vpop.f32.mrb[0].mxu0
      %v452 = vadd.f32 %v212, %v451
      %v453 = vpop.f32.mrb[0].mxu0
      %454 = vmatprep.mubr.f32.mxu0 0.0
      %455 = vmatmul.mubr.f32.gmra.mrb[0].mxu0 %v261
      %v456 = vpop.f32.mrb[0].mxu0
      %v457 = vadd.f32 %v212, %v456
      %v458 = vpop.f32.mrb[0].mxu0
      %459 = vmatprep.mubr.f32.mxu0 0.0
      %460 = vmatmul.mubr.f32.gmra.mrb[0].mxu0 %v264
      %v461 = vpop.f32.mrb[0].mxu0
      %v462 = vadd.f32 %v212, %v461
      %v463 = vpop.f32.mrb[0].mxu0
      %464 = vmatprep.mubr.f32.mxu0 0.0
      %465 = vmatmul.mubr.f32.gmra.mrb[0].mxu0 %v267
      %v466 = vpop.f32.mrb[0].mxu0
      %v467 = vadd.f32 %v212, %v466
      %v468 = vpop.f32.mrb[0].mxu0
      %469 = vmatprep.mubr.f32.mxu0 0.0
      %470 = vmatmul.mubr.f32.gmra.mrb[0].mxu0 %v270
      %v471 = vpop.f32.mrb[0].mxu0
      %v472 = vadd.f32 %v212, %v471
      %v473 = vpop.f32.mrb[0].mxu0
      %474 = vmatprep.mubr.f32.mxu0 0.0
      %475 = vmatmul.mubr.f32.gmra.mrb[0].mxu0 %v273
      %v476 = vpop.f32.mrb[0].mxu0
      %v477 = vadd.f32 %v212, %v476
      %v478 = vpop.f32.mrb[0].mxu0
      %479 = vmatprep.mubr.f32.mxu0 0.0
      %480 = vmatmul.mubr.f32.gmra.mrb[0].mxu0 %v276
      %v481 = vpop.f32.mrb[0].mxu0
      %v482 = vadd.f32 %v212, %v481
      %v483 = vpop.f32.mrb[0].mxu0
      %484 = vmatprep.mubr.f32.mxu0 0.0
      %485 = vmatmul.mubr.f32.gmra.mrb[0].mxu0 %v279
      %v486 = vpop.f32.mrb[0].mxu0
      %v487 = vadd.f32 %v212, %v486
      %v488 = vpop.f32.mrb[0].mxu0
      %489 = vmatprep.mubr.f32.mxu0 0.0
      %490 = vmatmul.mubr.f32.gmra.mrb[0].mxu0 %v282
      %v491 = vpop.f32.mrb[0].mxu0
      %v492 = vadd.f32 %v212, %v491
      %v493 = vpop.f32.mrb[0].mxu0
      %494 = vmatprep.mubr.f32.mxu0 0.0
      %495 = vmatmul.mubr.f32.gmra.mrb[0].mxu0 %v285
      %v496 = vpop.f32.mrb[0].mxu0
      %v497 = vadd.f32 %v212, %v496
      %v498 = vpop.f32.mrb[0].mxu0
      %499 = vmatprep.mubr.f32.mxu0 0.0
      %500 = vmatmul.mubr.f32.gmra.mrb[0].mxu0 %v288
      %v501 = vpop.f32.mrb[0].mxu0
      %v502 = vadd.f32 %v212, %v501
      %v503 = vpop.f32.mrb[0].mxu0
      %504 = vmatprep.mubr.f32.mxu0 0.0
      %505 = vmatmul.mubr.f32.gmra.mrb[0].mxu0 %v291
      %v506 = vpop.f32.mrb[0].mxu0
      %v507 = vadd.f32 %v212, %v506
      %v508 = vpop.f32.mrb[0].mxu0
      %509 = vmatprep.mubr.f32.mxu0 0.0
      %510 = vmatmul.mubr.f32.gmra.mrb[0].mxu0 %v294
      %v511 = vpop.f32.mrb[0].mxu0
      %v512 = vadd.f32 %v212, %v511
      %v513 = vpop.f32.mrb[0].mxu0
      %514 = vmatprep.mubr.f32.mxu0 0.0
      %515 = vmatmul.mubr.f32.gmra.mrb[0].mxu0 %v297
      %v516 = vpop.f32.mrb[0].mxu0
      %v517 = vadd.f32 %v212, %v516
      %v518 = vpop.f32.mrb[0].mxu0
      %519 = vmatprep.mubr.f32.mxu0 0.0
      %520 = vmatmul.mubr.f32.gmra.mrb[0].mxu0 %v300
      %v521 = vpop.f32.mrb[0].mxu0
      %v522 = vadd.f32 %v212, %v521
      %v523 = vpop.f32.mrb[0].mxu0
      %524 = vmatprep.mubr.f32.mxu0 0.0
      %525 = vmatmul.mubr.f32.gmra.mrb[0].mxu0 %v303
      %v526 = vpop.f32.mrb[0].mxu0
      %v527 = vadd.f32 %v212, %v526
      %v528 = vpop.f32.mrb[0].mxu0
      %529 = vmatprep.mubr.f32.mxu0 0.0
      %530 = vmatmul.mubr.f32.gmra.mrb[0].mxu0 %v306
      %v531 = vpop.f32.mrb[0].mxu0
      %v532 = vadd.f32 %v212, %v531
      %v533 = vpop.f32.mrb[0].mxu0
      %534 = vmatprep.mubr.f32.mxu0 0.0
      %535 = vmatmul.mubr.f32.gmra.mrb[0].mxu0 %v309
      %v536 = vpop.f32.mrb[0].mxu0
      %v537 = vadd.f32 %v212, %v536
      %v538 = vpop.f32.mrb[0].mxu0
      %539 = vdwg.mxu0
      %540 = vst [vmem:[%s172] sm:$0xff] %v382
      %541 = vst [vmem:[%s172 + $0x8] sm:$0xff] %v387
      %542 = vst [vmem:[%s172 + $0x10] sm:$0xff] %v392
      %543 = vst [vmem:[%s172 + $0x18] sm:$0xff] %v397
      %544 = vst [vmem:[%s172 + $0x20] sm:$0xff] %v402
      %545 = vst [vmem:[%s172 + $0x28] sm:$0xff] %v407
      %546 = vst [vmem:[%s172 + $0x30] sm:$0xff] %v412
      %547 = vst [vmem:[%s172 + $0x38] sm:$0xff] %v417
      %548 = vst [vmem:[%s172 + $0x40] sm:$0xff] %v422
      %549 = vst [vmem:[%s172 + $0x48] sm:$0xff] %v427
      %550 = vst [vmem:[%s172 + $0x50] sm:$0xff] %v432
      %551 = vst [vmem:[%s172 + $0x58] sm:$0xff] %v437
      %552 = vst [vmem:[%s172 + $0x60] sm:$0xff] %v442
      %553 = vst [vmem:[%s172 + $0x68] sm:$0xff] %v447
      %554 = vst [vmem:[%s172 + $0x70] sm:$0xff] %v452
      %555 = vst [vmem:[%s172 + $0x78] sm:$0xff] %v457
      %556 = vst [vmem:[%s172 + $0x80] sm:$0xff] %v462
      %557 = vst [vmem:[%s172 + $0x88] sm:$0xff] %v467
      %558 = vst [vmem:[%s172 + $0x90] sm:$0xff] %v472
      %559 = vst [vmem:[%s172 + $0x98] sm:$0xff] %v477
      %560 = vst [vmem:[%s172 + $0xa0] sm:$0xff] %v482
      %561 = vst [vmem:[%s172 + $0xa8] sm:$0xff] %v487
      %562 = vst [vmem:[%s172 + $0xb0] sm:$0xff] %v492
      %563 = vst [vmem:[%s172 + $0xb8] sm:$0xff] %v497
      %564 = vst [vmem:[%s172 + $0xc0] sm:$0xff] %v502
      %565 = vst [vmem:[%s172 + $0xc8] sm:$0xff] %v507
      %566 = vst [vmem:[%s172 + $0xd0] sm:$0xff] %v512
      %567 = vst [vmem:[%s172 + $0xd8] sm:$0xff] %v517
      %568 = vst [vmem:[%s172 + $0xe0] sm:$0xff] %v522
      %569 = vst [vmem:[%s172 + $0xe8] sm:$0xff] %v527
      %570 = vst [vmem:[%s172 + $0xf0] sm:$0xff] %v532
      %571 = vst [vmem:[%s172 + $0xf8] sm:$0xff] %v537
      %s572 = smul.u32 32, %s14
      %p573 = scmp.lt.s32.totalorder %s572, 63
      %s574 = scalar_select %p573, %s572, 63
      %s575 = smul.addr %s574, 8
      %s576 = scalar_lea.vmem %s3, %s575
      // Predicated region
      $region33: #{_lambda_.6} parent=31 // pred_check
        %p577 = pneg %p100
      $region34: #{_lambda_.6} parent=31 // pred_check_branch
        %579 = sbr.rel (%p577) target = $region36
      $region35: #{_lambda_.6} parent=31 // pred_region
        %s580 = smul.u32 32, %s14
      $region36: #{_lambda_.6} parent=31 // pred_fallthru
        _
    $region32: #{_lambda_.6} parent=5 // pred_fallthru
      _
    %p581 = scmp.le.s32.totalorder 2, %s9
    // Predicated region
    $region37: #{_lambda_.6} parent=5 // pred_check
      %p582 = pneg %p581
    $region38: #{_lambda_.6} parent=5 // pred_check_branch
      %584 = sbr.rel (%p582) target = $region40
    $region39: #{_lambda_.6} parent=5 // pred_region
      %s585 = ssub.s32 %s9, 2
      // Predicated region
      $region41: #{_lambda_.6} parent=39 // pred_check
        %p586 = pneg %p106
      $region42: #{_lambda_.6} parent=39 // pred_check_branch
        %588 = sbr.rel (%p586) target = $region44
      $region43: #{_lambda_.6} parent=39 // pred_region
        %s589 = smul.u32 32, %s15
        %p590 = scmp.lt.s32.totalorder %s589, 63
        %s591 = scalar_select %p590, %s589, 63
        %s592 = smul.addr %s591, 8
        %s593 = scalar_lea.vmem %s3, %s592
      $region44: #{_lambda_.6} parent=39 // pred_fallthru
        _
    $region40: #{_lambda_.6} parent=5 // pred_fallthru
      _
  $region6: #{_lambda_.6} parent=0 // loop_footer
    %s13 = sadd.s32 1, %s9
  $region7: #{_lambda_.6} parent=0 // loop_footer_branch
    %8 = sbr.rel target = $region3
  $region8: #{_lambda_.6} parent=0 // loop_exit
    _

// kernel: reverse.4
$region0: #{reverse.4}
  #allocation0 [shape = 's32[1]{0}', space=sflag, size = 0x4, scoped, tag = 'scoped memory for reverse.4']
  %s0 = inlined_call_operand.vmem [shape: f32[2,32,16,7], index: 0, kind: input, shape index: {}]
  %s1 = inlined_call_operand.vmem [shape: f32[2,32,16,7], index: 1, kind: output, shape index: {}]
  %s2 = scalar_lea.vmem %s0, 96
  %v3 = vld [vmem:[%s2] sm:$0xff]
  %4 = vst [vmem:[%s1] sm:$0xff] %v3
  %s5 = scalar_lea.vmem %s0, 208
  %v6 = vld [vmem:[%s5] sm:$0xff]
  %s7 = scalar_lea.vmem %s1, 112
  %8 = vst [vmem:[%s7] sm:$0xff] %v6
  %s9 = scalar_lea.vmem %s0, 80
  %v10 = vld [vmem:[%s9] sm:$0xff]
  %s11 = scalar_lea.vmem %s1, 16
  %12 = vst [vmem:[%s11] sm:$0xff] %v10
  %s13 = scalar_lea.vmem %s0, 192
  %v14 = vld [vmem:[%s13] sm:$0xff]
  %s15 = scalar_lea.vmem %s1, 128
  %16 = vst [vmem:[%s15] sm:$0xff] %v14
  %s17 = scalar_lea.vmem %s0, 64
  %v18 = vld [vmem:[%s17] sm:$0xff]
  %s19 = scalar_lea.vmem %s1, 32
  %20 = vst [vmem:[%s19] sm:$0xff] %v18
  %s21 = scalar_lea.vmem %s0, 176
  %v22 = vld [vmem:[%s21] sm:$0xff]
  %s23 = scalar_lea.vmem %s1, 144
  %24 = vst [vmem:[%s23] sm:$0xff] %v22
  %s25 = scalar_lea.vmem %s0, 48
  %v26 = vld [vmem:[%s25] sm:$0xff]
  %s27 = scalar_lea.vmem %s1, 48
  %28 = vst [vmem:[%s27] sm:$0xff] %v26
  %s29 = scalar_lea.vmem %s0, 160
  %v30 = vld [vmem:[%s29] sm:$0xff]
  %s31 = scalar_lea.vmem %s1, 160
  %32 = vst [vmem:[%s31] sm:$0xff] %v30
  %s33 = scalar_lea.vmem %s0, 32
  %v34 = vld [vmem:[%s33] sm:$0xff]
  %s35 = scalar_lea.vmem %s1, 64
  %36 = vst [vmem:[%s35] sm:$0xff] %v34
  %s37 = scalar_lea.vmem %s0, 144
  %v38 = vld [vmem:[%s37] sm:$0xff]
  %s39 = scalar_lea.vmem %s1, 176
  %40 = vst [vmem:[%s39] sm:$0xff] %v38
  %s41 = scalar_lea.vmem %s0, 16
  %v42 = vld [vmem:[%s41] sm:$0xff]
  %s43 = scalar_lea.vmem %s1, 80
  %44 = vst [vmem:[%s43] sm:$0xff] %v42
  %s45 = scalar_lea.vmem %s0, 128
  %v46 = vld [vmem:[%s45] sm:$0xff]
  %s47 = scalar_lea.vmem %s1, 192
  %48 = vst [vmem:[%s47] sm:$0xff] %v46
  %v49 = vld [vmem:[%s0] sm:$0xff]
  %s50 = scalar_lea.vmem %s1, 96
  %51 = vst [vmem:[%s50] sm:$0xff] %v49
  %s52 = scalar_lea.vmem %s0, 112
  %v53 = vld [vmem:[%s52] sm:$0xff]
  %s54 = scalar_lea.vmem %s1, 208
  %55 = vst [vmem:[%s54] sm:$0xff] %v53
  %s56 = scalar_lea.vmem %s0, 104
  %v57 = vld [vmem:[%s56] sm:$0xff]
  %s58 = scalar_lea.vmem %s1, 8
  %59 = vst [vmem:[%s58] sm:$0xff] %v57
  %s60 = scalar_lea.vmem %s0, 216
  %v61 = vld [vmem:[%s60] sm:$0xff]
  %s62 = scalar_lea.vmem %s1, 120
  %63 = vst [vmem:[%s62] sm:$0xff] %v61
  %s64 = scalar_lea.vmem %s0, 88
  %v65 = vld [vmem:[%s64] sm:$0xff]
  %s66 = scalar_lea.vmem %s1, 24
  %67 = vst [vmem:[%s66] sm:$0xff] %v65
  %s68 = scalar_lea.vmem %s0, 200
  %v69 = vld [vmem:[%s68] sm:$0xff]
  %s70 = scalar_lea.vmem %s1, 136
  %71 = vst [vmem:[%s70] sm:$0xff] %v69
  %s72 = scalar_lea.vmem %s0, 72
  %v73 = vld [vmem:[%s72] sm:$0xff]
  %s74 = scalar_lea.vmem %s1, 40
  %75 = vst [vmem:[%s74] sm:$0xff] %v73
  %s76 = scalar_lea.vmem %s0, 184
  %v77 = vld [vmem:[%s76] sm:$0xff]
  %s78 = scalar_lea.vmem %s1, 152
  %79 = vst [vmem:[%s78] sm:$0xff] %v77
  %s80 = scalar_lea.vmem %s0, 56
  %v81 = vld [vmem:[%s80] sm:$0xff]
  %s82 = scalar_lea.vmem %s1, 56
  %83 = vst [vmem:[%s82] sm:$0xff] %v81
  %s84 = scalar_lea.vmem %s0, 168
  %v85 = vld [vmem:[%s84] sm:$0xff]
  %s86 = scalar_lea.vmem %s1, 168
  %87 = vst [vmem:[%s86] sm:$0xff] %v85
  %s88 = scalar_lea.vmem %s0, 40
  %v89 = vld [vmem:[%s88] sm:$0xff]
  %s90 = scalar_lea.vmem %s1, 72
  %91 = vst [vmem:[%s90] sm:$0xff] %v89
  %s92 = scalar_lea.vmem %s0, 152
  %v93 = vld [vmem:[%s92] sm:$0xff]
  %s94 = scalar_lea.vmem %s1, 184
  %95 = vst [vmem:[%s94] sm:$0xff] %v93
  %s96 = scalar_lea.vmem %s0, 24
  %v97 = vld [vmem:[%s96] sm:$0xff]
  %s98 = scalar_lea.vmem %s1, 88
  %99 = vst [vmem:[%s98] sm:$0xff] %v97
  %s100 = scalar_lea.vmem %s0, 136
  %v101 = vld [vmem:[%s100] sm:$0xff]
  %s102 = scalar_lea.vmem %s1, 200
  %103 = vst [vmem:[%s102] sm:$0xff] %v101
  %s104 = scalar_lea.vmem %s0, 8
  %v105 = vld [vmem:[%s104] sm:$0xff]
  %s106 = scalar_lea.vmem %s1, 104
  %107 = vst [vmem:[%s106] sm:$0xff] %v105
  %s108 = scalar_lea.vmem %s0, 120
  %v109 = vld [vmem:[%s108] sm:$0xff]
  %s110 = scalar_lea.vmem %s1, 216
  %111 = vst [vmem:[%s110] sm:$0xff] %v109

// kernel: _lambda_.7
$region0: #{_lambda_.7}
  #allocation0 [shape = 'u32[]', space=smem, size = 0x4, offset = 0x4, fixed_abs, tag = 'smem constant byte address 0x4 - core index']
  #allocation1 [shape = 'u32[144,128]{1,0:T(1,128)}', space=vmem, size = 0x12000, scoped, tag = 'internal scratch']
  %s0 = inlined_call_operand.vmem [shape: f32[2,16,32], index: 0, kind: input, shape index: {}]
  %s1 = inlined_call_operand.vmem [shape: f32[2,16,32], index: 1, kind: input, shape index: {}]
  %s2 = inlined_call_operand.vmem [shape: f32[16,32,32], index: 2, kind: input, shape index: {}]
  %s3 = inlined_call_operand.vmem [shape: f32[16,32,32], index: 3, kind: input, shape index: {}]
  %s4 = inlined_call_operand.vmem [shape: f32[2,16,32], index: 4, kind: output, shape index: {0}]
  %s5 = inlined_call_operand.vmem [shape: f32[2,16,32], index: 5, kind: output, shape index: {1}]
  %6 = xla_tuple %s4, %s5
  %s7 = sld [smem:[#allocation0]]
  $region201: #{_lambda_.7} parent=0
    _
  %s9 = ssub.s32 1, %s7
  %s10 = scalar_select 0, %s9, %s7
  $region1: #{_lambda_.7} parent=0
    #allocation2 [shape = 'u8[16384]{0}', space=vmem, size = 0x4000, scoped, tag = 'input window, operand 0']
    #allocation3 [shape = 'u8[16384]{0}', space=vmem, size = 0x4000, scoped, tag = 'input window, operand 1']
    #allocation4 [shape = 'u8[16384]{0}', space=vmem, size = 0x4000, scoped, tag = 'output window, operand 0']
    #allocation5 [shape = 'u8[16384]{0}', space=vmem, size = 0x4000, scoped, tag = 'output window, operand 1']
    loop: start=0, step=1, limit=4
    $region2: #{_lambda_.7} parent=1 // loop_pre_header
      _
    $region3: #{_lambda_.7} parent=1 // loop_header
      %s12 = sphi 0, %s16
      %p13 = scmp.ge.s32.totalorder %s12, 4
      %s22 = sphi 0, %s24
      %s25 = sphi 0, %s22
      %s26 = sphi 0, %s25
      %s42 = sphi 0, %s26
      %s48 = sphi 0, %s50
      %s51 = sphi 0, %s48
      %s52 = sphi 0, %s51
      %s68 = sphi 0, %s52
      %s74 = sphi 0, %s76
      %s77 = sphi 0, %s74
      %s78 = sphi 0, %s77
      %s94 = sphi 0, %s78
      %s100 = sphi 0, %s102
      %s103 = sphi 0, %s100
      %s104 = sphi 0, %s103
      %s120 = sphi 0, %s104
      %s126 = sphi 0, %s128
      %s129 = sphi 0, %s126
      %s130 = sphi 0, %s129
      %s146 = sphi 0, %s130
      %s152 = sphi 0, %s154
      %s155 = sphi 0, %s152
      %s156 = sphi 0, %s155
      %s172 = sphi 0, %s156
    $region4: #{_lambda_.7} parent=1 // loop_header_branch
      %15 = sbr.rel (%p13) target = $region8
    $region5: #{_lambda_.7} parent=1 // loop_body
      %s17 = ssub.s32 %s12, 1
      %s18 = ssub.s32 %s12, 2
      %s19 = sadd.s32 %s12, 1
      %s20 = ssub.s32 %s12, %s19
      %p21 = scmp.eq.s32.totalorder %s20, 0
      %s23 = sadd.s32 %s22, 1
      %s24 = scalar_select %p21, %s22, %s23
      %p27 = pneg %p21
      %p28 = scmp.eq.s32.totalorder %s12, 1
      %p29 = por %p27, %p28
      %p30 = scmp.ne.s32.totalorder %s22, %s25
      %p31 = scmp.eq.s32.totalorder %s12, 0
      %p32 = por %p30, %p31
      %p33 = scmp.ne.s32.totalorder %s22, %s25
      %p34 = scmp.eq.s32.totalorder %s17, 1
      %p35 = por %p33, %p34
      %p36 = scmp.ne.s32.totalorder %s25, %s26
      %p37 = scmp.eq.s32.totalorder %s17, 0
      %p38 = por %p36, %p37
      %p39 = scmp.ne.s32.totalorder %s25, %s26
      %p40 = scmp.eq.s32.totalorder %s18, 1
      %p41 = por %p39, %p40
      %p43 = scmp.ne.s32.totalorder %s26, %s42
      %p44 = scmp.eq.s32.totalorder %s18, 0
      %p45 = por %p43, %p44
      %s46 = ssub.s32 %s12, %s19
      %p47 = scmp.eq.s32.totalorder %s46, 0
      %s49 = sadd.s32 %s48, 1
      %s50 = scalar_select %p47, %s48, %s49
      %p53 = pneg %p47
      %p54 = scmp.eq.s32.totalorder %s12, 1
      %p55 = por %p53, %p54
      %p56 = scmp.ne.s32.totalorder %s48, %s51
      %p57 = scmp.eq.s32.totalorder %s12, 0
      %p58 = por %p56, %p57
      %p59 = scmp.ne.s32.totalorder %s48, %s51
      %p60 = scmp.eq.s32.totalorder %s17, 1
      %p61 = por %p59, %p60
      %p62 = scmp.ne.s32.totalorder %s51, %s52
      %p63 = scmp.eq.s32.totalorder %s17, 0
      %p64 = por %p62, %p63
      %p65 = scmp.ne.s32.totalorder %s51, %s52
      %p66 = scmp.eq.s32.totalorder %s18, 1
      %p67 = por %p65, %p66
      %p69 = scmp.ne.s32.totalorder %s52, %s68
      %p70 = scmp.eq.s32.totalorder %s18, 0
      %p71 = por %p69, %p70
      %s72 = ssub.s32 %s12, %s19
      %p73 = scmp.eq.s32.totalorder %s72, 0
      %s75 = sadd.s32 %s74, 1
      %s76 = scalar_select %p73, %s74, %s75
      %p79 = pneg %p73
      %p80 = scmp.eq.s32.totalorder %s12, 1
      %p81 = por %p79, %p80
      %p82 = scmp.ne.s32.totalorder %s74, %s77
      %p83 = scmp.eq.s32.totalorder %s12, 0
      %p84 = por %p82, %p83
      %p85 = scmp.ne.s32.totalorder %s74, %s77
      %p86 = scmp.eq.s32.totalorder %s17, 1
      %p87 = por %p85, %p86
      %p88 = scmp.ne.s32.totalorder %s77, %s78
      %p89 = scmp.eq.s32.totalorder %s17, 0
      %p90 = por %p88, %p89
      %p91 = scmp.ne.s32.totalorder %s77, %s78
      %p92 = scmp.eq.s32.totalorder %s18, 1
      %p93 = por %p91, %p92
      %p95 = scmp.ne.s32.totalorder %s78, %s94
      %p96 = scmp.eq.s32.totalorder %s18, 0
      %p97 = por %p95, %p96
      %s98 = ssub.s32 %s12, %s19
      %p99 = scmp.eq.s32.totalorder %s98, 0
      %s101 = sadd.s32 %s100, 1
      %s102 = scalar_select %p99, %s100, %s101
      %p105 = pneg %p99
      %p106 = scmp.eq.s32.totalorder %s12, 1
      %p107 = por %p105, %p106
      %p108 = scmp.ne.s32.totalorder %s100, %s103
      %p109 = scmp.eq.s32.totalorder %s12, 0
      %p110 = por %p108, %p109
      %p111 = scmp.ne.s32.totalorder %s100, %s103
      %p112 = scmp.eq.s32.totalorder %s17, 1
      %p113 = por %p111, %p112
      %p114 = scmp.ne.s32.totalorder %s103, %s104
      %p115 = scmp.eq.s32.totalorder %s17, 0
      %p116 = por %p114, %p115
      %p117 = scmp.ne.s32.totalorder %s103, %s104
      %p118 = scmp.eq.s32.totalorder %s18, 1
      %p119 = por %p117, %p118
      %p121 = scmp.ne.s32.totalorder %s104, %s120
      %p122 = scmp.eq.s32.totalorder %s18, 0
      %p123 = por %p121, %p122
      %s124 = ssub.s32 %s12, %s19
      %p125 = scmp.eq.s32.totalorder %s124, 0
      %s127 = sadd.s32 %s126, 1
      %s128 = scalar_select %p125, %s126, %s127
      %p131 = pneg %p125
      %p132 = scmp.eq.s32.totalorder %s12, 1
      %p133 = por %p131, %p132
      %p134 = scmp.ne.s32.totalorder %s126, %s129
      %p135 = scmp.eq.s32.totalorder %s12, 0
      %p136 = por %p134, %p135
      %p137 = scmp.ne.s32.totalorder %s126, %s129
      %p138 = scmp.eq.s32.totalorder %s17, 1
      %p139 = por %p137, %p138
      %p140 = scmp.ne.s32.totalorder %s129, %s130
      %p141 = scmp.eq.s32.totalorder %s17, 0
      %p142 = por %p140, %p141
      %p143 = scmp.ne.s32.totalorder %s129, %s130
      %p144 = scmp.eq.s32.totalorder %s18, 1
      %p145 = por %p143, %p144
      %p147 = scmp.ne.s32.totalorder %s130, %s146
      %p148 = scmp.eq.s32.totalorder %s18, 0
      %p149 = por %p147, %p148
      %s150 = ssub.s32 %s12, %s19
      %p151 = scmp.eq.s32.totalorder %s150, 0
      %s153 = sadd.s32 %s152, 1
      %s154 = scalar_select %p151, %s152, %s153
      %p157 = pneg %p151
      %p158 = scmp.eq.s32.totalorder %s12, 1
      %p159 = por %p157, %p158
      %p160 = scmp.ne.s32.totalorder %s152, %s155
      %p161 = scmp.eq.s32.totalorder %s12, 0
      %p162 = por %p160, %p161
      %p163 = scmp.ne.s32.totalorder %s152, %s155
      %p164 = scmp.eq.s32.totalorder %s17, 1
      %p165 = por %p163, %p164
      %p166 = scmp.ne.s32.totalorder %s155, %s156
      %p167 = scmp.eq.s32.totalorder %s17, 0
      %p168 = por %p166, %p167
      %p169 = scmp.ne.s32.totalorder %s155, %s156
      %p170 = scmp.eq.s32.totalorder %s18, 1
      %p171 = por %p169, %p170
      %p173 = scmp.ne.s32.totalorder %s156, %s172
      %p174 = scmp.eq.s32.totalorder %s18, 0
      %p175 = por %p173, %p174
      %p176 = scmp.le.s32.totalorder 1, %s12
      %p177 = scmp.lt.s32.totalorder %s12, 3
      %p178 = pnand %p176, %p177
      %p179 = pneg %p178
      // Predicated region
      $region9: #{_lambda_.7} parent=5 // pred_check
        _
      $region10: #{_lambda_.7} parent=5 // pred_check_branch
        %181 = sbr.rel (%p178) target = $region12
      $region11: #{_lambda_.7} parent=5 // pred_region
        %s182 = ssub.s32 %s12, 1
      $region12: #{_lambda_.7} parent=5 // pred_fallthru
        _
      %p183 = scmp.lt.s32.totalorder %s12, 2
      // Predicated region
      $region13: #{_lambda_.7} parent=5 // pred_check
        %p184 = pneg %p183
      $region14: #{_lambda_.7} parent=5 // pred_check_branch
        %186 = sbr.rel (%p184) target = $region16
      $region15: #{_lambda_.7} parent=5 // pred_region
        // Predicated region
        $region17: #{_lambda_.7} parent=15 // pred_check
          %p187 = pneg %p32
        $region18: #{_lambda_.7} parent=15 // pred_check_branch
          %189 = sbr.rel (%p187) target = $region20
        $region19: #{_lambda_.7} parent=15 // pred_region
          %s190 = sand.u32 %s22, 1
          %s191 = sand.u32 %s22, 1
          %s192 = smul.addr %s191, 16
          %s193 = scalar_lea.vmem [#allocation2], %s192
          %s194 = smul.addr %s12, 8
          %s195 = scalar_lea.vmem %s0, %s194
          // Predicated region
          $region21: #{_lambda_.7} parent=19 // pred_check
            _
          $region22: #{_lambda_.7} parent=19 // pred_check_branch
            %197 = sbr.rel (0) target = $region24
          $region23: #{_lambda_.7} parent=19 // pred_region
            // Predicated region
            $region25: #{_lambda_.7} parent=23 // pred_check
              _
            $region26: #{_lambda_.7} parent=23 // pred_check_branch
              %199 = sbr.rel (0) target = $region28
            $region27: #{_lambda_.7} parent=23 // pred_region
              // Predicated region
              $region40: #{_lambda_.7} parent=27 // pred_check
                _
              $region41: #{_lambda_.7} parent=27 // pred_check_branch
                %216 = sbr.rel (0) target = $region43
              $region42: #{_lambda_.7} parent=27 // pred_region
                loop: start=0, step=1, limit=1
                $region44: #{_lambda_.7} parent=42 // loop_pre_header
                  _
                $region45: #{_lambda_.7} parent=42 // loop_header
                  %s218 = sphi 0, %s222
                  %p219 = scmp.ge.s32.totalorder %s218, 1
                  %s223 = sphi %s195, %s195
                  %s224 = sphi %s193, %s193
                $region46: #{_lambda_.7} parent=42 // loop_header_branch
                  %221 = sbr.rel (%p219) target = $region50
                $region47: #{_lambda_.7} parent=42 // loop_body
                  %v225 = vld [vmem:[%s223] sm:$0xff]
                  %226 = vst [vmem:[%s224] sm:$0xff] %v225
                  %v227 = vld [vmem:[%s223 + $0x10] sm:$0xff]
                  %228 = vst [vmem:[%s224 + $0x8] sm:$0xff] %v227
                $region48: #{_lambda_.7} parent=42 // loop_footer
                  %s222 = sadd.s32 1, %s218
                $region49: #{_lambda_.7} parent=42 // loop_footer_branch
                  %217 = sbr.rel target = $region45
                $region50: #{_lambda_.7} parent=42 // loop_exit
                  _
              $region43: #{_lambda_.7} parent=27 // pred_fallthru
                _
              // Predicated region
              $region51: #{_lambda_.7} parent=27 // pred_check
                _
              $region52: #{_lambda_.7} parent=27 // pred_check_branch
                %230 = sbr.rel target = $region54
              $region53: #{_lambda_.7} parent=27 // pred_region
                _
              $region54: #{_lambda_.7} parent=27 // pred_fallthru
                _
            $region28: #{_lambda_.7} parent=23 // pred_fallthru
              _
            // Predicated region
            $region29: #{_lambda_.7} parent=23 // pred_check
              _
            $region30: #{_lambda_.7} parent=23 // pred_check_branch
              %201 = sbr.rel target = $region32
            $region31: #{_lambda_.7} parent=23 // pred_region
              loop: start=0, step=1, limit=1
              $region33: #{_lambda_.7} parent=31 // loop_pre_header
                _
              $region34: #{_lambda_.7} parent=31 // loop_header
                %s204 = sphi 0, %s208
                %p205 = scmp.ge.s32.totalorder %s204, 1
                %s209 = sphi %s195, %s195
                %s210 = sphi %s193, %s193
              $region35: #{_lambda_.7} parent=31 // loop_header_branch
                %207 = sbr.rel (%p205) target = $region39
              $region36: #{_lambda_.7} parent=31 // loop_body
                %v211 = vld [vmem:[%s209] sm:$0xff]
                %212 = vst [vmem:[%s210] sm:$0xff] %v211
                %v213 = vld [vmem:[%s209 + $0x10] sm:$0xff]
                %214 = vst [vmem:[%s210 + $0x8] sm:$0xff] %v213
              $region37: #{_lambda_.7} parent=31 // loop_footer
                %s208 = sadd.s32 1, %s204
              $region38: #{_lambda_.7} parent=31 // loop_footer_branch
                %203 = sbr.rel target = $region34
              $region39: #{_lambda_.7} parent=31 // loop_exit
                _
            $region32: #{_lambda_.7} parent=23 // pred_fallthru
              _
          $region24: #{_lambda_.7} parent=19 // pred_fallthru
            _
          %231 = vnop
        $region20: #{_lambda_.7} parent=15 // pred_fallthru
          _
        // Predicated region
        $region55: #{_lambda_.7} parent=15 // pred_check
          %p232 = pneg %p58
        $region56: #{_lambda_.7} parent=15 // pred_check_branch
          %234 = sbr.rel (%p232) target = $region58
        $region57: #{_lambda_.7} parent=15 // pred_region
          %s235 = sand.u32 %s48, 1
          %s236 = sand.u32 %s48, 1
          %s237 = smul.addr %s236, 16
          %s238 = scalar_lea.vmem [#allocation3], %s237
          %s239 = smul.addr %s12, 8
          %s240 = scalar_lea.vmem %s1, %s239
          // Predicated region
          $region59: #{_lambda_.7} parent=57 // pred_check
            _
          $region60: #{_lambda_.7} parent=57 // pred_check_branch
            %242 = sbr.rel (0) target = $region62
          $region61: #{_lambda_.7} parent=57 // pred_region
            // Predicated region
            $region63: #{_lambda_.7} parent=61 // pred_check
              _
            $region64: #{_lambda_.7} parent=61 // pred_check_branch
              %244 = sbr.rel (0) target = $region66
            $region65: #{_lambda_.7} parent=61 // pred_region
              // Predicated region
              $region78: #{_lambda_.7} parent=65 // pred_check
                _
              $region79: #{_lambda_.7} parent=65 // pred_check_branch
                %261 = sbr.rel (0) target = $region81
              $region80: #{_lambda_.7} parent=65 // pred_region
                loop: start=0, step=1, limit=1
                $region82: #{_lambda_.7} parent=80 // loop_pre_header
                  _
                $region83: #{_lambda_.7} parent=80 // loop_header
                  %s263 = sphi 0, %s267
                  %p264 = scmp.ge.s32.totalorder %s263, 1
                  %s268 = sphi %s240, %s240
                  %s269 = sphi %s238, %s238
                $region84: #{_lambda_.7} parent=80 // loop_header_branch
                  %266 = sbr.rel (%p264) target = $region88
                $region85: #{_lambda_.7} parent=80 // loop_body
                  %v270 = vld [vmem:[%s268] sm:$0xff]
                  %271 = vst [vmem:[%s269] sm:$0xff] %v270
                  %v272 = vld [vmem:[%s268 + $0x10] sm:$0xff]
                  %273 = vst [vmem:[%s269 + $0x8] sm:$0xff] %v272
                $region86: #{_lambda_.7} parent=80 // loop_footer
                  %s267 = sadd.s32 1, %s263
                $region87: #{_lambda_.7} parent=80 // loop_footer_branch
                  %262 = sbr.rel target = $region83
                $region88: #{_lambda_.7} parent=80 // loop_exit
                  _
              $region81: #{_lambda_.7} parent=65 // pred_fallthru
                _
              // Predicated region
              $region89: #{_lambda_.7} parent=65 // pred_check
                _
              $region90: #{_lambda_.7} parent=65 // pred_check_branch
                %275 = sbr.rel target = $region92
              $region91: #{_lambda_.7} parent=65 // pred_region
                _
              $region92: #{_lambda_.7} parent=65 // pred_fallthru
                _
            $region66: #{_lambda_.7} parent=61 // pred_fallthru
              _
            // Predicated region
            $region67: #{_lambda_.7} parent=61 // pred_check
              _
            $region68: #{_lambda_.7} parent=61 // pred_check_branch
              %246 = sbr.rel target = $region70
            $region69: #{_lambda_.7} parent=61 // pred_region
              loop: start=0, step=1, limit=1
              $region71: #{_lambda_.7} parent=69 // loop_pre_header
                _
              $region72: #{_lambda_.7} parent=69 // loop_header
                %s249 = sphi 0, %s253
                %p250 = scmp.ge.s32.totalorder %s249, 1
                %s254 = sphi %s240, %s240
                %s255 = sphi %s238, %s238
              $region73: #{_lambda_.7} parent=69 // loop_header_branch
                %252 = sbr.rel (%p250) target = $region77
              $region74: #{_lambda_.7} parent=69 // loop_body
                %v256 = vld [vmem:[%s254] sm:$0xff]
                %257 = vst [vmem:[%s255] sm:$0xff] %v256
                %v258 = vld [vmem:[%s254 + $0x10] sm:$0xff]
                %259 = vst [vmem:[%s255 + $0x8] sm:$0xff] %v258
              $region75: #{_lambda_.7} parent=69 // loop_footer
                %s253 = sadd.s32 1, %s249
              $region76: #{_lambda_.7} parent=69 // loop_footer_branch
                %248 = sbr.rel target = $region72
              $region77: #{_lambda_.7} parent=69 // loop_exit
                _
            $region70: #{_lambda_.7} parent=61 // pred_fallthru
              _
          $region62: #{_lambda_.7} parent=57 // pred_fallthru
            _
          %276 = vnop
        $region58: #{_lambda_.7} parent=15 // pred_fallthru
          _
        // Predicated region
        $region93: #{_lambda_.7} parent=15 // pred_check
          %p277 = pneg %p84
        $region94: #{_lambda_.7} parent=15 // pred_check_branch
          %279 = sbr.rel (%p277) target = $region96
        $region95: #{_lambda_.7} parent=15 // pred_region
          %s280 = smul.u32 8, %s12
          %p281 = scmp.lt.s32.totalorder %s280, 15
          %s282 = scalar_select %p281, %s280, 15
          %s283 = smul.addr %s282, 4
          %s284 = smul.addr %s283, 8
          %s285 = scalar_lea.vmem %s2, %s284
          %s286 = smul.u32 8, %s12
        $region96: #{_lambda_.7} parent=15 // pred_fallthru
          _
        // Predicated region
        $region97: #{_lambda_.7} parent=15 // pred_check
          %p287 = pneg %p110
        $region98: #{_lambda_.7} parent=15 // pred_check_branch
          %289 = sbr.rel (%p287) target = $region100
        $region99: #{_lambda_.7} parent=15 // pred_region
          %s290 = smul.u32 8, %s12
          %p291 = scmp.lt.s32.totalorder %s290, 15
          %s292 = scalar_select %p291, %s290, 15
          %s293 = smul.addr %s292, 4
          %s294 = smul.addr %s293, 8
          %s295 = scalar_lea.vmem %s3, %s294
          %s296 = smul.u32 8, %s12
        $region100: #{_lambda_.7} parent=15 // pred_fallthru
          _
      $region16: #{_lambda_.7} parent=5 // pred_fallthru
        _
      %p297 = scmp.le.s32.totalorder 1, %s12
      %p298 = scmp.lt.s32.totalorder %s12, 3
      %p299 = pnand %p297, %p298
      %p300 = pneg %p299
      // Predicated region
      $region101: #{_lambda_.7} parent=5 // pred_check
        _
      $region102: #{_lambda_.7} parent=5 // pred_check_branch
        %302 = sbr.rel (%p299) target = $region104
      $region103: #{_lambda_.7} parent=5 // pred_region
        %s303 = ssub.s32 %s12, 1
        %s304 = sand.u32 %s25, 1
        %s305 = sand.u32 %s25, 1
        %s306 = smul.addr %s305, 16
        %s307 = scalar_lea.vmem [#allocation2], %s306
        // Predicated region
        $region105: #{_lambda_.7} parent=103 // pred_check
          %p308 = pneg %p38
        $region106: #{_lambda_.7} parent=103 // pred_check_branch
          %310 = sbr.rel (%p308) target = $region108
        $region107: #{_lambda_.7} parent=103 // pred_region
          _
        $region108: #{_lambda_.7} parent=103 // pred_fallthru
          _
        %s311 = sand.u32 %s51, 1
        %s312 = sand.u32 %s51, 1
        %s313 = smul.addr %s312, 16
        %s314 = scalar_lea.vmem [#allocation3], %s313
        // Predicated region
        $region109: #{_lambda_.7} parent=103 // pred_check
          %p315 = pneg %p64
        $region110: #{_lambda_.7} parent=103 // pred_check_branch
          %317 = sbr.rel (%p315) target = $region112
        $region111: #{_lambda_.7} parent=103 // pred_region
          _
        $region112: #{_lambda_.7} parent=103 // pred_fallthru
          _
        %s318 = sand.u32 %s25, 1
        %s319 = sand.u32 %s25, 1
        %s320 = smul.addr %s319, 16
        %s321 = scalar_lea.vmem [#allocation2], %s320
        %p322 = pneg %p38
        %p323 = pneg %p35
        %s324 = sand.u32 %s51, 1
        %s325 = sand.u32 %s51, 1
        %s326 = smul.addr %s325, 16
        %s327 = scalar_lea.vmem [#allocation3], %s326
        %p328 = pneg %p64
        %p329 = pneg %p61
        %s330 = smul.u32 8, %s17
        %p331 = scmp.lt.s32.totalorder %s330, 15
        %s332 = scalar_select %p331, %s330, 15
        %s333 = smul.addr %s332, 4
        %s334 = smul.addr %s333, 8
        %s335 = scalar_lea.vmem %s2, %s334
        %p336 = pneg %p90
        %p337 = pneg %p87
        %s338 = smul.u32 8, %s17
        %p339 = scmp.lt.s32.totalorder %s338, 15
        %s340 = scalar_select %p339, %s338, 15
        %s341 = smul.addr %s340, 4
        %s342 = smul.addr %s341, 8
        %s343 = scalar_lea.vmem %s3, %s342
        %p344 = pneg %p116
        %p345 = pneg %p113
        %p346 = pneg %p142
        %p347 = pneg %p139
        %s348 = sand.u32 %s129, 1
        %s349 = sand.u32 %s129, 1
        %s350 = smul.addr %s349, 16
        %s351 = scalar_lea.vmem [#allocation4], %s350
        %p352 = pneg %p168
        %p353 = pneg %p165
        %s354 = sand.u32 %s155, 1
        %s355 = sand.u32 %s155, 1
        %s356 = smul.addr %s355, 16
        %s357 = scalar_lea.vmem [#allocation5], %s356
        %s358 = smul.u32 8, %s17
        %p359 = scmp.lt.s32.totalorder %s358, 15
        %s360 = scalar_select %p359, %s358, 15
        %s361 = smul.addr %s360, 4
        %s362 = smul.addr %s361, 8
        %s363 = scalar_lea.vmem %s2, %s362
        %s364 = smul.u32 8, %s17
        %s365 = smul.u32 8, %s17
        %p366 = scmp.lt.s32.totalorder %s365, 15
        %s367 = scalar_select %p366, %s365, 15
        %s368 = smul.addr %s367, 4
        %s369 = smul.addr %s368, 8
        %s370 = scalar_lea.vmem %s3, %s369
        %s371 = smul.u32 8, %s17
        %v372 = vld [vmem:[%s307] sm:$0xff]
        %v373 = vld [vmem:[%s307 + $0x8] sm:$0xff]
        %v374 = vld [vmem:[%s314] sm:$0xff]
        %v375 = vld [vmem:[%s314 + $0x8] sm:$0xff]
        %v376 = vld [vmem:[%s363] sm:$0xff]
        %v377 = vld [vmem:[%s363 + $0x8] sm:$0xff]
        %v378 = vld [vmem:[%s363 + $0x10] sm:$0xff]
        %v379 = vld [vmem:[%s363 + $0x18] sm:$0xff]
        %v380 = vld [vmem:[%s363 + $0x20] sm:$0xff]
        %v381 = vld [vmem:[%s363 + $0x28] sm:$0xff]
        %v382 = vld [vmem:[%s363 + $0x30] sm:$0xff]
        %v383 = vld [vmem:[%s363 + $0x38] sm:$0xff]
        %v384 = vld [vmem:[%s363 + $0x40] sm:$0xff]
        %v385 = vld [vmem:[%s363 + $0x48] sm:$0xff]
        %v386 = vld [vmem:[%s363 + $0x50] sm:$0xff]
        %v387 = vld [vmem:[%s363 + $0x58] sm:$0xff]
        %v388 = vld [vmem:[%s363 + $0x60] sm:$0xff]
        %v389 = vld [vmem:[%s363 + $0x68] sm:$0xff]
        %v390 = vld [vmem:[%s363 + $0x70] sm:$0xff]
        %v391 = vld [vmem:[%s363 + $0x78] sm:$0xff]
        %v392 = vld [vmem:[%s363 + $0x80] sm:$0xff]
        %v393 = vld [vmem:[%s363 + $0x88] sm:$0xff]
        %v394 = vld [vmem:[%s363 + $0x90] sm:$0xff]
        %v395 = vld [vmem:[%s363 + $0x98] sm:$0xff]
        %v396 = vld [vmem:[%s363 + $0xa0] sm:$0xff]
        %v397 = vld [vmem:[%s363 + $0xa8] sm:$0xff]
        %v398 = vld [vmem:[%s363 + $0xb0] sm:$0xff]
        %v399 = vld [vmem:[%s363 + $0xb8] sm:$0xff]
        %v400 = vld [vmem:[%s363 + $0xc0] sm:$0xff]
        %v401 = vld [vmem:[%s363 + $0xc8] sm:$0xff]
        %v402 = vld [vmem:[%s363 + $0xd0] sm:$0xff]
        %v403 = vld [vmem:[%s363 + $0xd8] sm:$0xff]
        %v404 = vld [vmem:[%s363 + $0xe0] sm:$0xff]
        %v405 = vld [vmem:[%s363 + $0xe8] sm:$0xff]
        %v406 = vld [vmem:[%s363 + $0xf0] sm:$0xff]
        %v407 = vld [vmem:[%s363 + $0xf8] sm:$0xff]
        %v408 = vld [vmem:[%s370] sm:$0xff]
        %v409 = vld [vmem:[%s370 + $0x8] sm:$0xff]
        %v410 = vld [vmem:[%s370 + $0x10] sm:$0xff]
        %v411 = vld [vmem:[%s370 + $0x18] sm:$0xff]
        %v412 = vld [vmem:[%s370 + $0x20] sm:$0xff]
        %v413 = vld [vmem:[%s370 + $0x28] sm:$0xff]
        %v414 = vld [vmem:[%s370 + $0x30] sm:$0xff]
        %v415 = vld [vmem:[%s370 + $0x38] sm:$0xff]
        %v416 = vld [vmem:[%s370 + $0x40] sm:$0xff]
        %v417 = vld [vmem:[%s370 + $0x48] sm:$0xff]
        %v418 = vld [vmem:[%s370 + $0x50] sm:$0xff]
        %v419 = vld [vmem:[%s370 + $0x58] sm:$0xff]
        %v420 = vld [vmem:[%s370 + $0x60] sm:$0xff]
        %v421 = vld [vmem:[%s370 + $0x68] sm:$0xff]
        %v422 = vld [vmem:[%s370 + $0x70] sm:$0xff]
        %v423 = vld [vmem:[%s370 + $0x78] sm:$0xff]
        %v424 = vld [vmem:[%s370 + $0x80] sm:$0xff]
        %v425 = vld [vmem:[%s370 + $0x88] sm:$0xff]
        %v426 = vld [vmem:[%s370 + $0x90] sm:$0xff]
        %v427 = vld [vmem:[%s370 + $0x98] sm:$0xff]
        %v428 = vld [vmem:[%s370 + $0xa0] sm:$0xff]
        %v429 = vld [vmem:[%s370 + $0xa8] sm:$0xff]
        %v430 = vld [vmem:[%s370 + $0xb0] sm:$0xff]
        %v431 = vld [vmem:[%s370 + $0xb8] sm:$0xff]
        %v432 = vld [vmem:[%s370 + $0xc0] sm:$0xff]
        %v433 = vld [vmem:[%s370 + $0xc8] sm:$0xff]
        %v434 = vld [vmem:[%s370 + $0xd0] sm:$0xff]
        %v435 = vld [vmem:[%s370 + $0xd8] sm:$0xff]
        %v436 = vld [vmem:[%s370 + $0xe0] sm:$0xff]
        %v437 = vld [vmem:[%s370 + $0xe8] sm:$0xff]
        %v438 = vld [vmem:[%s370 + $0xf0] sm:$0xff]
        %v439 = vld [vmem:[%s370 + $0xf8] sm:$0xff]
        %v442 = vrot.slane %v373, 7
        %vm443 = vcmask 1041409
        %v444 = vsel %vm443, %v442, %v372
        %vm445 = vcmask 261120
        %v446 = vsel %vm445, %v444, 0
        %448 = vmatprep.subr.mxu0 0.0
        %449 = vmatpush1.msra.mxu0 %v376
        %450 = vmatprep.subr.mxu0 0.0
        %451 = vmatpush1.msra.mxu0 %v377
        %452 = vmatprep.subr.mxu0 0.0
        %453 = vmatpush1.msra.mxu0 %v378
        %454 = vmatprep.subr.mxu0 0.0
        %455 = vmatpush1.msra.mxu0 %v379
        %456 = vmatprep.subr.mxu0 0.0
        %457 = vmatpush1.msra.mxu0 0.0
        %458 = vmatprep.subr.mxu0 0.0
        %459 = vmatpush1.msra.mxu0 0.0
        %460 = vmatprep.subr.mxu0 0.0
        %461 = vmatpush1.msra.mxu0 0.0
        %462 = vmatprep.subr.mxu0 0.0
        %463 = vmatpush1.msra.mxu0 0.0
        %464 = vmatprep.subr.mxu0 0.0
        %465 = vmatpush1.msra.mxu0 0.0
        %466 = vmatprep.subr.mxu0 0.0
        %467 = vmatpush1.msra.mxu0 0.0
        %468 = vmatprep.subr.mxu0 0.0
        %469 = vmatpush1.msra.mxu0 0.0
        %470 = vmatprep.subr.mxu0 0.0
        %471 = vmatpush1.msra.mxu0 0.0
        %472 = vmatprep.subr.mxu0 0.0
        %473 = vmatpush1.msra.mxu0 0.0
        %474 = vmatprep.subr.mxu0 0.0
        %475 = vmatpush1.msra.mxu0 0.0
        %476 = vmatprep.subr.mxu0 0.0
        %477 = vmatpush1.msra.mxu0 0.0
        %478 = vmatprep.subr.mxu0 0.0
        %479 = vmatpush1.msra.mxu0 0.0
        %480 = vmatprep.subr.mxu0 0.0
        %481 = vmatpush1.msra.mxu0 0.0
        %482 = vmatprep.subr.mxu0 0.0
        %483 = vmatpush1.msra.mxu0 0.0
        %484 = vmatprep.subr.mxu0 0.0
        %485 = vmatpush1.msra.mxu0 0.0
        %486 = vmatprep.subr.mxu0 0.0
        %487 = vmatpush1.msra.mxu0 0.0
        %488 = vmatprep.subr.mxu0 0.0
        %489 = vmatpush1.msra.mxu0 0.0
        %490 = vmatprep.subr.mxu0 0.0
        %491 = vmatpush1.msra.mxu0 0.0
        %492 = vmatprep.subr.mxu0 0.0
        %493 = vmatpush1.msra.mxu0 0.0
        %494 = vmatprep.subr.mxu0 0.0
        %495 = vmatpush1.msra.mxu0 0.0
        %496 = vmatprep.subr.mxu0 0.0
        %497 = vmatpush1.msra.mxu0 0.0
        %498 = vmatprep.subr.mxu0 0.0
        %499 = vmatpush1.msra.mxu0 0.0
        %500 = vmatprep.subr.mxu0 0.0
        %501 = vmatpush1.msra.mxu0 0.0
        %502 = vmatprep.subr.mxu0 0.0
        %503 = vmatpush1.msra.mxu0 0.0
        %504 = vmatprep.subr.mxu0 0.0
        %505 = vmatpush1.msra.mxu0 0.0
        %506 = vmatprep.subr.mxu0 0.0
        %507 = vmatpush1.msra.mxu0 0.0
        %508 = vmatprep.subr.mxu0 0.0
        %509 = vmatpush1.msra.mxu0 0.0
        %510 = vmatprep.subr.mxu0 0.0
        %511 = vmatpush1.msra.mxu0 0.0
        %512 = vmatprep.mubr.f32.mxu0 0.0
        %513 = vmatmul.mubr.f32.gmra.mrb[0].mxu0 %v446
        %v514 = vpop.f32.mrb[0].mxu0
        %v515 = vadd.f32 0.0, %v514
        %v516 = vpop.f32.mrb[0].mxu0
        %517 = vdwg.mxu0
        %v520 = vrot.slane %v375, 7
        %v521 = vsel %vm443, %v520, %v374
        %v522 = vsel %vm445, %v521, 0
        %524 = vmatprep.subr.mxu0 0.0
        %525 = vmatpush1.msra.mxu0 %v408
        %526 = vmatprep.subr.mxu0 0.0
        %527 = vmatpush1.msra.mxu0 %v409
        %528 = vmatprep.subr.mxu0 0.0
        %529 = vmatpush1.msra.mxu0 %v410
        %530 = vmatprep.subr.mxu0 0.0
        %531 = vmatpush1.msra.mxu0 %v411
        %532 = vmatprep.subr.mxu0 0.0
        %533 = vmatpush1.msra.mxu0 0.0
        %534 = vmatprep.subr.mxu0 0.0
        %535 = vmatpush1.msra.mxu0 0.0
        %536 = vmatprep.subr.mxu0 0.0
        %537 = vmatpush1.msra.mxu0 0.0
        %538 = vmatprep.subr.mxu0 0.0
        %539 = vmatpush1.msra.mxu0 0.0
        %540 = vmatprep.subr.mxu0 0.0
        %541 = vmatpush1.msra.mxu0 0.0
        %542 = vmatprep.subr.mxu0 0.0
        %543 = vmatpush1.msra.mxu0 0.0
        %544 = vmatprep.subr.mxu0 0.0
        %545 = vmatpush1.msra.mxu0 0.0
        %546 = vmatprep.subr.mxu0 0.0
        %547 = vmatpush1.msra.mxu0 0.0
        %548 = vmatprep.subr.mxu0 0.0
        %549 = vmatpush1.msra.mxu0 0.0
        %550 = vmatprep.subr.mxu0 0.0
        %551 = vmatpush1.msra.mxu0 0.0
        %552 = vmatprep.subr.mxu0 0.0
        %553 = vmatpush1.msra.mxu0 0.0
        %554 = vmatprep.subr.mxu0 0.0
        %555 = vmatpush1.msra.mxu0 0.0
        %556 = vmatprep.subr.mxu0 0.0
        %557 = vmatpush1.msra.mxu0 0.0
        %558 = vmatprep.subr.mxu0 0.0
        %559 = vmatpush1.msra.mxu0 0.0
        %560 = vmatprep.subr.mxu0 0.0
        %561 = vmatpush1.msra.mxu0 0.0
        %562 = vmatprep.subr.mxu0 0.0
        %563 = vmatpush1.msra.mxu0 0.0
        %564 = vmatprep.subr.mxu0 0.0
        %565 = vmatpush1.msra.mxu0 0.0
        %566 = vmatprep.subr.mxu0 0.0
        %567 = vmatpush1.msra.mxu0 0.0
        %568 = vmatprep.subr.mxu0 0.0
        %569 = vmatpush1.msra.mxu0 0.0
        %570 = vmatprep.subr.mxu0 0.0
        %571 = vmatpush1.msra.mxu0 0.0
        %572 = vmatprep.subr.mxu0 0.0
        %573 = vmatpush1.msra.mxu0 0.0
        %574 = vmatprep.subr.mxu0 0.0
        %575 = vmatpush1.msra.mxu0 0.0
        %576 = vmatprep.subr.mxu0 0.0
        %577 = vmatpush1.msra.mxu0 0.0
        %578 = vmatprep.subr.mxu0 0.0
        %579 = vmatpush1.msra.mxu0 0.0
        %580 = vmatprep.subr.mxu0 0.0
        %581 = vmatpush1.msra.mxu0 0.0
        %582 = vmatprep.subr.mxu0 0.0
        %583 = vmatpush1.msra.mxu0 0.0
        %584 = vmatprep.subr.mxu0 0.0
        %585 = vmatpush1.msra.mxu0 0.0
        %586 = vmatprep.subr.mxu0 0.0
        %587 = vmatpush1.msra.mxu0 0.0
        %588 = vmatprep.mubr.f32.mxu0 0.0
        %589 = vmatmul.mubr.f32.gmra.mrb[0].mxu0 %v522
        %v590 = vpop.f32.mrb[0].mxu0
        %v591 = vadd.f32 0.0, %v590
        %v592 = vpop.f32.mrb[0].mxu0
        %593 = vdwg.mxu0
        %v594 = vsub.f32 %v515, %v591
        %v597 = vunpack.c.l.s4 1966171168
        %v598 = vunpack.c.0.s8 %v597
        %v599 = vlaneseq
        %v600 = vshrl.u32 %v599, 7
        %v601 = vsub.s32 %v598, %v600
        %v602 = vrot.slane %v594, %v601
        %v603 = vcombine.high %v602, %v602
        %v605 = vunpack.c.l.s4 1966171168
        %v606 = vunpack.c.0.s8 %v605
        %v607 = vlaneseq
        %v608 = vshrl.u32 %v607, 7
        %v609 = vsub.s32 %v606, %v608
        %v610 = vrot.slane %v602, %v609
        %v612 = vunpack.c.l.s4 1966171168
        %v613 = vunpack.c.0.s8 %v612
        %v614 = vlaneseq
        %v615 = vshrl.u32 %v614, 7
        %v616 = vsub.s32 %v613, %v615
        %v617 = vrot.slane %v603, %v616
        %vm620 = vcmask 253952
        %621 = vst.msk [vmem:[%s351] sm:$0x1] %vm620, %v610
        %622 = vst.msk [vmem:[%s351 + $0x8] sm:$0x1] %vm620, %v617
        %623 = vmatprep.subr.mxu0 0.0
        %624 = vmatpush1.msra.mxu0 %v376
        %625 = vmatprep.subr.mxu0 0.0
        %626 = vmatpush1.msra.mxu0 %v377
        %627 = vmatprep.subr.mxu0 0.0
        %628 = vmatpush1.msra.mxu0 %v378
        %629 = vmatprep.subr.mxu0 0.0
        %630 = vmatpush1.msra.mxu0 %v379
        %631 = vmatprep.subr.mxu0 0.0
        %632 = vmatpush1.msra.mxu0 0.0
        %633 = vmatprep.subr.mxu0 0.0
        %634 = vmatpush1.msra.mxu0 0.0
        %635 = vmatprep.subr.mxu0 0.0
        %636 = vmatpush1.msra.mxu0 0.0
        %637 = vmatprep.subr.mxu0 0.0
        %638 = vmatpush1.msra.mxu0 0.0
        %639 = vmatprep.subr.mxu0 0.0
        %640 = vmatpush1.msra.mxu0 0.0
        %641 = vmatprep.subr.mxu0 0.0
        %642 = vmatpush1.msra.mxu0 0.0
        %643 = vmatprep.subr.mxu0 0.0
        %644 = vmatpush1.msra.mxu0 0.0
        %645 = vmatprep.subr.mxu0 0.0
        %646 = vmatpush1.msra.mxu0 0.0
        %647 = vmatprep.subr.mxu0 0.0
        %648 = vmatpush1.msra.mxu0 0.0
        %649 = vmatprep.subr.mxu0 0.0
        %650 = vmatpush1.msra.mxu0 0.0
        %651 = vmatprep.subr.mxu0 0.0
        %652 = vmatpush1.msra.mxu0 0.0
        %653 = vmatprep.subr.mxu0 0.0
        %654 = vmatpush1.msra.mxu0 0.0
        %655 = vmatprep.subr.mxu0 0.0
        %656 = vmatpush1.msra.mxu0 0.0
        %657 = vmatprep.subr.mxu0 0.0
        %658 = vmatpush1.msra.mxu0 0.0
        %659 = vmatprep.subr.mxu0 0.0
        %660 = vmatpush1.msra.mxu0 0.0
        %661 = vmatprep.subr.mxu0 0.0
        %662 = vmatpush1.msra.mxu0 0.0
        %663 = vmatprep.subr.mxu0 0.0
        %664 = vmatpush1.msra.mxu0 0.0
        %665 = vmatprep.subr.mxu0 0.0
        %666 = vmatpush1.msra.mxu0 0.0
        %667 = vmatprep.subr.mxu0 0.0
        %668 = vmatpush1.msra.mxu0 0.0
        %669 = vmatprep.subr.mxu0 0.0
        %670 = vmatpush1.msra.mxu0 0.0
        %671 = vmatprep.subr.mxu0 0.0
        %672 = vmatpush1.msra.mxu0 0.0
        %673 = vmatprep.subr.mxu0 0.0
        %674 = vmatpush1.msra.mxu0 0.0
        %675 = vmatprep.subr.mxu0 0.0
        %676 = vmatpush1.msra.mxu0 0.0
        %677 = vmatprep.subr.mxu0 0.0
        %678 = vmatpush1.msra.mxu0 0.0
        %679 = vmatprep.subr.mxu0 0.0
        %680 = vmatpush1.msra.mxu0 0.0
        %681 = vmatprep.subr.mxu0 0.0
        %682 = vmatpush1.msra.mxu0 0.0
        %683 = vmatprep.subr.mxu0 0.0
        %684 = vmatpush1.msra.mxu0 0.0
        %685 = vmatprep.subr.mxu0 0.0
        %686 = vmatpush1.msra.mxu0 0.0
        %687 = vmatprep.mubr.f32.mxu0 0.0
        %688 = vmatmul.mubr.f32.gmra.mrb[0].mxu0 %v522
        %v689 = vpop.f32.mrb[0].mxu0
        %v690 = vadd.f32 0.0, %v689
        %v691 = vpop.f32.mrb[0].mxu0
        %692 = vdwg.mxu0
        %693 = vmatprep.subr.mxu0 0.0
        %694 = vmatpush1.msra.mxu0 %v408
        %695 = vmatprep.subr.mxu0 0.0
        %696 = vmatpush1.msra.mxu0 %v409
        %697 = vmatprep.subr.mxu0 0.0
        %698 = vmatpush1.msra.mxu0 %v410
        %699 = vmatprep.subr.mxu0 0.0
        %700 = vmatpush1.msra.mxu0 %v411
        %701 = vmatprep.subr.mxu0 0.0
        %702 = vmatpush1.msra.mxu0 0.0
        %703 = vmatprep.subr.mxu0 0.0
        %704 = vmatpush1.msra.mxu0 0.0
        %705 = vmatprep.subr.mxu0 0.0
        %706 = vmatpush1.msra.mxu0 0.0
        %707 = vmatprep.subr.mxu0 0.0
        %708 = vmatpush1.msra.mxu0 0.0
        %709 = vmatprep.subr.mxu0 0.0
        %710 = vmatpush1.msra.mxu0 0.0
        %711 = vmatprep.subr.mxu0 0.0
        %712 = vmatpush1.msra.mxu0 0.0
        %713 = vmatprep.subr.mxu0 0.0
        %714 = vmatpush1.msra.mxu0 0.0
        %715 = vmatprep.subr.mxu0 0.0
        %716 = vmatpush1.msra.mxu0 0.0
        %717 = vmatprep.subr.mxu0 0.0
        %718 = vmatpush1.msra.mxu0 0.0
        %719 = vmatprep.subr.mxu0 0.0
        %720 = vmatpush1.msra.mxu0 0.0
        %721 = vmatprep.subr.mxu0 0.0
        %722 = vmatpush1.msra.mxu0 0.0
        %723 = vmatprep.subr.mxu0 0.0
        %724 = vmatpush1.msra.mxu0 0.0
        %725 = vmatprep.subr.mxu0 0.0
        %726 = vmatpush1.msra.mxu0 0.0
        %727 = vmatprep.subr.mxu0 0.0
        %728 = vmatpush1.msra.mxu0 0.0
        %729 = vmatprep.subr.mxu0 0.0
        %730 = vmatpush1.msra.mxu0 0.0
        %731 = vmatprep.subr.mxu0 0.0
        %732 = vmatpush1.msra.mxu0 0.0
        %733 = vmatprep.subr.mxu0 0.0
        %734 = vmatpush1.msra.mxu0 0.0
        %735 = vmatprep.subr.mxu0 0.0
        %736 = vmatpush1.msra.mxu0 0.0
        %737 = vmatprep.subr.mxu0 0.0
        %738 = vmatpush1.msra.mxu0 0.0
        %739 = vmatprep.subr.mxu0 0.0
        %740 = vmatpush1.msra.mxu0 0.0
        %741 = vmatprep.subr.mxu0 0.0
        %742 = vmatpush1.msra.mxu0 0.0
        %743 = vmatprep.subr.mxu0 0.0
        %744 = vmatpush1.msra.mxu0 0.0
        %745 = vmatprep.subr.mxu0 0.0
        %746 = vmatpush1.msra.mxu0 0.0
        %747 = vmatprep.subr.mxu0 0.0
        %748 = vmatpush1.msra.mxu0 0.0
        %749 = vmatprep.subr.mxu0 0.0
        %750 = vmatpush1.msra.mxu0 0.0
        %751 = vmatprep.subr.mxu0 0.0
        %752 = vmatpush1.msra.mxu0 0.0
        %753 = vmatprep.subr.mxu0 0.0
        %754 = vmatpush1.msra.mxu0 0.0
        %755 = vmatprep.subr.mxu0 0.0
        %756 = vmatpush1.msra.mxu0 0.0
        %757 = vmatprep.mubr.f32.mxu0 0.0
        %758 = vmatmul.mubr.f32.gmra.mrb[0].mxu0 %v446
        %v759 = vpop.f32.mrb[0].mxu0
        %v760 = vadd.f32 %v690, %v759
        %v761 = vpop.f32.mrb[0].mxu0
        %762 = vdwg.mxu0
        %v765 = vunpack.c.l.s4 1966171168
        %v766 = vunpack.c.0.s8 %v765
        %v767 = vlaneseq
        %v768 = vshrl.u32 %v767, 7
        %v769 = vsub.s32 %v766, %v768
        %v770 = vrot.slane %v760, %v769
        %v771 = vcombine.high %v770, %v770
        %v773 = vunpack.c.l.s4 1966171168
        %v774 = vunpack.c.0.s8 %v773
        %v775 = vlaneseq
        %v776 = vshrl.u32 %v775, 7
        %v777 = vsub.s32 %v774, %v776
        %v778 = vrot.slane %v770, %v777
        %v780 = vunpack.c.l.s4 1966171168
        %v781 = vunpack.c.0.s8 %v780
        %v782 = vlaneseq
        %v783 = vshrl.u32 %v782, 7
        %v784 = vsub.s32 %v781, %v783
        %v785 = vrot.slane %v771, %v784
        %788 = vst.msk [vmem:[%s357] sm:$0x1] %vm620, %v778
        %789 = vst.msk [vmem:[%s357 + $0x8] sm:$0x1] %vm620, %v785
        %v790 = vrot.slane %v372, 1
        %v791 = vsel %vm443, %v373, %v790
        %v792 = vsel %vm445, %v791, 0
        %794 = vmatprep.subr.mxu0 0.0
        %795 = vmatpush1.msra.mxu0 %v380
        %796 = vmatprep.subr.mxu0 0.0
        %797 = vmatpush1.msra.mxu0 %v381
        %798 = vmatprep.subr.mxu0 0.0
        %799 = vmatpush1.msra.mxu0 %v382
        %800 = vmatprep.subr.mxu0 0.0
        %801 = vmatpush1.msra.mxu0 %v383
        %802 = vmatprep.subr.mxu0 0.0
        %803 = vmatpush1.msra.mxu0 0.0
        %804 = vmatprep.subr.mxu0 0.0
        %805 = vmatpush1.msra.mxu0 0.0
        %806 = vmatprep.subr.mxu0 0.0
        %807 = vmatpush1.msra.mxu0 0.0
        %808 = vmatprep.subr.mxu0 0.0
        %809 = vmatpush1.msra.mxu0 0.0
        %810 = vmatprep.subr.mxu0 0.0
        %811 = vmatpush1.msra.mxu0 0.0
        %812 = vmatprep.subr.mxu0 0.0
        %813 = vmatpush1.msra.mxu0 0.0
        %814 = vmatprep.subr.mxu0 0.0
        %815 = vmatpush1.msra.mxu0 0.0
        %816 = vmatprep.subr.mxu0 0.0
        %817 = vmatpush1.msra.mxu0 0.0
        %818 = vmatprep.subr.mxu0 0.0
        %819 = vmatpush1.msra.mxu0 0.0
        %820 = vmatprep.subr.mxu0 0.0
        %821 = vmatpush1.msra.mxu0 0.0
        %822 = vmatprep.subr.mxu0 0.0
        %823 = vmatpush1.msra.mxu0 0.0
        %824 = vmatprep.subr.mxu0 0.0
        %825 = vmatpush1.msra.mxu0 0.0
        %826 = vmatprep.subr.mxu0 0.0
        %827 = vmatpush1.msra.mxu0 0.0
        %828 = vmatprep.subr.mxu0 0.0
        %829 = vmatpush1.msra.mxu0 0.0
        %830 = vmatprep.subr.mxu0 0.0
        %831 = vmatpush1.msra.mxu0 0.0
        %832 = vmatprep.subr.mxu0 0.0
        %833 = vmatpush1.msra.mxu0 0.0
        %834 = vmatprep.subr.mxu0 0.0
        %835 = vmatpush1.msra.mxu0 0.0
        %836 = vmatprep.subr.mxu0 0.0
        %837 = vmatpush1.msra.mxu0 0.0
        %838 = vmatprep.subr.mxu0 0.0
        %839 = vmatpush1.msra.mxu0 0.0
        %840 = vmatprep.subr.mxu0 0.0
        %841 = vmatpush1.msra.mxu0 0.0
        %842 = vmatprep.subr.mxu0 0.0
        %843 = vmatpush1.msra.mxu0 0.0
        %844 = vmatprep.subr.mxu0 0.0
        %845 = vmatpush1.msra.mxu0 0.0
        %846 = vmatprep.subr.mxu0 0.0
        %847 = vmatpush1.msra.mxu0 0.0
        %848 = vmatprep.subr.mxu0 0.0
        %849 = vmatpush1.msra.mxu0 0.0
        %850 = vmatprep.subr.mxu0 0.0
        %851 = vmatpush1.msra.mxu0 0.0
        %852 = vmatprep.subr.mxu0 0.0
        %853 = vmatpush1.msra.mxu0 0.0
        %854 = vmatprep.subr.mxu0 0.0
        %855 = vmatpush1.msra.mxu0 0.0
        %856 = vmatprep.subr.mxu0 0.0
        %857 = vmatpush1.msra.mxu0 0.0
        %858 = vmatprep.mubr.f32.mxu0 0.0
        %859 = vmatmul.mubr.f32.gmra.mrb[0].mxu0 %v792
        %v860 = vpop.f32.mrb[0].mxu0
        %v861 = vadd.f32 0.0, %v860
        %v862 = vpop.f32.mrb[0].mxu0
        %863 = vdwg.mxu0
        %v864 = vrot.slane %v374, 1
        %v865 = vsel %vm443, %v375, %v864
        %v866 = vsel %vm445, %v865, 0
        %868 = vmatprep.subr.mxu0 0.0
        %869 = vmatpush1.msra.mxu0 %v412
        %870 = vmatprep.subr.mxu0 0.0
        %871 = vmatpush1.msra.mxu0 %v413
        %872 = vmatprep.subr.mxu0 0.0
        %873 = vmatpush1.msra.mxu0 %v414
        %874 = vmatprep.subr.mxu0 0.0
        %875 = vmatpush1.msra.mxu0 %v415
        %876 = vmatprep.subr.mxu0 0.0
        %877 = vmatpush1.msra.mxu0 0.0
        %878 = vmatprep.subr.mxu0 0.0
        %879 = vmatpush1.msra.mxu0 0.0
        %880 = vmatprep.subr.mxu0 0.0
        %881 = vmatpush1.msra.mxu0 0.0
        %882 = vmatprep.subr.mxu0 0.0
        %883 = vmatpush1.msra.mxu0 0.0
        %884 = vmatprep.subr.mxu0 0.0
        %885 = vmatpush1.msra.mxu0 0.0
        %886 = vmatprep.subr.mxu0 0.0
        %887 = vmatpush1.msra.mxu0 0.0
        %888 = vmatprep.subr.mxu0 0.0
        %889 = vmatpush1.msra.mxu0 0.0
        %890 = vmatprep.subr.mxu0 0.0
        %891 = vmatpush1.msra.mxu0 0.0
        %892 = vmatprep.subr.mxu0 0.0
        %893 = vmatpush1.msra.mxu0 0.0
        %894 = vmatprep.subr.mxu0 0.0
        %895 = vmatpush1.msra.mxu0 0.0
        %896 = vmatprep.subr.mxu0 0.0
        %897 = vmatpush1.msra.mxu0 0.0
        %898 = vmatprep.subr.mxu0 0.0
        %899 = vmatpush1.msra.mxu0 0.0
        %900 = vmatprep.subr.mxu0 0.0
        %901 = vmatpush1.msra.mxu0 0.0
        %902 = vmatprep.subr.mxu0 0.0
        %903 = vmatpush1.msra.mxu0 0.0
        %904 = vmatprep.subr.mxu0 0.0
        %905 = vmatpush1.msra.mxu0 0.0
        %906 = vmatprep.subr.mxu0 0.0
        %907 = vmatpush1.msra.mxu0 0.0
        %908 = vmatprep.subr.mxu0 0.0
        %909 = vmatpush1.msra.mxu0 0.0
        %910 = vmatprep.subr.mxu0 0.0
        %911 = vmatpush1.msra.mxu0 0.0
        %912 = vmatprep.subr.mxu0 0.0
        %913 = vmatpush1.msra.mxu0 0.0
        %914 = vmatprep.subr.mxu0 0.0
        %915 = vmatpush1.msra.mxu0 0.0
        %916 = vmatprep.subr.mxu0 0.0
        %917 = vmatpush1.msra.mxu0 0.0
        %918 = vmatprep.subr.mxu0 0.0
        %919 = vmatpush1.msra.mxu0 0.0
        %920 = vmatprep.subr.mxu0 0.0
        %921 = vmatpush1.msra.mxu0 0.0
        %922 = vmatprep.subr.mxu0 0.0
        %923 = vmatpush1.msra.mxu0 0.0
        %924 = vmatprep.subr.mxu0 0.0
        %925 = vmatpush1.msra.mxu0 0.0
        %926 = vmatprep.subr.mxu0 0.0
        %927 = vmatpush1.msra.mxu0 0.0
        %928 = vmatprep.subr.mxu0 0.0
        %929 = vmatpush1.msra.mxu0 0.0
        %930 = vmatprep.subr.mxu0 0.0
        %931 = vmatpush1.msra.mxu0 0.0
        %932 = vmatprep.mubr.f32.mxu0 0.0
        %933 = vmatmul.mubr.f32.gmra.mrb[0].mxu0 %v866
        %v934 = vpop.f32.mrb[0].mxu0
        %v935 = vadd.f32 0.0, %v934
        %v936 = vpop.f32.mrb[0].mxu0
        %937 = vdwg.mxu0
        %v938 = vsub.f32 %v861, %v935
        %v941 = vunpack.c.l.s4 1966171168
        %v942 = vunpack.c.0.s8 %v941
        %v943 = vlaneseq
        %v944 = vshrl.u32 %v943, 7
        %v945 = vsub.s32 %v942, %v944
        %v946 = vrot.slane %v938, %v945
        %v947 = vcombine.high %v946, %v946
        %v949 = vunpack.c.l.s4 1966171168
        %v950 = vunpack.c.0.s8 %v949
        %v951 = vlaneseq
        %v952 = vshrl.u32 %v951, 7
        %v953 = vsub.s32 %v950, %v952
        %v954 = vrot.slane %v946, %v953
        %v956 = vunpack.c.l.s4 1966171168
        %v957 = vunpack.c.0.s8 %v956
        %v958 = vlaneseq
        %v959 = vshrl.u32 %v958, 7
        %v960 = vsub.s32 %v957, %v959
        %v961 = vrot.slane %v947, %v960
        %964 = vst.msk [vmem:[%s351 + $0x1] sm:$0x1] %vm620, %v954
        %965 = vst.msk [vmem:[%s351 + $0x9] sm:$0x1] %vm620, %v961
        %966 = vmatprep.subr.mxu0 0.0
        %967 = vmatpush1.msra.mxu0 %v380
        %968 = vmatprep.subr.mxu0 0.0
        %969 = vmatpush1.msra.mxu0 %v381
        %970 = vmatprep.subr.mxu0 0.0
        %971 = vmatpush1.msra.mxu0 %v382
        %972 = vmatprep.subr.mxu0 0.0
        %973 = vmatpush1.msra.mxu0 %v383
        %974 = vmatprep.subr.mxu0 0.0
        %975 = vmatpush1.msra.mxu0 0.0
        %976 = vmatprep.subr.mxu0 0.0
        %977 = vmatpush1.msra.mxu0 0.0
        %978 = vmatprep.subr.mxu0 0.0
        %979 = vmatpush1.msra.mxu0 0.0
        %980 = vmatprep.subr.mxu0 0.0
        %981 = vmatpush1.msra.mxu0 0.0
        %982 = vmatprep.subr.mxu0 0.0
        %983 = vmatpush1.msra.mxu0 0.0
        %984 = vmatprep.subr.mxu0 0.0
        %985 = vmatpush1.msra.mxu0 0.0
        %986 = vmatprep.subr.mxu0 0.0
        %987 = vmatpush1.msra.mxu0 0.0
        %988 = vmatprep.subr.mxu0 0.0
        %989 = vmatpush1.msra.mxu0 0.0
        %990 = vmatprep.subr.mxu0 0.0
        %991 = vmatpush1.msra.mxu0 0.0
        %992 = vmatprep.subr.mxu0 0.0
        %993 = vmatpush1.msra.mxu0 0.0
        %994 = vmatprep.subr.mxu0 0.0
        %995 = vmatpush1.msra.mxu0 0.0
        %996 = vmatprep.subr.mxu0 0.0
        %997 = vmatpush1.msra.mxu0 0.0
        %998 = vmatprep.subr.mxu0 0.0
        %999 = vmatpush1.msra.mxu0 0.0
        %1000 = vmatprep.subr.mxu0 0.0
        %1001 = vmatpush1.msra.mxu0 0.0
        %1002 = vmatprep.subr.mxu0 0.0
        %1003 = vmatpush1.msra.mxu0 0.0
        %1004 = vmatprep.subr.mxu0 0.0
        %1005 = vmatpush1.msra.mxu0 0.0
        %1006 = vmatprep.subr.mxu0 0.0
        %1007 = vmatpush1.msra.mxu0 0.0
        %1008 = vmatprep.subr.mxu0 0.0
        %1009 = vmatpush1.msra.mxu0 0.0
        %1010 = vmatprep.subr.mxu0 0.0
        %1011 = vmatpush1.msra.mxu0 0.0
        %1012 = vmatprep.subr.mxu0 0.0
        %1013 = vmatpush1.msra.mxu0 0.0
        %1014 = vmatprep.subr.mxu0 0.0
        %1015 = vmatpush1.msra.mxu0 0.0
        %1016 = vmatprep.subr.mxu0 0.0
        %1017 = vmatpush1.msra.mxu0 0.0
        %1018 = vmatprep.subr.mxu0 0.0
        %1019 = vmatpush1.msra.mxu0 0.0
        %1020 = vmatprep.subr.mxu0 0.0
        %1021 = vmatpush1.msra.mxu0 0.0
        %1022 = vmatprep.subr.mxu0 0.0
        %1023 = vmatpush1.msra.mxu0 0.0
        %1024 = vmatprep.subr.mxu0 0.0
        %1025 = vmatpush1.msra.mxu0 0.0
        %1026 = vmatprep.subr.mxu0 0.0
        %1027 = vmatpush1.msra.mxu0 0.0
        %1028 = vmatprep.subr.mxu0 0.0
        %1029 = vmatpush1.msra.mxu0 0.0
        %1030 = vmatprep.mubr.f32.mxu0 0.0
        %1031 = vmatmul.mubr.f32.gmra.mrb[0].mxu0 %v866
        %v1032 = vpop.f32.mrb[0].mxu0
        %v1033 = vadd.f32 0.0, %v1032
        %v1034 = vpop.f32.mrb[0].mxu0
        %1035 = vdwg.mxu0
        %1036 = vmatprep.subr.mxu0 0.0
        %1037 = vmatpush1.msra.mxu0 %v412
        %1038 = vmatprep.subr.mxu0 0.0
        %1039 = vmatpush1.msra.mxu0 %v413
        %1040 = vmatprep.subr.mxu0 0.0
        %1041 = vmatpush1.msra.mxu0 %v414
        %1042 = vmatprep.subr.mxu0 0.0
        %1043 = vmatpush1.msra.mxu0 %v415
        %1044 = vmatprep.subr.mxu0 0.0
        %1045 = vmatpush1.msra.mxu0 0.0
        %1046 = vmatprep.subr.mxu0 0.0
        %1047 = vmatpush1.msra.mxu0 0.0
        %1048 = vmatprep.subr.mxu0 0.0
        %1049 = vmatpush1.msra.mxu0 0.0
        %1050 = vmatprep.subr.mxu0 0.0
        %1051 = vmatpush1.msra.mxu0 0.0
        %1052 = vmatprep.subr.mxu0 0.0
        %1053 = vmatpush1.msra.mxu0 0.0
        %1054 = vmatprep.subr.mxu0 0.0
        %1055 = vmatpush1.msra.mxu0 0.0
        %1056 = vmatprep.subr.mxu0 0.0
        %1057 = vmatpush1.msra.mxu0 0.0
        %1058 = vmatprep.subr.mxu0 0.0
        %1059 = vmatpush1.msra.mxu0 0.0
        %1060 = vmatprep.subr.mxu0 0.0
        %1061 = vmatpush1.msra.mxu0 0.0
        %1062 = vmatprep.subr.mxu0 0.0
        %1063 = vmatpush1.msra.mxu0 0.0
        %1064 = vmatprep.subr.mxu0 0.0
        %1065 = vmatpush1.msra.mxu0 0.0
        %1066 = vmatprep.subr.mxu0 0.0
        %1067 = vmatpush1.msra.mxu0 0.0
        %1068 = vmatprep.subr.mxu0 0.0
        %1069 = vmatpush1.msra.mxu0 0.0
        %1070 = vmatprep.subr.mxu0 0.0
        %1071 = vmatpush1.msra.mxu0 0.0
        %1072 = vmatprep.subr.mxu0 0.0
        %1073 = vmatpush1.msra.mxu0 0.0
        %1074 = vmatprep.subr.mxu0 0.0
        %1075 = vmatpush1.msra.mxu0 0.0
        %1076 = vmatprep.subr.mxu0 0.0
        %1077 = vmatpush1.msra.mxu0 0.0
        %1078 = vmatprep.subr.mxu0 0.0
        %1079 = vmatpush1.msra.mxu0 0.0
        %1080 = vmatprep.subr.mxu0 0.0
        %1081 = vmatpush1.msra.mxu0 0.0
        %1082 = vmatprep.subr.mxu0 0.0
        %1083 = vmatpush1.msra.mxu0 0.0
        %1084 = vmatprep.subr.mxu0 0.0
        %1085 = vmatpush1.msra.mxu0 0.0
        %1086 = vmatprep.subr.mxu0 0.0
        %1087 = vmatpush1.msra.mxu0 0.0
        %1088 = vmatprep.subr.mxu0 0.0
        %1089 = vmatpush1.msra.mxu0 0.0
        %1090 = vmatprep.subr.mxu0 0.0
        %1091 = vmatpush1.msra.mxu0 0.0
        %1092 = vmatprep.subr.mxu0 0.0
        %1093 = vmatpush1.msra.mxu0 0.0
        %1094 = vmatprep.subr.mxu0 0.0
        %1095 = vmatpush1.msra.mxu0 0.0
        %1096 = vmatprep.subr.mxu0 0.0
        %1097 = vmatpush1.msra.mxu0 0.0
        %1098 = vmatprep.subr.mxu0 0.0
        %1099 = vmatpush1.msra.mxu0 0.0
        %1100 = vmatprep.mubr.f32.mxu0 0.0
        %1101 = vmatmul.mubr.f32.gmra.mrb[0].mxu0 %v792
        %v1102 = vpop.f32.mrb[0].mxu0
        %v1103 = vadd.f32 %v1033, %v1102
        %v1104 = vpop.f32.mrb[0].mxu0
        %1105 = vdwg.mxu0
        %v1108 = vunpack.c.l.s4 1966171168
        %v1109 = vunpack.c.0.s8 %v1108
        %v1110 = vlaneseq
        %v1111 = vshrl.u32 %v1110, 7
        %v1112 = vsub.s32 %v1109, %v1111
        %v1113 = vrot.slane %v1103, %v1112
        %v1114 = vcombine.high %v1113, %v1113
        %v1116 = vunpack.c.l.s4 1966171168
        %v1117 = vunpack.c.0.s8 %v1116
        %v1118 = vlaneseq
        %v1119 = vshrl.u32 %v1118, 7
        %v1120 = vsub.s32 %v1117, %v1119
        %v1121 = vrot.slane %v1113, %v1120
        %v1123 = vunpack.c.l.s4 1966171168
        %v1124 = vunpack.c.0.s8 %v1123
        %v1125 = vlaneseq
        %v1126 = vshrl.u32 %v1125, 7
        %v1127 = vsub.s32 %v1124, %v1126
        %v1128 = vrot.slane %v1114, %v1127
        %1131 = vst.msk [vmem:[%s357 + $0x1] sm:$0x1] %vm620, %v1121
        %1132 = vst.msk [vmem:[%s357 + $0x9] sm:$0x1] %vm620, %v1128
        %v1133 = vrot.slane %v372, 2
        %v1134 = vrot.slane %v373, 1
        %v1135 = vsel %vm443, %v1134, %v1133
        %v1136 = vsel %vm445, %v1135, 0
        %1138 = vmatprep.subr.mxu0 0.0
        %1139 = vmatpush1.msra.mxu0 %v384
        %1140 = vmatprep.subr.mxu0 0.0
        %1141 = vmatpush1.msra.mxu0 %v385
        %1142 = vmatprep.subr.mxu0 0.0
        %1143 = vmatpush1.msra.mxu0 %v386
        %1144 = vmatprep.subr.mxu0 0.0
        %1145 = vmatpush1.msra.mxu0 %v387
        %1146 = vmatprep.subr.mxu0 0.0
        %1147 = vmatpush1.msra.mxu0 0.0
        %1148 = vmatprep.subr.mxu0 0.0
        %1149 = vmatpush1.msra.mxu0 0.0
        %1150 = vmatprep.subr.mxu0 0.0
        %1151 = vmatpush1.msra.mxu0 0.0
        %1152 = vmatprep.subr.mxu0 0.0
        %1153 = vmatpush1.msra.mxu0 0.0
        %1154 = vmatprep.subr.mxu0 0.0
        %1155 = vmatpush1.msra.mxu0 0.0
        %1156 = vmatprep.subr.mxu0 0.0
        %1157 = vmatpush1.msra.mxu0 0.0
        %1158 = vmatprep.subr.mxu0 0.0
        %1159 = vmatpush1.msra.mxu0 0.0
        %1160 = vmatprep.subr.mxu0 0.0
        %1161 = vmatpush1.msra.mxu0 0.0
        %1162 = vmatprep.subr.mxu0 0.0
        %1163 = vmatpush1.msra.mxu0 0.0
        %1164 = vmatprep.subr.mxu0 0.0
        %1165 = vmatpush1.msra.mxu0 0.0
        %1166 = vmatprep.subr.mxu0 0.0
        %1167 = vmatpush1.msra.mxu0 0.0
        %1168 = vmatprep.subr.mxu0 0.0
        %1169 = vmatpush1.msra.mxu0 0.0
        %1170 = vmatprep.subr.mxu0 0.0
        %1171 = vmatpush1.msra.mxu0 0.0
        %1172 = vmatprep.subr.mxu0 0.0
        %1173 = vmatpush1.msra.mxu0 0.0
        %1174 = vmatprep.subr.mxu0 0.0
        %1175 = vmatpush1.msra.mxu0 0.0
        %1176 = vmatprep.subr.mxu0 0.0
        %1177 = vmatpush1.msra.mxu0 0.0
        %1178 = vmatprep.subr.mxu0 0.0
        %1179 = vmatpush1.msra.mxu0 0.0
        %1180 = vmatprep.subr.mxu0 0.0
        %1181 = vmatpush1.msra.mxu0 0.0
        %1182 = vmatprep.subr.mxu0 0.0
        %1183 = vmatpush1.msra.mxu0 0.0
        %1184 = vmatprep.subr.mxu0 0.0
        %1185 = vmatpush1.msra.mxu0 0.0
        %1186 = vmatprep.subr.mxu0 0.0
        %1187 = vmatpush1.msra.mxu0 0.0
        %1188 = vmatprep.subr.mxu0 0.0
        %1189 = vmatpush1.msra.mxu0 0.0
        %1190 = vmatprep.subr.mxu0 0.0
        %1191 = vmatpush1.msra.mxu0 0.0
        %1192 = vmatprep.subr.mxu0 0.0
        %1193 = vmatpush1.msra.mxu0 0.0
        %1194 = vmatprep.subr.mxu0 0.0
        %1195 = vmatpush1.msra.mxu0 0.0
        %1196 = vmatprep.subr.mxu0 0.0
        %1197 = vmatpush1.msra.mxu0 0.0
        %1198 = vmatprep.subr.mxu0 0.0
        %1199 = vmatpush1.msra.mxu0 0.0
        %1200 = vmatprep.subr.mxu0 0.0
        %1201 = vmatpush1.msra.mxu0 0.0
        %1202 = vmatprep.mubr.f32.mxu0 0.0
        %1203 = vmatmul.mubr.f32.gmra.mrb[0].mxu0 %v1136
        %v1204 = vpop.f32.mrb[0].mxu0
        %v1205 = vadd.f32 0.0, %v1204
        %v1206 = vpop.f32.mrb[0].mxu0
        %1207 = vdwg.mxu0
        %v1208 = vrot.slane %v374, 2
        %v1209 = vrot.slane %v375, 1
        %v1210 = vsel %vm443, %v1209, %v1208
        %v1211 = vsel %vm445, %v1210, 0
        %1213 = vmatprep.subr.mxu0 0.0
        %1214 = vmatpush1.msra.mxu0 %v416
        %1215 = vmatprep.subr.mxu0 0.0
        %1216 = vmatpush1.msra.mxu0 %v417
        %1217 = vmatprep.subr.mxu0 0.0
        %1218 = vmatpush1.msra.mxu0 %v418
        %1219 = vmatprep.subr.mxu0 0.0
        %1220 = vmatpush1.msra.mxu0 %v419
        %1221 = vmatprep.subr.mxu0 0.0
        %1222 = vmatpush1.msra.mxu0 0.0
        %1223 = vmatprep.subr.mxu0 0.0
        %1224 = vmatpush1.msra.mxu0 0.0
        %1225 = vmatprep.subr.mxu0 0.0
        %1226 = vmatpush1.msra.mxu0 0.0
        %1227 = vmatprep.subr.mxu0 0.0
        %1228 = vmatpush1.msra.mxu0 0.0
        %1229 = vmatprep.subr.mxu0 0.0
        %1230 = vmatpush1.msra.mxu0 0.0
        %1231 = vmatprep.subr.mxu0 0.0
        %1232 = vmatpush1.msra.mxu0 0.0
        %1233 = vmatprep.subr.mxu0 0.0
        %1234 = vmatpush1.msra.mxu0 0.0
        %1235 = vmatprep.subr.mxu0 0.0
        %1236 = vmatpush1.msra.mxu0 0.0
        %1237 = vmatprep.subr.mxu0 0.0
        %1238 = vmatpush1.msra.mxu0 0.0
        %1239 = vmatprep.subr.mxu0 0.0
        %1240 = vmatpush1.msra.mxu0 0.0
        %1241 = vmatprep.subr.mxu0 0.0
        %1242 = vmatpush1.msra.mxu0 0.0
        %1243 = vmatprep.subr.mxu0 0.0
        %1244 = vmatpush1.msra.mxu0 0.0
        %1245 = vmatprep.subr.mxu0 0.0
        %1246 = vmatpush1.msra.mxu0 0.0
        %1247 = vmatprep.subr.mxu0 0.0
        %1248 = vmatpush1.msra.mxu0 0.0
        %1249 = vmatprep.subr.mxu0 0.0
        %1250 = vmatpush1.msra.mxu0 0.0
        %1251 = vmatprep.subr.mxu0 0.0
        %1252 = vmatpush1.msra.mxu0 0.0
        %1253 = vmatprep.subr.mxu0 0.0
        %1254 = vmatpush1.msra.mxu0 0.0
        %1255 = vmatprep.subr.mxu0 0.0
        %1256 = vmatpush1.msra.mxu0 0.0
        %1257 = vmatprep.subr.mxu0 0.0
        %1258 = vmatpush1.msra.mxu0 0.0
        %1259 = vmatprep.subr.mxu0 0.0
        %1260 = vmatpush1.msra.mxu0 0.0
        %1261 = vmatprep.subr.mxu0 0.0
        %1262 = vmatpush1.msra.mxu0 0.0
        %1263 = vmatprep.subr.mxu0 0.0
        %1264 = vmatpush1.msra.mxu0 0.0
        %1265 = vmatprep.subr.mxu0 0.0
        %1266 = vmatpush1.msra.mxu0 0.0
        %1267 = vmatprep.subr.mxu0 0.0
        %1268 = vmatpush1.msra.mxu0 0.0
        %1269 = vmatprep.subr.mxu0 0.0
        %1270 = vmatpush1.msra.mxu0 0.0
        %1271 = vmatprep.subr.mxu0 0.0
        %1272 = vmatpush1.msra.mxu0 0.0
        %1273 = vmatprep.subr.mxu0 0.0
        %1274 = vmatpush1.msra.mxu0 0.0
        %1275 = vmatprep.subr.mxu0 0.0
        %1276 = vmatpush1.msra.mxu0 0.0
        %1277 = vmatprep.mubr.f32.mxu0 0.0
        %1278 = vmatmul.mubr.f32.gmra.mrb[0].mxu0 %v1211
        %v1279 = vpop.f32.mrb[0].mxu0
        %v1280 = vadd.f32 0.0, %v1279
        %v1281 = vpop.f32.mrb[0].mxu0
        %1282 = vdwg.mxu0
        %v1283 = vsub.f32 %v1205, %v1280
        %v1286 = vunpack.c.l.s4 1966171168
        %v1287 = vunpack.c.0.s8 %v1286
        %v1288 = vlaneseq
        %v1289 = vshrl.u32 %v1288, 7
        %v1290 = vsub.s32 %v1287, %v1289
        %v1291 = vrot.slane %v1283, %v1290
        %v1292 = vcombine.high %v1291, %v1291
        %v1294 = vunpack.c.l.s4 1966171168
        %v1295 = vunpack.c.0.s8 %v1294
        %v1296 = vlaneseq
        %v1297 = vshrl.u32 %v1296, 7
        %v1298 = vsub.s32 %v1295, %v1297
        %v1299 = vrot.slane %v1291, %v1298
        %v1301 = vunpack.c.l.s4 1966171168
        %v1302 = vunpack.c.0.s8 %v1301
        %v1303 = vlaneseq
        %v1304 = vshrl.u32 %v1303, 7
        %v1305 = vsub.s32 %v1302, %v1304
        %v1306 = vrot.slane %v1292, %v1305
        %1309 = vst.msk [vmem:[%s351 + $0x2] sm:$0x1] %vm620, %v1299
        %1310 = vst.msk [vmem:[%s351 + $0xa] sm:$0x1] %vm620, %v1306
        %1311 = vmatprep.subr.mxu0 0.0
        %1312 = vmatpush1.msra.mxu0 %v384
        %1313 = vmatprep.subr.mxu0 0.0
        %1314 = vmatpush1.msra.mxu0 %v385
        %1315 = vmatprep.subr.mxu0 0.0
        %1316 = vmatpush1.msra.mxu0 %v386
        %1317 = vmatprep.subr.mxu0 0.0
        %1318 = vmatpush1.msra.mxu0 %v387
        %1319 = vmatprep.subr.mxu0 0.0
        %1320 = vmatpush1.msra.mxu0 0.0
        %1321 = vmatprep.subr.mxu0 0.0
        %1322 = vmatpush1.msra.mxu0 0.0
        %1323 = vmatprep.subr.mxu0 0.0
        %1324 = vmatpush1.msra.mxu0 0.0
        %1325 = vmatprep.subr.mxu0 0.0
        %1326 = vmatpush1.msra.mxu0 0.0
        %1327 = vmatprep.subr.mxu0 0.0
        %1328 = vmatpush1.msra.mxu0 0.0
        %1329 = vmatprep.subr.mxu0 0.0
        %1330 = vmatpush1.msra.mxu0 0.0
        %1331 = vmatprep.subr.mxu0 0.0
        %1332 = vmatpush1.msra.mxu0 0.0
        %1333 = vmatprep.subr.mxu0 0.0
        %1334 = vmatpush1.msra.mxu0 0.0
        %1335 = vmatprep.subr.mxu0 0.0
        %1336 = vmatpush1.msra.mxu0 0.0
        %1337 = vmatprep.subr.mxu0 0.0
        %1338 = vmatpush1.msra.mxu0 0.0
        %1339 = vmatprep.subr.mxu0 0.0
        %1340 = vmatpush1.msra.mxu0 0.0
        %1341 = vmatprep.subr.mxu0 0.0
        %1342 = vmatpush1.msra.mxu0 0.0
        %1343 = vmatprep.subr.mxu0 0.0
        %1344 = vmatpush1.msra.mxu0 0.0
        %1345 = vmatprep.subr.mxu0 0.0
        %1346 = vmatpush1.msra.mxu0 0.0
        %1347 = vmatprep.subr.mxu0 0.0
        %1348 = vmatpush1.msra.mxu0 0.0
        %1349 = vmatprep.subr.mxu0 0.0
        %1350 = vmatpush1.msra.mxu0 0.0
        %1351 = vmatprep.subr.mxu0 0.0
        %1352 = vmatpush1.msra.mxu0 0.0
        %1353 = vmatprep.subr.mxu0 0.0
        %1354 = vmatpush1.msra.mxu0 0.0
        %1355 = vmatprep.subr.mxu0 0.0
        %1356 = vmatpush1.msra.mxu0 0.0
        %1357 = vmatprep.subr.mxu0 0.0
        %1358 = vmatpush1.msra.mxu0 0.0
        %1359 = vmatprep.subr.mxu0 0.0
        %1360 = vmatpush1.msra.mxu0 0.0
        %1361 = vmatprep.subr.mxu0 0.0
        %1362 = vmatpush1.msra.mxu0 0.0
        %1363 = vmatprep.subr.mxu0 0.0
        %1364 = vmatpush1.msra.mxu0 0.0
        %1365 = vmatprep.subr.mxu0 0.0
        %1366 = vmatpush1.msra.mxu0 0.0
        %1367 = vmatprep.subr.mxu0 0.0
        %1368 = vmatpush1.msra.mxu0 0.0
        %1369 = vmatprep.subr.mxu0 0.0
        %1370 = vmatpush1.msra.mxu0 0.0
        %1371 = vmatprep.subr.mxu0 0.0
        %1372 = vmatpush1.msra.mxu0 0.0
        %1373 = vmatprep.subr.mxu0 0.0
        %1374 = vmatpush1.msra.mxu0 0.0
        %1375 = vmatprep.mubr.f32.mxu0 0.0
        %1376 = vmatmul.mubr.f32.gmra.mrb[0].mxu0 %v1211
        %v1377 = vpop.f32.mrb[0].mxu0
        %v1378 = vadd.f32 0.0, %v1377
        %v1379 = vpop.f32.mrb[0].mxu0
        %1380 = vdwg.mxu0
        %1381 = vmatprep.subr.mxu0 0.0
        %1382 = vmatpush1.msra.mxu0 %v416
        %1383 = vmatprep.subr.mxu0 0.0
        %1384 = vmatpush1.msra.mxu0 %v417
        %1385 = vmatprep.subr.mxu0 0.0
        %1386 = vmatpush1.msra.mxu0 %v418
        %1387 = vmatprep.subr.mxu0 0.0
        %1388 = vmatpush1.msra.mxu0 %v419
        %1389 = vmatprep.subr.mxu0 0.0
        %1390 = vmatpush1.msra.mxu0 0.0
        %1391 = vmatprep.subr.mxu0 0.0
        %1392 = vmatpush1.msra.mxu0 0.0
        %1393 = vmatprep.subr.mxu0 0.0
        %1394 = vmatpush1.msra.mxu0 0.0
        %1395 = vmatprep.subr.mxu0 0.0
        %1396 = vmatpush1.msra.mxu0 0.0
        %1397 = vmatprep.subr.mxu0 0.0
        %1398 = vmatpush1.msra.mxu0 0.0
        %1399 = vmatprep.subr.mxu0 0.0
        %1400 = vmatpush1.msra.mxu0 0.0
        %1401 = vmatprep.subr.mxu0 0.0
        %1402 = vmatpush1.msra.mxu0 0.0
        %1403 = vmatprep.subr.mxu0 0.0
        %1404 = vmatpush1.msra.mxu0 0.0
        %1405 = vmatprep.subr.mxu0 0.0
        %1406 = vmatpush1.msra.mxu0 0.0
        %1407 = vmatprep.subr.mxu0 0.0
        %1408 = vmatpush1.msra.mxu0 0.0
        %1409 = vmatprep.subr.mxu0 0.0
        %1410 = vmatpush1.msra.mxu0 0.0
        %1411 = vmatprep.subr.mxu0 0.0
        %1412 = vmatpush1.msra.mxu0 0.0
        %1413 = vmatprep.subr.mxu0 0.0
        %1414 = vmatpush1.msra.mxu0 0.0
        %1415 = vmatprep.subr.mxu0 0.0
        %1416 = vmatpush1.msra.mxu0 0.0
        %1417 = vmatprep.subr.mxu0 0.0
        %1418 = vmatpush1.msra.mxu0 0.0
        %1419 = vmatprep.subr.mxu0 0.0
        %1420 = vmatpush1.msra.mxu0 0.0
        %1421 = vmatprep.subr.mxu0 0.0
        %1422 = vmatpush1.msra.mxu0 0.0
        %1423 = vmatprep.subr.mxu0 0.0
        %1424 = vmatpush1.msra.mxu0 0.0
        %1425 = vmatprep.subr.mxu0 0.0
        %1426 = vmatpush1.msra.mxu0 0.0
        %1427 = vmatprep.subr.mxu0 0.0
        %1428 = vmatpush1.msra.mxu0 0.0
        %1429 = vmatprep.subr.mxu0 0.0
        %1430 = vmatpush1.msra.mxu0 0.0
        %1431 = vmatprep.subr.mxu0 0.0
        %1432 = vmatpush1.msra.mxu0 0.0
        %1433 = vmatprep.subr.mxu0 0.0
        %1434 = vmatpush1.msra.mxu0 0.0
        %1435 = vmatprep.subr.mxu0 0.0
        %1436 = vmatpush1.msra.mxu0 0.0
        %1437 = vmatprep.subr.mxu0 0.0
        %1438 = vmatpush1.msra.mxu0 0.0
        %1439 = vmatprep.subr.mxu0 0.0
        %1440 = vmatpush1.msra.mxu0 0.0
        %1441 = vmatprep.subr.mxu0 0.0
        %1442 = vmatpush1.msra.mxu0 0.0
        %1443 = vmatprep.subr.mxu0 0.0
        %1444 = vmatpush1.msra.mxu0 0.0
        %1445 = vmatprep.mubr.f32.mxu0 0.0
        %1446 = vmatmul.mubr.f32.gmra.mrb[0].mxu0 %v1136
        %v1447 = vpop.f32.mrb[0].mxu0
        %v1448 = vadd.f32 %v1378, %v1447
        %v1449 = vpop.f32.mrb[0].mxu0
        %1450 = vdwg.mxu0
        %v1453 = vunpack.c.l.s4 1966171168
        %v1454 = vunpack.c.0.s8 %v1453
        %v1455 = vlaneseq
        %v1456 = vshrl.u32 %v1455, 7
        %v1457 = vsub.s32 %v1454, %v1456
        %v1458 = vrot.slane %v1448, %v1457
        %v1459 = vcombine.high %v1458, %v1458
        %v1461 = vunpack.c.l.s4 1966171168
        %v1462 = vunpack.c.0.s8 %v1461
        %v1463 = vlaneseq
        %v1464 = vshrl.u32 %v1463, 7
        %v1465 = vsub.s32 %v1462, %v1464
        %v1466 = vrot.slane %v1458, %v1465
        %v1468 = vunpack.c.l.s4 1966171168
        %v1469 = vunpack.c.0.s8 %v1468
        %v1470 = vlaneseq
        %v1471 = vshrl.u32 %v1470, 7
        %v1472 = vsub.s32 %v1469, %v1471
        %v1473 = vrot.slane %v1459, %v1472
        %1476 = vst.msk [vmem:[%s357 + $0x2] sm:$0x1] %vm620, %v1466
        %1477 = vst.msk [vmem:[%s357 + $0xa] sm:$0x1] %vm620, %v1473
        %v1478 = vrot.slane %v372, 3
        %v1479 = vrot.slane %v373, 2
        %v1480 = vsel %vm443, %v1479, %v1478
        %v1481 = vsel %vm445, %v1480, 0
        %1483 = vmatprep.subr.mxu0 0.0
        %1484 = vmatpush1.msra.mxu0 %v388
        %1485 = vmatprep.subr.mxu0 0.0
        %1486 = vmatpush1.msra.mxu0 %v389
        %1487 = vmatprep.subr.mxu0 0.0
        %1488 = vmatpush1.msra.mxu0 %v390
        %1489 = vmatprep.subr.mxu0 0.0
        %1490 = vmatpush1.msra.mxu0 %v391
        %1491 = vmatprep.subr.mxu0 0.0
        %1492 = vmatpush1.msra.mxu0 0.0
        %1493 = vmatprep.subr.mxu0 0.0
        %1494 = vmatpush1.msra.mxu0 0.0
        %1495 = vmatprep.subr.mxu0 0.0
        %1496 = vmatpush1.msra.mxu0 0.0
        %1497 = vmatprep.subr.mxu0 0.0
        %1498 = vmatpush1.msra.mxu0 0.0
        %1499 = vmatprep.subr.mxu0 0.0
        %1500 = vmatpush1.msra.mxu0 0.0
        %1501 = vmatprep.subr.mxu0 0.0
        %1502 = vmatpush1.msra.mxu0 0.0
        %1503 = vmatprep.subr.mxu0 0.0
        %1504 = vmatpush1.msra.mxu0 0.0
        %1505 = vmatprep.subr.mxu0 0.0
        %1506 = vmatpush1.msra.mxu0 0.0
        %1507 = vmatprep.subr.mxu0 0.0
        %1508 = vmatpush1.msra.mxu0 0.0
        %1509 = vmatprep.subr.mxu0 0.0
        %1510 = vmatpush1.msra.mxu0 0.0
        %1511 = vmatprep.subr.mxu0 0.0
        %1512 = vmatpush1.msra.mxu0 0.0
        %1513 = vmatprep.subr.mxu0 0.0
        %1514 = vmatpush1.msra.mxu0 0.0
        %1515 = vmatprep.subr.mxu0 0.0
        %1516 = vmatpush1.msra.mxu0 0.0
        %1517 = vmatprep.subr.mxu0 0.0
        %1518 = vmatpush1.msra.mxu0 0.0
        %1519 = vmatprep.subr.mxu0 0.0
        %1520 = vmatpush1.msra.mxu0 0.0
        %1521 = vmatprep.subr.mxu0 0.0
        %1522 = vmatpush1.msra.mxu0 0.0
        %1523 = vmatprep.subr.mxu0 0.0
        %1524 = vmatpush1.msra.mxu0 0.0
        %1525 = vmatprep.subr.mxu0 0.0
        %1526 = vmatpush1.msra.mxu0 0.0
        %1527 = vmatprep.subr.mxu0 0.0
        %1528 = vmatpush1.msra.mxu0 0.0
        %1529 = vmatprep.subr.mxu0 0.0
        %1530 = vmatpush1.msra.mxu0 0.0
        %1531 = vmatprep.subr.mxu0 0.0
        %1532 = vmatpush1.msra.mxu0 0.0
        %1533 = vmatprep.subr.mxu0 0.0
        %1534 = vmatpush1.msra.mxu0 0.0
        %1535 = vmatprep.subr.mxu0 0.0
        %1536 = vmatpush1.msra.mxu0 0.0
        %1537 = vmatprep.subr.mxu0 0.0
        %1538 = vmatpush1.msra.mxu0 0.0
        %1539 = vmatprep.subr.mxu0 0.0
        %1540 = vmatpush1.msra.mxu0 0.0
        %1541 = vmatprep.subr.mxu0 0.0
        %1542 = vmatpush1.msra.mxu0 0.0
        %1543 = vmatprep.subr.mxu0 0.0
        %1544 = vmatpush1.msra.mxu0 0.0
        %1545 = vmatprep.subr.mxu0 0.0
        %1546 = vmatpush1.msra.mxu0 0.0
        %1547 = vmatprep.mubr.f32.mxu0 0.0
        %1548 = vmatmul.mubr.f32.gmra.mrb[0].mxu0 %v1481
        %v1549 = vpop.f32.mrb[0].mxu0
        %v1550 = vadd.f32 0.0, %v1549
        %v1551 = vpop.f32.mrb[0].mxu0
        %1552 = vdwg.mxu0
        %v1553 = vrot.slane %v374, 3
        %v1554 = vrot.slane %v375, 2
        %v1555 = vsel %vm443, %v1554, %v1553
        %v1556 = vsel %vm445, %v1555, 0
        %1558 = vmatprep.subr.mxu0 0.0
        %1559 = vmatpush1.msra.mxu0 %v420
        %1560 = vmatprep.subr.mxu0 0.0
        %1561 = vmatpush1.msra.mxu0 %v421
        %1562 = vmatprep.subr.mxu0 0.0
        %1563 = vmatpush1.msra.mxu0 %v422
        %1564 = vmatprep.subr.mxu0 0.0
        %1565 = vmatpush1.msra.mxu0 %v423
        %1566 = vmatprep.subr.mxu0 0.0
        %1567 = vmatpush1.msra.mxu0 0.0
        %1568 = vmatprep.subr.mxu0 0.0
        %1569 = vmatpush1.msra.mxu0 0.0
        %1570 = vmatprep.subr.mxu0 0.0
        %1571 = vmatpush1.msra.mxu0 0.0
        %1572 = vmatprep.subr.mxu0 0.0
        %1573 = vmatpush1.msra.mxu0 0.0
        %1574 = vmatprep.subr.mxu0 0.0
        %1575 = vmatpush1.msra.mxu0 0.0
        %1576 = vmatprep.subr.mxu0 0.0
        %1577 = vmatpush1.msra.mxu0 0.0
        %1578 = vmatprep.subr.mxu0 0.0
        %1579 = vmatpush1.msra.mxu0 0.0
        %1580 = vmatprep.subr.mxu0 0.0
        %1581 = vmatpush1.msra.mxu0 0.0
        %1582 = vmatprep.subr.mxu0 0.0
        %1583 = vmatpush1.msra.mxu0 0.0
        %1584 = vmatprep.subr.mxu0 0.0
        %1585 = vmatpush1.msra.mxu0 0.0
        %1586 = vmatprep.subr.mxu0 0.0
        %1587 = vmatpush1.msra.mxu0 0.0
        %1588 = vmatprep.subr.mxu0 0.0
        %1589 = vmatpush1.msra.mxu0 0.0
        %1590 = vmatprep.subr.mxu0 0.0
        %1591 = vmatpush1.msra.mxu0 0.0
        %1592 = vmatprep.subr.mxu0 0.0
        %1593 = vmatpush1.msra.mxu0 0.0
        %1594 = vmatprep.subr.mxu0 0.0
        %1595 = vmatpush1.msra.mxu0 0.0
        %1596 = vmatprep.subr.mxu0 0.0
        %1597 = vmatpush1.msra.mxu0 0.0
        %1598 = vmatprep.subr.mxu0 0.0
        %1599 = vmatpush1.msra.mxu0 0.0
        %1600 = vmatprep.subr.mxu0 0.0
        %1601 = vmatpush1.msra.mxu0 0.0
        %1602 = vmatprep.subr.mxu0 0.0
        %1603 = vmatpush1.msra.mxu0 0.0
        %1604 = vmatprep.subr.mxu0 0.0
        %1605 = vmatpush1.msra.mxu0 0.0
        %1606 = vmatprep.subr.mxu0 0.0
        %1607 = vmatpush1.msra.mxu0 0.0
        %1608 = vmatprep.subr.mxu0 0.0
        %1609 = vmatpush1.msra.mxu0 0.0
        %1610 = vmatprep.subr.mxu0 0.0
        %1611 = vmatpush1.msra.mxu0 0.0
        %1612 = vmatprep.subr.mxu0 0.0
        %1613 = vmatpush1.msra.mxu0 0.0
        %1614 = vmatprep.subr.mxu0 0.0
        %1615 = vmatpush1.msra.mxu0 0.0
        %1616 = vmatprep.subr.mxu0 0.0
        %1617 = vmatpush1.msra.mxu0 0.0
        %1618 = vmatprep.subr.mxu0 0.0
        %1619 = vmatpush1.msra.mxu0 0.0
        %1620 = vmatprep.subr.mxu0 0.0
        %1621 = vmatpush1.msra.mxu0 0.0
        %1622 = vmatprep.mubr.f32.mxu0 0.0
        %1623 = vmatmul.mubr.f32.gmra.mrb[0].mxu0 %v1556
        %v1624 = vpop.f32.mrb[0].mxu0
        %v1625 = vadd.f32 0.0, %v1624
        %v1626 = vpop.f32.mrb[0].mxu0
        %1627 = vdwg.mxu0
        %v1628 = vsub.f32 %v1550, %v1625
        %v1631 = vunpack.c.l.s4 1966171168
        %v1632 = vunpack.c.0.s8 %v1631
        %v1633 = vlaneseq
        %v1634 = vshrl.u32 %v1633, 7
        %v1635 = vsub.s32 %v1632, %v1634
        %v1636 = vrot.slane %v1628, %v1635
        %v1637 = vcombine.high %v1636, %v1636
        %v1639 = vunpack.c.l.s4 1966171168
        %v1640 = vunpack.c.0.s8 %v1639
        %v1641 = vlaneseq
        %v1642 = vshrl.u32 %v1641, 7
        %v1643 = vsub.s32 %v1640, %v1642
        %v1644 = vrot.slane %v1636, %v1643
        %v1646 = vunpack.c.l.s4 1966171168
        %v1647 = vunpack.c.0.s8 %v1646
        %v1648 = vlaneseq
        %v1649 = vshrl.u32 %v1648, 7
        %v1650 = vsub.s32 %v1647, %v1649
        %v1651 = vrot.slane %v1637, %v1650
        %1654 = vst.msk [vmem:[%s351 + $0x3] sm:$0x1] %vm620, %v1644
        %1655 = vst.msk [vmem:[%s351 + $0xb] sm:$0x1] %vm620, %v1651
        %1656 = vmatprep.subr.mxu0 0.0
        %1657 = vmatpush1.msra.mxu0 %v388
        %1658 = vmatprep.subr.mxu0 0.0
        %1659 = vmatpush1.msra.mxu0 %v389
        %1660 = vmatprep.subr.mxu0 0.0
        %1661 = vmatpush1.msra.mxu0 %v390
        %1662 = vmatprep.subr.mxu0 0.0
        %1663 = vmatpush1.msra.mxu0 %v391
        %1664 = vmatprep.subr.mxu0 0.0
        %1665 = vmatpush1.msra.mxu0 0.0
        %1666 = vmatprep.subr.mxu0 0.0
        %1667 = vmatpush1.msra.mxu0 0.0
        %1668 = vmatprep.subr.mxu0 0.0
        %1669 = vmatpush1.msra.mxu0 0.0
        %1670 = vmatprep.subr.mxu0 0.0
        %1671 = vmatpush1.msra.mxu0 0.0
        %1672 = vmatprep.subr.mxu0 0.0
        %1673 = vmatpush1.msra.mxu0 0.0
        %1674 = vmatprep.subr.mxu0 0.0
        %1675 = vmatpush1.msra.mxu0 0.0
        %1676 = vmatprep.subr.mxu0 0.0
        %1677 = vmatpush1.msra.mxu0 0.0
        %1678 = vmatprep.subr.mxu0 0.0
        %1679 = vmatpush1.msra.mxu0 0.0
        %1680 = vmatprep.subr.mxu0 0.0
        %1681 = vmatpush1.msra.mxu0 0.0
        %1682 = vmatprep.subr.mxu0 0.0
        %1683 = vmatpush1.msra.mxu0 0.0
        %1684 = vmatprep.subr.mxu0 0.0
        %1685 = vmatpush1.msra.mxu0 0.0
        %1686 = vmatprep.subr.mxu0 0.0
        %1687 = vmatpush1.msra.mxu0 0.0
        %1688 = vmatprep.subr.mxu0 0.0
        %1689 = vmatpush1.msra.mxu0 0.0
        %1690 = vmatprep.subr.mxu0 0.0
        %1691 = vmatpush1.msra.mxu0 0.0
        %1692 = vmatprep.subr.mxu0 0.0
        %1693 = vmatpush1.msra.mxu0 0.0
        %1694 = vmatprep.subr.mxu0 0.0
        %1695 = vmatpush1.msra.mxu0 0.0
        %1696 = vmatprep.subr.mxu0 0.0
        %1697 = vmatpush1.msra.mxu0 0.0
        %1698 = vmatprep.subr.mxu0 0.0
        %1699 = vmatpush1.msra.mxu0 0.0
        %1700 = vmatprep.subr.mxu0 0.0
        %1701 = vmatpush1.msra.mxu0 0.0
        %1702 = vmatprep.subr.mxu0 0.0
        %1703 = vmatpush1.msra.mxu0 0.0
        %1704 = vmatprep.subr.mxu0 0.0
        %1705 = vmatpush1.msra.mxu0 0.0
        %1706 = vmatprep.subr.mxu0 0.0
        %1707 = vmatpush1.msra.mxu0 0.0
        %1708 = vmatprep.subr.mxu0 0.0
        %1709 = vmatpush1.msra.mxu0 0.0
        %1710 = vmatprep.subr.mxu0 0.0
        %1711 = vmatpush1.msra.mxu0 0.0
        %1712 = vmatprep.subr.mxu0 0.0
        %1713 = vmatpush1.msra.mxu0 0.0
        %1714 = vmatprep.subr.mxu0 0.0
        %1715 = vmatpush1.msra.mxu0 0.0
        %1716 = vmatprep.subr.mxu0 0.0
        %1717 = vmatpush1.msra.mxu0 0.0
        %1718 = vmatprep.subr.mxu0 0.0
        %1719 = vmatpush1.msra.mxu0 0.0
        %1720 = vmatprep.mubr.f32.mxu0 0.0
        %1721 = vmatmul.mubr.f32.gmra.mrb[0].mxu0 %v1556
        %v1722 = vpop.f32.mrb[0].mxu0
        %v1723 = vadd.f32 0.0, %v1722
        %v1724 = vpop.f32.mrb[0].mxu0
        %1725 = vdwg.mxu0
        %1726 = vmatprep.subr.mxu0 0.0
        %1727 = vmatpush1.msra.mxu0 %v420
        %1728 = vmatprep.subr.mxu0 0.0
        %1729 = vmatpush1.msra.mxu0 %v421
        %1730 = vmatprep.subr.mxu0 0.0
        %1731 = vmatpush1.msra.mxu0 %v422
        %1732 = vmatprep.subr.mxu0 0.0
        %1733 = vmatpush1.msra.mxu0 %v423
        %1734 = vmatprep.subr.mxu0 0.0
        %1735 = vmatpush1.msra.mxu0 0.0
        %1736 = vmatprep.subr.mxu0 0.0
        %1737 = vmatpush1.msra.mxu0 0.0
        %1738 = vmatprep.subr.mxu0 0.0
        %1739 = vmatpush1.msra.mxu0 0.0
        %1740 = vmatprep.subr.mxu0 0.0
        %1741 = vmatpush1.msra.mxu0 0.0
        %1742 = vmatprep.subr.mxu0 0.0
        %1743 = vmatpush1.msra.mxu0 0.0
        %1744 = vmatprep.subr.mxu0 0.0
        %1745 = vmatpush1.msra.mxu0 0.0
        %1746 = vmatprep.subr.mxu0 0.0
        %1747 = vmatpush1.msra.mxu0 0.0
        %1748 = vmatprep.subr.mxu0 0.0
        %1749 = vmatpush1.msra.mxu0 0.0
        %1750 = vmatprep.subr.mxu0 0.0
        %1751 = vmatpush1.msra.mxu0 0.0
        %1752 = vmatprep.subr.mxu0 0.0
        %1753 = vmatpush1.msra.mxu0 0.0
        %1754 = vmatprep.subr.mxu0 0.0
        %1755 = vmatpush1.msra.mxu0 0.0
        %1756 = vmatprep.subr.mxu0 0.0
        %1757 = vmatpush1.msra.mxu0 0.0
        %1758 = vmatprep.subr.mxu0 0.0
        %1759 = vmatpush1.msra.mxu0 0.0
        %1760 = vmatprep.subr.mxu0 0.0
        %1761 = vmatpush1.msra.mxu0 0.0
        %1762 = vmatprep.subr.mxu0 0.0
        %1763 = vmatpush1.msra.mxu0 0.0
        %1764 = vmatprep.subr.mxu0 0.0
        %1765 = vmatpush1.msra.mxu0 0.0
        %1766 = vmatprep.subr.mxu0 0.0
        %1767 = vmatpush1.msra.mxu0 0.0
        %1768 = vmatprep.subr.mxu0 0.0
        %1769 = vmatpush1.msra.mxu0 0.0
        %1770 = vmatprep.subr.mxu0 0.0
        %1771 = vmatpush1.msra.mxu0 0.0
        %1772 = vmatprep.subr.mxu0 0.0
        %1773 = vmatpush1.msra.mxu0 0.0
        %1774 = vmatprep.subr.mxu0 0.0
        %1775 = vmatpush1.msra.mxu0 0.0
        %1776 = vmatprep.subr.mxu0 0.0
        %1777 = vmatpush1.msra.mxu0 0.0
        %1778 = vmatprep.subr.mxu0 0.0
        %1779 = vmatpush1.msra.mxu0 0.0
        %1780 = vmatprep.subr.mxu0 0.0
        %1781 = vmatpush1.msra.mxu0 0.0
        %1782 = vmatprep.subr.mxu0 0.0
        %1783 = vmatpush1.msra.mxu0 0.0
        %1784 = vmatprep.subr.mxu0 0.0
        %1785 = vmatpush1.msra.mxu0 0.0
        %1786 = vmatprep.subr.mxu0 0.0
        %1787 = vmatpush1.msra.mxu0 0.0
        %1788 = vmatprep.subr.mxu0 0.0
        %1789 = vmatpush1.msra.mxu0 0.0
        %1790 = vmatprep.mubr.f32.mxu0 0.0
        %1791 = vmatmul.mubr.f32.gmra.mrb[0].mxu0 %v1481
        %v1792 = vpop.f32.mrb[0].mxu0
        %v1793 = vadd.f32 %v1723, %v1792
        %v1794 = vpop.f32.mrb[0].mxu0
        %1795 = vdwg.mxu0
        %v1798 = vunpack.c.l.s4 1966171168
        %v1799 = vunpack.c.0.s8 %v1798
        %v1800 = vlaneseq
        %v1801 = vshrl.u32 %v1800, 7
        %v1802 = vsub.s32 %v1799, %v1801
        %v1803 = vrot.slane %v1793, %v1802
        %v1804 = vcombine.high %v1803, %v1803
        %v1806 = vunpack.c.l.s4 1966171168
        %v1807 = vunpack.c.0.s8 %v1806
        %v1808 = vlaneseq
        %v1809 = vshrl.u32 %v1808, 7
        %v1810 = vsub.s32 %v1807, %v1809
        %v1811 = vrot.slane %v1803, %v1810
        %v1813 = vunpack.c.l.s4 1966171168
        %v1814 = vunpack.c.0.s8 %v1813
        %v1815 = vlaneseq
        %v1816 = vshrl.u32 %v1815, 7
        %v1817 = vsub.s32 %v1814, %v1816
        %v1818 = vrot.slane %v1804, %v1817
        %1821 = vst.msk [vmem:[%s357 + $0x3] sm:$0x1] %vm620, %v1811
        %1822 = vst.msk [vmem:[%s357 + $0xb] sm:$0x1] %vm620, %v1818
        %v1823 = vrot.slane %v372, 4
        %v1824 = vrot.slane %v373, 3
        %v1825 = vsel %vm443, %v1824, %v1823
        %v1826 = vsel %vm445, %v1825, 0
        %1828 = vmatprep.subr.mxu0 0.0
        %1829 = vmatpush1.msra.mxu0 %v392
        %1830 = vmatprep.subr.mxu0 0.0
        %1831 = vmatpush1.msra.mxu0 %v393
        %1832 = vmatprep.subr.mxu0 0.0
        %1833 = vmatpush1.msra.mxu0 %v394
        %1834 = vmatprep.subr.mxu0 0.0
        %1835 = vmatpush1.msra.mxu0 %v395
        %1836 = vmatprep.subr.mxu0 0.0
        %1837 = vmatpush1.msra.mxu0 0.0
        %1838 = vmatprep.subr.mxu0 0.0
        %1839 = vmatpush1.msra.mxu0 0.0
        %1840 = vmatprep.subr.mxu0 0.0
        %1841 = vmatpush1.msra.mxu0 0.0
        %1842 = vmatprep.subr.mxu0 0.0
        %1843 = vmatpush1.msra.mxu0 0.0
        %1844 = vmatprep.subr.mxu0 0.0
        %1845 = vmatpush1.msra.mxu0 0.0
        %1846 = vmatprep.subr.mxu0 0.0
        %1847 = vmatpush1.msra.mxu0 0.0
        %1848 = vmatprep.subr.mxu0 0.0
        %1849 = vmatpush1.msra.mxu0 0.0
        %1850 = vmatprep.subr.mxu0 0.0
        %1851 = vmatpush1.msra.mxu0 0.0
        %1852 = vmatprep.subr.mxu0 0.0
        %1853 = vmatpush1.msra.mxu0 0.0
        %1854 = vmatprep.subr.mxu0 0.0
        %1855 = vmatpush1.msra.mxu0 0.0
        %1856 = vmatprep.subr.mxu0 0.0
        %1857 = vmatpush1.msra.mxu0 0.0
        %1858 = vmatprep.subr.mxu0 0.0
        %1859 = vmatpush1.msra.mxu0 0.0
        %1860 = vmatprep.subr.mxu0 0.0
        %1861 = vmatpush1.msra.mxu0 0.0
        %1862 = vmatprep.subr.mxu0 0.0
        %1863 = vmatpush1.msra.mxu0 0.0
        %1864 = vmatprep.subr.mxu0 0.0
        %1865 = vmatpush1.msra.mxu0 0.0
        %1866 = vmatprep.subr.mxu0 0.0
        %1867 = vmatpush1.msra.mxu0 0.0
        %1868 = vmatprep.subr.mxu0 0.0
        %1869 = vmatpush1.msra.mxu0 0.0
        %1870 = vmatprep.subr.mxu0 0.0
        %1871 = vmatpush1.msra.mxu0 0.0
        %1872 = vmatprep.subr.mxu0 0.0
        %1873 = vmatpush1.msra.mxu0 0.0
        %1874 = vmatprep.subr.mxu0 0.0
        %1875 = vmatpush1.msra.mxu0 0.0
        %1876 = vmatprep.subr.mxu0 0.0
        %1877 = vmatpush1.msra.mxu0 0.0
        %1878 = vmatprep.subr.mxu0 0.0
        %1879 = vmatpush1.msra.mxu0 0.0
        %1880 = vmatprep.subr.mxu0 0.0
        %1881 = vmatpush1.msra.mxu0 0.0
        %1882 = vmatprep.subr.mxu0 0.0
        %1883 = vmatpush1.msra.mxu0 0.0
        %1884 = vmatprep.subr.mxu0 0.0
        %1885 = vmatpush1.msra.mxu0 0.0
        %1886 = vmatprep.subr.mxu0 0.0
        %1887 = vmatpush1.msra.mxu0 0.0
        %1888 = vmatprep.subr.mxu0 0.0
        %1889 = vmatpush1.msra.mxu0 0.0
        %1890 = vmatprep.subr.mxu0 0.0
        %1891 = vmatpush1.msra.mxu0 0.0
        %1892 = vmatprep.mubr.f32.mxu0 0.0
        %1893 = vmatmul.mubr.f32.gmra.mrb[0].mxu0 %v1826
        %v1894 = vpop.f32.mrb[0].mxu0
        %v1895 = vadd.f32 0.0, %v1894
        %v1896 = vpop.f32.mrb[0].mxu0
        %1897 = vdwg.mxu0
        %v1898 = vrot.slane %v374, 4
        %v1899 = vrot.slane %v375, 3
        %v1900 = vsel %vm443, %v1899, %v1898
        %v1901 = vsel %vm445, %v1900, 0
        %1903 = vmatprep.subr.mxu0 0.0
        %1904 = vmatpush1.msra.mxu0 %v424
        %1905 = vmatprep.subr.mxu0 0.0
        %1906 = vmatpush1.msra.mxu0 %v425
        %1907 = vmatprep.subr.mxu0 0.0
        %1908 = vmatpush1.msra.mxu0 %v426
        %1909 = vmatprep.subr.mxu0 0.0
        %1910 = vmatpush1.msra.mxu0 %v427
        %1911 = vmatprep.subr.mxu0 0.0
        %1912 = vmatpush1.msra.mxu0 0.0
        %1913 = vmatprep.subr.mxu0 0.0
        %1914 = vmatpush1.msra.mxu0 0.0
        %1915 = vmatprep.subr.mxu0 0.0
        %1916 = vmatpush1.msra.mxu0 0.0
        %1917 = vmatprep.subr.mxu0 0.0
        %1918 = vmatpush1.msra.mxu0 0.0
        %1919 = vmatprep.subr.mxu0 0.0
        %1920 = vmatpush1.msra.mxu0 0.0
        %1921 = vmatprep.subr.mxu0 0.0
        %1922 = vmatpush1.msra.mxu0 0.0
        %1923 = vmatprep.subr.mxu0 0.0
        %1924 = vmatpush1.msra.mxu0 0.0
        %1925 = vmatprep.subr.mxu0 0.0
        %1926 = vmatpush1.msra.mxu0 0.0
        %1927 = vmatprep.subr.mxu0 0.0
        %1928 = vmatpush1.msra.mxu0 0.0
        %1929 = vmatprep.subr.mxu0 0.0
        %1930 = vmatpush1.msra.mxu0 0.0
        %1931 = vmatprep.subr.mxu0 0.0
        %1932 = vmatpush1.msra.mxu0 0.0
        %1933 = vmatprep.subr.mxu0 0.0
        %1934 = vmatpush1.msra.mxu0 0.0
        %1935 = vmatprep.subr.mxu0 0.0
        %1936 = vmatpush1.msra.mxu0 0.0
        %1937 = vmatprep.subr.mxu0 0.0
        %1938 = vmatpush1.msra.mxu0 0.0
        %1939 = vmatprep.subr.mxu0 0.0
        %1940 = vmatpush1.msra.mxu0 0.0
        %1941 = vmatprep.subr.mxu0 0.0
        %1942 = vmatpush1.msra.mxu0 0.0
        %1943 = vmatprep.subr.mxu0 0.0
        %1944 = vmatpush1.msra.mxu0 0.0
        %1945 = vmatprep.subr.mxu0 0.0
        %1946 = vmatpush1.msra.mxu0 0.0
        %1947 = vmatprep.subr.mxu0 0.0
        %1948 = vmatpush1.msra.mxu0 0.0
        %1949 = vmatprep.subr.mxu0 0.0
        %1950 = vmatpush1.msra.mxu0 0.0
        %1951 = vmatprep.subr.mxu0 0.0
        %1952 = vmatpush1.msra.mxu0 0.0
        %1953 = vmatprep.subr.mxu0 0.0
        %1954 = vmatpush1.msra.mxu0 0.0
        %1955 = vmatprep.subr.mxu0 0.0
        %1956 = vmatpush1.msra.mxu0 0.0
        %1957 = vmatprep.subr.mxu0 0.0
        %1958 = vmatpush1.msra.mxu0 0.0
        %1959 = vmatprep.subr.mxu0 0.0
        %1960 = vmatpush1.msra.mxu0 0.0
        %1961 = vmatprep.subr.mxu0 0.0
        %1962 = vmatpush1.msra.mxu0 0.0
        %1963 = vmatprep.subr.mxu0 0.0
        %1964 = vmatpush1.msra.mxu0 0.0
        %1965 = vmatprep.subr.mxu0 0.0
        %1966 = vmatpush1.msra.mxu0 0.0
        %1967 = vmatprep.mubr.f32.mxu0 0.0
        %1968 = vmatmul.mubr.f32.gmra.mrb[0].mxu0 %v1901
        %v1969 = vpop.f32.mrb[0].mxu0
        %v1970 = vadd.f32 0.0, %v1969
        %v1971 = vpop.f32.mrb[0].mxu0
        %1972 = vdwg.mxu0
        %v1973 = vsub.f32 %v1895, %v1970
        %v1976 = vunpack.c.l.s4 1966171168
        %v1977 = vunpack.c.0.s8 %v1976
        %v1978 = vlaneseq
        %v1979 = vshrl.u32 %v1978, 7
        %v1980 = vsub.s32 %v1977, %v1979
        %v1981 = vrot.slane %v1973, %v1980
        %v1982 = vcombine.high %v1981, %v1981
        %v1984 = vunpack.c.l.s4 1966171168
        %v1985 = vunpack.c.0.s8 %v1984
        %v1986 = vlaneseq
        %v1987 = vshrl.u32 %v1986, 7
        %v1988 = vsub.s32 %v1985, %v1987
        %v1989 = vrot.slane %v1981, %v1988
        %v1991 = vunpack.c.l.s4 1966171168
        %v1992 = vunpack.c.0.s8 %v1991
        %v1993 = vlaneseq
        %v1994 = vshrl.u32 %v1993, 7
        %v1995 = vsub.s32 %v1992, %v1994
        %v1996 = vrot.slane %v1982, %v1995
        %1999 = vst.msk [vmem:[%s351 + $0x4] sm:$0x1] %vm620, %v1989
        %2000 = vst.msk [vmem:[%s351 + $0xc] sm:$0x1] %vm620, %v1996
        %2001 = vmatprep.subr.mxu0 0.0
        %2002 = vmatpush1.msra.mxu0 %v392
        %2003 = vmatprep.subr.mxu0 0.0
        %2004 = vmatpush1.msra.mxu0 %v393
        %2005 = vmatprep.subr.mxu0 0.0
        %2006 = vmatpush1.msra.mxu0 %v394
        %2007 = vmatprep.subr.mxu0 0.0
        %2008 = vmatpush1.msra.mxu0 %v395
        %2009 = vmatprep.subr.mxu0 0.0
        %2010 = vmatpush1.msra.mxu0 0.0
        %2011 = vmatprep.subr.mxu0 0.0
        %2012 = vmatpush1.msra.mxu0 0.0
        %2013 = vmatprep.subr.mxu0 0.0
        %2014 = vmatpush1.msra.mxu0 0.0
        %2015 = vmatprep.subr.mxu0 0.0
        %2016 = vmatpush1.msra.mxu0 0.0
        %2017 = vmatprep.subr.mxu0 0.0
        %2018 = vmatpush1.msra.mxu0 0.0
        %2019 = vmatprep.subr.mxu0 0.0
        %2020 = vmatpush1.msra.mxu0 0.0
        %2021 = vmatprep.subr.mxu0 0.0
        %2022 = vmatpush1.msra.mxu0 0.0
        %2023 = vmatprep.subr.mxu0 0.0
        %2024 = vmatpush1.msra.mxu0 0.0
        %2025 = vmatprep.subr.mxu0 0.0
        %2026 = vmatpush1.msra.mxu0 0.0
        %2027 = vmatprep.subr.mxu0 0.0
        %2028 = vmatpush1.msra.mxu0 0.0
        %2029 = vmatprep.subr.mxu0 0.0
        %2030 = vmatpush1.msra.mxu0 0.0
        %2031 = vmatprep.subr.mxu0 0.0
        %2032 = vmatpush1.msra.mxu0 0.0
        %2033 = vmatprep.subr.mxu0 0.0
        %2034 = vmatpush1.msra.mxu0 0.0
        %2035 = vmatprep.subr.mxu0 0.0
        %2036 = vmatpush1.msra.mxu0 0.0
        %2037 = vmatprep.subr.mxu0 0.0
        %2038 = vmatpush1.msra.mxu0 0.0
        %2039 = vmatprep.subr.mxu0 0.0
        %2040 = vmatpush1.msra.mxu0 0.0
        %2041 = vmatprep.subr.mxu0 0.0
        %2042 = vmatpush1.msra.mxu0 0.0
        %2043 = vmatprep.subr.mxu0 0.0
        %2044 = vmatpush1.msra.mxu0 0.0
        %2045 = vmatprep.subr.mxu0 0.0
        %2046 = vmatpush1.msra.mxu0 0.0
        %2047 = vmatprep.subr.mxu0 0.0
        %2048 = vmatpush1.msra.mxu0 0.0
        %2049 = vmatprep.subr.mxu0 0.0
        %2050 = vmatpush1.msra.mxu0 0.0
        %2051 = vmatprep.subr.mxu0 0.0
        %2052 = vmatpush1.msra.mxu0 0.0
        %2053 = vmatprep.subr.mxu0 0.0
        %2054 = vmatpush1.msra.mxu0 0.0
        %2055 = vmatprep.subr.mxu0 0.0
        %2056 = vmatpush1.msra.mxu0 0.0
        %2057 = vmatprep.subr.mxu0 0.0
        %2058 = vmatpush1.msra.mxu0 0.0
        %2059 = vmatprep.subr.mxu0 0.0
        %2060 = vmatpush1.msra.mxu0 0.0
        %2061 = vmatprep.subr.mxu0 0.0
        %2062 = vmatpush1.msra.mxu0 0.0
        %2063 = vmatprep.subr.mxu0 0.0
        %2064 = vmatpush1.msra.mxu0 0.0
        %2065 = vmatprep.mubr.f32.mxu0 0.0
        %2066 = vmatmul.mubr.f32.gmra.mrb[0].mxu0 %v1901
        %v2067 = vpop.f32.mrb[0].mxu0
        %v2068 = vadd.f32 0.0, %v2067
        %v2069 = vpop.f32.mrb[0].mxu0
        %2070 = vdwg.mxu0
        %2071 = vmatprep.subr.mxu0 0.0
        %2072 = vmatpush1.msra.mxu0 %v424
        %2073 = vmatprep.subr.mxu0 0.0
        %2074 = vmatpush1.msra.mxu0 %v425
        %2075 = vmatprep.subr.mxu0 0.0
        %2076 = vmatpush1.msra.mxu0 %v426
        %2077 = vmatprep.subr.mxu0 0.0
        %2078 = vmatpush1.msra.mxu0 %v427
        %2079 = vmatprep.subr.mxu0 0.0
        %2080 = vmatpush1.msra.mxu0 0.0
        %2081 = vmatprep.subr.mxu0 0.0
        %2082 = vmatpush1.msra.mxu0 0.0
        %2083 = vmatprep.subr.mxu0 0.0
        %2084 = vmatpush1.msra.mxu0 0.0
        %2085 = vmatprep.subr.mxu0 0.0
        %2086 = vmatpush1.msra.mxu0 0.0
        %2087 = vmatprep.subr.mxu0 0.0
        %2088 = vmatpush1.msra.mxu0 0.0
        %2089 = vmatprep.subr.mxu0 0.0
        %2090 = vmatpush1.msra.mxu0 0.0
        %2091 = vmatprep.subr.mxu0 0.0
        %2092 = vmatpush1.msra.mxu0 0.0
        %2093 = vmatprep.subr.mxu0 0.0
        %2094 = vmatpush1.msra.mxu0 0.0
        %2095 = vmatprep.subr.mxu0 0.0
        %2096 = vmatpush1.msra.mxu0 0.0
        %2097 = vmatprep.subr.mxu0 0.0
        %2098 = vmatpush1.msra.mxu0 0.0
        %2099 = vmatprep.subr.mxu0 0.0
        %2100 = vmatpush1.msra.mxu0 0.0
        %2101 = vmatprep.subr.mxu0 0.0
        %2102 = vmatpush1.msra.mxu0 0.0
        %2103 = vmatprep.subr.mxu0 0.0
        %2104 = vmatpush1.msra.mxu0 0.0
        %2105 = vmatprep.subr.mxu0 0.0
        %2106 = vmatpush1.msra.mxu0 0.0
        %2107 = vmatprep.subr.mxu0 0.0
        %2108 = vmatpush1.msra.mxu0 0.0
        %2109 = vmatprep.subr.mxu0 0.0
        %2110 = vmatpush1.msra.mxu0 0.0
        %2111 = vmatprep.subr.mxu0 0.0
        %2112 = vmatpush1.msra.mxu0 0.0
        %2113 = vmatprep.subr.mxu0 0.0
        %2114 = vmatpush1.msra.mxu0 0.0
        %2115 = vmatprep.subr.mxu0 0.0
        %2116 = vmatpush1.msra.mxu0 0.0
        %2117 = vmatprep.subr.mxu0 0.0
        %2118 = vmatpush1.msra.mxu0 0.0
        %2119 = vmatprep.subr.mxu0 0.0
        %2120 = vmatpush1.msra.mxu0 0.0
        %2121 = vmatprep.subr.mxu0 0.0
        %2122 = vmatpush1.msra.mxu0 0.0
        %2123 = vmatprep.subr.mxu0 0.0
        %2124 = vmatpush1.msra.mxu0 0.0
        %2125 = vmatprep.subr.mxu0 0.0
        %2126 = vmatpush1.msra.mxu0 0.0
        %2127 = vmatprep.subr.mxu0 0.0
        %2128 = vmatpush1.msra.mxu0 0.0
        %2129 = vmatprep.subr.mxu0 0.0
        %2130 = vmatpush1.msra.mxu0 0.0
        %2131 = vmatprep.subr.mxu0 0.0
        %2132 = vmatpush1.msra.mxu0 0.0
        %2133 = vmatprep.subr.mxu0 0.0
        %2134 = vmatpush1.msra.mxu0 0.0
        %2135 = vmatprep.mubr.f32.mxu0 0.0
        %2136 = vmatmul.mubr.f32.gmra.mrb[0].mxu0 %v1826
        %v2137 = vpop.f32.mrb[0].mxu0
        %v2138 = vadd.f32 %v2068, %v2137
        %v2139 = vpop.f32.mrb[0].mxu0
        %2140 = vdwg.mxu0
        %v2143 = vunpack.c.l.s4 1966171168
        %v2144 = vunpack.c.0.s8 %v2143
        %v2145 = vlaneseq
        %v2146 = vshrl.u32 %v2145, 7
        %v2147 = vsub.s32 %v2144, %v2146
        %v2148 = vrot.slane %v2138, %v2147
        %v2149 = vcombine.high %v2148, %v2148
        %v2151 = vunpack.c.l.s4 1966171168
        %v2152 = vunpack.c.0.s8 %v2151
        %v2153 = vlaneseq
        %v2154 = vshrl.u32 %v2153, 7
        %v2155 = vsub.s32 %v2152, %v2154
        %v2156 = vrot.slane %v2148, %v2155
        %v2158 = vunpack.c.l.s4 1966171168
        %v2159 = vunpack.c.0.s8 %v2158
        %v2160 = vlaneseq
        %v2161 = vshrl.u32 %v2160, 7
        %v2162 = vsub.s32 %v2159, %v2161
        %v2163 = vrot.slane %v2149, %v2162
        %2166 = vst.msk [vmem:[%s357 + $0x4] sm:$0x1] %vm620, %v2156
        %2167 = vst.msk [vmem:[%s357 + $0xc] sm:$0x1] %vm620, %v2163
        %v2168 = vrot.slane %v372, 5
        %v2169 = vrot.slane %v373, 4
        %v2170 = vsel %vm443, %v2169, %v2168
        %v2171 = vsel %vm445, %v2170, 0
        %2173 = vmatprep.subr.mxu0 0.0
        %2174 = vmatpush1.msra.mxu0 %v396
        %2175 = vmatprep.subr.mxu0 0.0
        %2176 = vmatpush1.msra.mxu0 %v397
        %2177 = vmatprep.subr.mxu0 0.0
        %2178 = vmatpush1.msra.mxu0 %v398
        %2179 = vmatprep.subr.mxu0 0.0
        %2180 = vmatpush1.msra.mxu0 %v399
        %2181 = vmatprep.subr.mxu0 0.0
        %2182 = vmatpush1.msra.mxu0 0.0
        %2183 = vmatprep.subr.mxu0 0.0
        %2184 = vmatpush1.msra.mxu0 0.0
        %2185 = vmatprep.subr.mxu0 0.0
        %2186 = vmatpush1.msra.mxu0 0.0
        %2187 = vmatprep.subr.mxu0 0.0
        %2188 = vmatpush1.msra.mxu0 0.0
        %2189 = vmatprep.subr.mxu0 0.0
        %2190 = vmatpush1.msra.mxu0 0.0
        %2191 = vmatprep.subr.mxu0 0.0
        %2192 = vmatpush1.msra.mxu0 0.0
        %2193 = vmatprep.subr.mxu0 0.0
        %2194 = vmatpush1.msra.mxu0 0.0
        %2195 = vmatprep.subr.mxu0 0.0
        %2196 = vmatpush1.msra.mxu0 0.0
        %2197 = vmatprep.subr.mxu0 0.0
        %2198 = vmatpush1.msra.mxu0 0.0
        %2199 = vmatprep.subr.mxu0 0.0
        %2200 = vmatpush1.msra.mxu0 0.0
        %2201 = vmatprep.subr.mxu0 0.0
        %2202 = vmatpush1.msra.mxu0 0.0
        %2203 = vmatprep.subr.mxu0 0.0
        %2204 = vmatpush1.msra.mxu0 0.0
        %2205 = vmatprep.subr.mxu0 0.0
        %2206 = vmatpush1.msra.mxu0 0.0
        %2207 = vmatprep.subr.mxu0 0.0
        %2208 = vmatpush1.msra.mxu0 0.0
        %2209 = vmatprep.subr.mxu0 0.0
        %2210 = vmatpush1.msra.mxu0 0.0
        %2211 = vmatprep.subr.mxu0 0.0
        %2212 = vmatpush1.msra.mxu0 0.0
        %2213 = vmatprep.subr.mxu0 0.0
        %2214 = vmatpush1.msra.mxu0 0.0
        %2215 = vmatprep.subr.mxu0 0.0
        %2216 = vmatpush1.msra.mxu0 0.0
        %2217 = vmatprep.subr.mxu0 0.0
        %2218 = vmatpush1.msra.mxu0 0.0
        %2219 = vmatprep.subr.mxu0 0.0
        %2220 = vmatpush1.msra.mxu0 0.0
        %2221 = vmatprep.subr.mxu0 0.0
        %2222 = vmatpush1.msra.mxu0 0.0
        %2223 = vmatprep.subr.mxu0 0.0
        %2224 = vmatpush1.msra.mxu0 0.0
        %2225 = vmatprep.subr.mxu0 0.0
        %2226 = vmatpush1.msra.mxu0 0.0
        %2227 = vmatprep.subr.mxu0 0.0
        %2228 = vmatpush1.msra.mxu0 0.0
        %2229 = vmatprep.subr.mxu0 0.0
        %2230 = vmatpush1.msra.mxu0 0.0
        %2231 = vmatprep.subr.mxu0 0.0
        %2232 = vmatpush1.msra.mxu0 0.0
        %2233 = vmatprep.subr.mxu0 0.0
        %2234 = vmatpush1.msra.mxu0 0.0
        %2235 = vmatprep.subr.mxu0 0.0
        %2236 = vmatpush1.msra.mxu0 0.0
        %2237 = vmatprep.mubr.f32.mxu0 0.0
        %2238 = vmatmul.mubr.f32.gmra.mrb[0].mxu0 %v2171
        %v2239 = vpop.f32.mrb[0].mxu0
        %v2240 = vadd.f32 0.0, %v2239
        %v2241 = vpop.f32.mrb[0].mxu0
        %2242 = vdwg.mxu0
        %v2243 = vrot.slane %v374, 5
        %v2244 = vrot.slane %v375, 4
        %v2245 = vsel %vm443, %v2244, %v2243
        %v2246 = vsel %vm445, %v2245, 0
        %2248 = vmatprep.subr.mxu0 0.0
        %2249 = vmatpush1.msra.mxu0 %v428
        %2250 = vmatprep.subr.mxu0 0.0
        %2251 = vmatpush1.msra.mxu0 %v429
        %2252 = vmatprep.subr.mxu0 0.0
        %2253 = vmatpush1.msra.mxu0 %v430
        %2254 = vmatprep.subr.mxu0 0.0
        %2255 = vmatpush1.msra.mxu0 %v431
        %2256 = vmatprep.subr.mxu0 0.0
        %2257 = vmatpush1.msra.mxu0 0.0
        %2258 = vmatprep.subr.mxu0 0.0
        %2259 = vmatpush1.msra.mxu0 0.0
        %2260 = vmatprep.subr.mxu0 0.0
        %2261 = vmatpush1.msra.mxu0 0.0
        %2262 = vmatprep.subr.mxu0 0.0
        %2263 = vmatpush1.msra.mxu0 0.0
        %2264 = vmatprep.subr.mxu0 0.0
        %2265 = vmatpush1.msra.mxu0 0.0
        %2266 = vmatprep.subr.mxu0 0.0
        %2267 = vmatpush1.msra.mxu0 0.0
        %2268 = vmatprep.subr.mxu0 0.0
        %2269 = vmatpush1.msra.mxu0 0.0
        %2270 = vmatprep.subr.mxu0 0.0
        %2271 = vmatpush1.msra.mxu0 0.0
        %2272 = vmatprep.subr.mxu0 0.0
        %2273 = vmatpush1.msra.mxu0 0.0
        %2274 = vmatprep.subr.mxu0 0.0
        %2275 = vmatpush1.msra.mxu0 0.0
        %2276 = vmatprep.subr.mxu0 0.0
        %2277 = vmatpush1.msra.mxu0 0.0
        %2278 = vmatprep.subr.mxu0 0.0
        %2279 = vmatpush1.msra.mxu0 0.0
        %2280 = vmatprep.subr.mxu0 0.0
        %2281 = vmatpush1.msra.mxu0 0.0
        %2282 = vmatprep.subr.mxu0 0.0
        %2283 = vmatpush1.msra.mxu0 0.0
        %2284 = vmatprep.subr.mxu0 0.0
        %2285 = vmatpush1.msra.mxu0 0.0
        %2286 = vmatprep.subr.mxu0 0.0
        %2287 = vmatpush1.msra.mxu0 0.0
        %2288 = vmatprep.subr.mxu0 0.0
        %2289 = vmatpush1.msra.mxu0 0.0
        %2290 = vmatprep.subr.mxu0 0.0
        %2291 = vmatpush1.msra.mxu0 0.0
        %2292 = vmatprep.subr.mxu0 0.0
        %2293 = vmatpush1.msra.mxu0 0.0
        %2294 = vmatprep.subr.mxu0 0.0
        %2295 = vmatpush1.msra.mxu0 0.0
        %2296 = vmatprep.subr.mxu0 0.0
        %2297 = vmatpush1.msra.mxu0 0.0
        %2298 = vmatprep.subr.mxu0 0.0
        %2299 = vmatpush1.msra.mxu0 0.0
        %2300 = vmatprep.subr.mxu0 0.0
        %2301 = vmatpush1.msra.mxu0 0.0
        %2302 = vmatprep.subr.mxu0 0.0
        %2303 = vmatpush1.msra.mxu0 0.0
        %2304 = vmatprep.subr.mxu0 0.0
        %2305 = vmatpush1.msra.mxu0 0.0
        %2306 = vmatprep.subr.mxu0 0.0
        %2307 = vmatpush1.msra.mxu0 0.0
        %2308 = vmatprep.subr.mxu0 0.0
        %2309 = vmatpush1.msra.mxu0 0.0
        %2310 = vmatprep.subr.mxu0 0.0
        %2311 = vmatpush1.msra.mxu0 0.0
        %2312 = vmatprep.mubr.f32.mxu0 0.0
        %2313 = vmatmul.mubr.f32.gmra.mrb[0].mxu0 %v2246
        %v2314 = vpop.f32.mrb[0].mxu0
        %v2315 = vadd.f32 0.0, %v2314
        %v2316 = vpop.f32.mrb[0].mxu0
        %2317 = vdwg.mxu0
        %v2318 = vsub.f32 %v2240, %v2315
        %v2321 = vunpack.c.l.s4 1966171168
        %v2322 = vunpack.c.0.s8 %v2321
        %v2323 = vlaneseq
        %v2324 = vshrl.u32 %v2323, 7
        %v2325 = vsub.s32 %v2322, %v2324
        %v2326 = vrot.slane %v2318, %v2325
        %v2327 = vcombine.high %v2326, %v2326
        %v2329 = vunpack.c.l.s4 1966171168
        %v2330 = vunpack.c.0.s8 %v2329
        %v2331 = vlaneseq
        %v2332 = vshrl.u32 %v2331, 7
        %v2333 = vsub.s32 %v2330, %v2332
        %v2334 = vrot.slane %v2326, %v2333
        %v2336 = vunpack.c.l.s4 1966171168
        %v2337 = vunpack.c.0.s8 %v2336
        %v2338 = vlaneseq
        %v2339 = vshrl.u32 %v2338, 7
        %v2340 = vsub.s32 %v2337, %v2339
        %v2341 = vrot.slane %v2327, %v2340
        %2344 = vst.msk [vmem:[%s351 + $0x5] sm:$0x1] %vm620, %v2334
        %2345 = vst.msk [vmem:[%s351 + $0xd] sm:$0x1] %vm620, %v2341
        %2346 = vmatprep.subr.mxu0 0.0
        %2347 = vmatpush1.msra.mxu0 %v396
        %2348 = vmatprep.subr.mxu0 0.0
        %2349 = vmatpush1.msra.mxu0 %v397
        %2350 = vmatprep.subr.mxu0 0.0
        %2351 = vmatpush1.msra.mxu0 %v398
        %2352 = vmatprep.subr.mxu0 0.0
        %2353 = vmatpush1.msra.mxu0 %v399
        %2354 = vmatprep.subr.mxu0 0.0
        %2355 = vmatpush1.msra.mxu0 0.0
        %2356 = vmatprep.subr.mxu0 0.0
        %2357 = vmatpush1.msra.mxu0 0.0
        %2358 = vmatprep.subr.mxu0 0.0
        %2359 = vmatpush1.msra.mxu0 0.0
        %2360 = vmatprep.subr.mxu0 0.0
        %2361 = vmatpush1.msra.mxu0 0.0
        %2362 = vmatprep.subr.mxu0 0.0
        %2363 = vmatpush1.msra.mxu0 0.0
        %2364 = vmatprep.subr.mxu0 0.0
        %2365 = vmatpush1.msra.mxu0 0.0
        %2366 = vmatprep.subr.mxu0 0.0
        %2367 = vmatpush1.msra.mxu0 0.0
        %2368 = vmatprep.subr.mxu0 0.0
        %2369 = vmatpush1.msra.mxu0 0.0
        %2370 = vmatprep.subr.mxu0 0.0
        %2371 = vmatpush1.msra.mxu0 0.0
        %2372 = vmatprep.subr.mxu0 0.0
        %2373 = vmatpush1.msra.mxu0 0.0
        %2374 = vmatprep.subr.mxu0 0.0
        %2375 = vmatpush1.msra.mxu0 0.0
        %2376 = vmatprep.subr.mxu0 0.0
        %2377 = vmatpush1.msra.mxu0 0.0
        %2378 = vmatprep.subr.mxu0 0.0
        %2379 = vmatpush1.msra.mxu0 0.0
        %2380 = vmatprep.subr.mxu0 0.0
        %2381 = vmatpush1.msra.mxu0 0.0
        %2382 = vmatprep.subr.mxu0 0.0
        %2383 = vmatpush1.msra.mxu0 0.0
        %2384 = vmatprep.subr.mxu0 0.0
        %2385 = vmatpush1.msra.mxu0 0.0
        %2386 = vmatprep.subr.mxu0 0.0
        %2387 = vmatpush1.msra.mxu0 0.0
        %2388 = vmatprep.subr.mxu0 0.0
        %2389 = vmatpush1.msra.mxu0 0.0
        %2390 = vmatprep.subr.mxu0 0.0
        %2391 = vmatpush1.msra.mxu0 0.0
        %2392 = vmatprep.subr.mxu0 0.0
        %2393 = vmatpush1.msra.mxu0 0.0
        %2394 = vmatprep.subr.mxu0 0.0
        %2395 = vmatpush1.msra.mxu0 0.0
        %2396 = vmatprep.subr.mxu0 0.0
        %2397 = vmatpush1.msra.mxu0 0.0
        %2398 = vmatprep.subr.mxu0 0.0
        %2399 = vmatpush1.msra.mxu0 0.0
        %2400 = vmatprep.subr.mxu0 0.0
        %2401 = vmatpush1.msra.mxu0 0.0
        %2402 = vmatprep.subr.mxu0 0.0
        %2403 = vmatpush1.msra.mxu0 0.0
        %2404 = vmatprep.subr.mxu0 0.0
        %2405 = vmatpush1.msra.mxu0 0.0
        %2406 = vmatprep.subr.mxu0 0.0
        %2407 = vmatpush1.msra.mxu0 0.0
        %2408 = vmatprep.subr.mxu0 0.0
        %2409 = vmatpush1.msra.mxu0 0.0
        %2410 = vmatprep.mubr.f32.mxu0 0.0
        %2411 = vmatmul.mubr.f32.gmra.mrb[0].mxu0 %v2246
        %v2412 = vpop.f32.mrb[0].mxu0
        %v2413 = vadd.f32 0.0, %v2412
        %v2414 = vpop.f32.mrb[0].mxu0
        %2415 = vdwg.mxu0
        %2416 = vmatprep.subr.mxu0 0.0
        %2417 = vmatpush1.msra.mxu0 %v428
        %2418 = vmatprep.subr.mxu0 0.0
        %2419 = vmatpush1.msra.mxu0 %v429
        %2420 = vmatprep.subr.mxu0 0.0
        %2421 = vmatpush1.msra.mxu0 %v430
        %2422 = vmatprep.subr.mxu0 0.0
        %2423 = vmatpush1.msra.mxu0 %v431
        %2424 = vmatprep.subr.mxu0 0.0
        %2425 = vmatpush1.msra.mxu0 0.0
        %2426 = vmatprep.subr.mxu0 0.0
        %2427 = vmatpush1.msra.mxu0 0.0
        %2428 = vmatprep.subr.mxu0 0.0
        %2429 = vmatpush1.msra.mxu0 0.0
        %2430 = vmatprep.subr.mxu0 0.0
        %2431 = vmatpush1.msra.mxu0 0.0
        %2432 = vmatprep.subr.mxu0 0.0
        %2433 = vmatpush1.msra.mxu0 0.0
        %2434 = vmatprep.subr.mxu0 0.0
        %2435 = vmatpush1.msra.mxu0 0.0
        %2436 = vmatprep.subr.mxu0 0.0
        %2437 = vmatpush1.msra.mxu0 0.0
        %2438 = vmatprep.subr.mxu0 0.0
        %2439 = vmatpush1.msra.mxu0 0.0
        %2440 = vmatprep.subr.mxu0 0.0
        %2441 = vmatpush1.msra.mxu0 0.0
        %2442 = vmatprep.subr.mxu0 0.0
        %2443 = vmatpush1.msra.mxu0 0.0
        %2444 = vmatprep.subr.mxu0 0.0
        %2445 = vmatpush1.msra.mxu0 0.0
        %2446 = vmatprep.subr.mxu0 0.0
        %2447 = vmatpush1.msra.mxu0 0.0
        %2448 = vmatprep.subr.mxu0 0.0
        %2449 = vmatpush1.msra.mxu0 0.0
        %2450 = vmatprep.subr.mxu0 0.0
        %2451 = vmatpush1.msra.mxu0 0.0
        %2452 = vmatprep.subr.mxu0 0.0
        %2453 = vmatpush1.msra.mxu0 0.0
        %2454 = vmatprep.subr.mxu0 0.0
        %2455 = vmatpush1.msra.mxu0 0.0
        %2456 = vmatprep.subr.mxu0 0.0
        %2457 = vmatpush1.msra.mxu0 0.0
        %2458 = vmatprep.subr.mxu0 0.0
        %2459 = vmatpush1.msra.mxu0 0.0
        %2460 = vmatprep.subr.mxu0 0.0
        %2461 = vmatpush1.msra.mxu0 0.0
        %2462 = vmatprep.subr.mxu0 0.0
        %2463 = vmatpush1.msra.mxu0 0.0
        %2464 = vmatprep.subr.mxu0 0.0
        %2465 = vmatpush1.msra.mxu0 0.0
        %2466 = vmatprep.subr.mxu0 0.0
        %2467 = vmatpush1.msra.mxu0 0.0
        %2468 = vmatprep.subr.mxu0 0.0
        %2469 = vmatpush1.msra.mxu0 0.0
        %2470 = vmatprep.subr.mxu0 0.0
        %2471 = vmatpush1.msra.mxu0 0.0
        %2472 = vmatprep.subr.mxu0 0.0
        %2473 = vmatpush1.msra.mxu0 0.0
        %2474 = vmatprep.subr.mxu0 0.0
        %2475 = vmatpush1.msra.mxu0 0.0
        %2476 = vmatprep.subr.mxu0 0.0
        %2477 = vmatpush1.msra.mxu0 0.0
        %2478 = vmatprep.subr.mxu0 0.0
        %2479 = vmatpush1.msra.mxu0 0.0
        %2480 = vmatprep.mubr.f32.mxu0 0.0
        %2481 = vmatmul.mubr.f32.gmra.mrb[0].mxu0 %v2171
        %v2482 = vpop.f32.mrb[0].mxu0
        %v2483 = vadd.f32 %v2413, %v2482
        %v2484 = vpop.f32.mrb[0].mxu0
        %2485 = vdwg.mxu0
        %v2488 = vunpack.c.l.s4 1966171168
        %v2489 = vunpack.c.0.s8 %v2488
        %v2490 = vlaneseq
        %v2491 = vshrl.u32 %v2490, 7
        %v2492 = vsub.s32 %v2489, %v2491
        %v2493 = vrot.slane %v2483, %v2492
        %v2494 = vcombine.high %v2493, %v2493
        %v2496 = vunpack.c.l.s4 1966171168
        %v2497 = vunpack.c.0.s8 %v2496
        %v2498 = vlaneseq
        %v2499 = vshrl.u32 %v2498, 7
        %v2500 = vsub.s32 %v2497, %v2499
        %v2501 = vrot.slane %v2493, %v2500
        %v2503 = vunpack.c.l.s4 1966171168
        %v2504 = vunpack.c.0.s8 %v2503
        %v2505 = vlaneseq
        %v2506 = vshrl.u32 %v2505, 7
        %v2507 = vsub.s32 %v2504, %v2506
        %v2508 = vrot.slane %v2494, %v2507
        %2511 = vst.msk [vmem:[%s357 + $0x5] sm:$0x1] %vm620, %v2501
        %2512 = vst.msk [vmem:[%s357 + $0xd] sm:$0x1] %vm620, %v2508
        %v2513 = vrot.slane %v372, 6
        %v2514 = vrot.slane %v373, 5
        %v2515 = vsel %vm443, %v2514, %v2513
        %v2516 = vsel %vm445, %v2515, 0
        %2518 = vmatprep.subr.mxu0 0.0
        %2519 = vmatpush1.msra.mxu0 %v400
        %2520 = vmatprep.subr.mxu0 0.0
        %2521 = vmatpush1.msra.mxu0 %v401
        %2522 = vmatprep.subr.mxu0 0.0
        %2523 = vmatpush1.msra.mxu0 %v402
        %2524 = vmatprep.subr.mxu0 0.0
        %2525 = vmatpush1.msra.mxu0 %v403
        %2526 = vmatprep.subr.mxu0 0.0
        %2527 = vmatpush1.msra.mxu0 0.0
        %2528 = vmatprep.subr.mxu0 0.0
        %2529 = vmatpush1.msra.mxu0 0.0
        %2530 = vmatprep.subr.mxu0 0.0
        %2531 = vmatpush1.msra.mxu0 0.0
        %2532 = vmatprep.subr.mxu0 0.0
        %2533 = vmatpush1.msra.mxu0 0.0
        %2534 = vmatprep.subr.mxu0 0.0
        %2535 = vmatpush1.msra.mxu0 0.0
        %2536 = vmatprep.subr.mxu0 0.0
        %2537 = vmatpush1.msra.mxu0 0.0
        %2538 = vmatprep.subr.mxu0 0.0
        %2539 = vmatpush1.msra.mxu0 0.0
        %2540 = vmatprep.subr.mxu0 0.0
        %2541 = vmatpush1.msra.mxu0 0.0
        %2542 = vmatprep.subr.mxu0 0.0
        %2543 = vmatpush1.msra.mxu0 0.0
        %2544 = vmatprep.subr.mxu0 0.0
        %2545 = vmatpush1.msra.mxu0 0.0
        %2546 = vmatprep.subr.mxu0 0.0
        %2547 = vmatpush1.msra.mxu0 0.0
        %2548 = vmatprep.subr.mxu0 0.0
        %2549 = vmatpush1.msra.mxu0 0.0
        %2550 = vmatprep.subr.mxu0 0.0
        %2551 = vmatpush1.msra.mxu0 0.0
        %2552 = vmatprep.subr.mxu0 0.0
        %2553 = vmatpush1.msra.mxu0 0.0
        %2554 = vmatprep.subr.mxu0 0.0
        %2555 = vmatpush1.msra.mxu0 0.0
        %2556 = vmatprep.subr.mxu0 0.0
        %2557 = vmatpush1.msra.mxu0 0.0
        %2558 = vmatprep.subr.mxu0 0.0
        %2559 = vmatpush1.msra.mxu0 0.0
        %2560 = vmatprep.subr.mxu0 0.0
        %2561 = vmatpush1.msra.mxu0 0.0
        %2562 = vmatprep.subr.mxu0 0.0
        %2563 = vmatpush1.msra.mxu0 0.0
        %2564 = vmatprep.subr.mxu0 0.0
        %2565 = vmatpush1.msra.mxu0 0.0
        %2566 = vmatprep.subr.mxu0 0.0
        %2567 = vmatpush1.msra.mxu0 0.0
        %2568 = vmatprep.subr.mxu0 0.0
        %2569 = vmatpush1.msra.mxu0 0.0
        %2570 = vmatprep.subr.mxu0 0.0
        %2571 = vmatpush1.msra.mxu0 0.0
        %2572 = vmatprep.subr.mxu0 0.0
        %2573 = vmatpush1.msra.mxu0 0.0
        %2574 = vmatprep.subr.mxu0 0.0
        %2575 = vmatpush1.msra.mxu0 0.0
        %2576 = vmatprep.subr.mxu0 0.0
        %2577 = vmatpush1.msra.mxu0 0.0
        %2578 = vmatprep.subr.mxu0 0.0
        %2579 = vmatpush1.msra.mxu0 0.0
        %2580 = vmatprep.subr.mxu0 0.0
        %2581 = vmatpush1.msra.mxu0 0.0
        %2582 = vmatprep.mubr.f32.mxu0 0.0
        %2583 = vmatmul.mubr.f32.gmra.mrb[0].mxu0 %v2516
        %v2584 = vpop.f32.mrb[0].mxu0
        %v2585 = vadd.f32 0.0, %v2584
        %v2586 = vpop.f32.mrb[0].mxu0
        %2587 = vdwg.mxu0
        %v2588 = vrot.slane %v374, 6
        %v2589 = vrot.slane %v375, 5
        %v2590 = vsel %vm443, %v2589, %v2588
        %v2591 = vsel %vm445, %v2590, 0
        %2593 = vmatprep.subr.mxu0 0.0
        %2594 = vmatpush1.msra.mxu0 %v432
        %2595 = vmatprep.subr.mxu0 0.0
        %2596 = vmatpush1.msra.mxu0 %v433
        %2597 = vmatprep.subr.mxu0 0.0
        %2598 = vmatpush1.msra.mxu0 %v434
        %2599 = vmatprep.subr.mxu0 0.0
        %2600 = vmatpush1.msra.mxu0 %v435
        %2601 = vmatprep.subr.mxu0 0.0
        %2602 = vmatpush1.msra.mxu0 0.0
        %2603 = vmatprep.subr.mxu0 0.0
        %2604 = vmatpush1.msra.mxu0 0.0
        %2605 = vmatprep.subr.mxu0 0.0
        %2606 = vmatpush1.msra.mxu0 0.0
        %2607 = vmatprep.subr.mxu0 0.0
        %2608 = vmatpush1.msra.mxu0 0.0
        %2609 = vmatprep.subr.mxu0 0.0
        %2610 = vmatpush1.msra.mxu0 0.0
        %2611 = vmatprep.subr.mxu0 0.0
        %2612 = vmatpush1.msra.mxu0 0.0
        %2613 = vmatprep.subr.mxu0 0.0
        %2614 = vmatpush1.msra.mxu0 0.0
        %2615 = vmatprep.subr.mxu0 0.0
        %2616 = vmatpush1.msra.mxu0 0.0
        %2617 = vmatprep.subr.mxu0 0.0
        %2618 = vmatpush1.msra.mxu0 0.0
        %2619 = vmatprep.subr.mxu0 0.0
        %2620 = vmatpush1.msra.mxu0 0.0
        %2621 = vmatprep.subr.mxu0 0.0
        %2622 = vmatpush1.msra.mxu0 0.0
        %2623 = vmatprep.subr.mxu0 0.0
        %2624 = vmatpush1.msra.mxu0 0.0
        %2625 = vmatprep.subr.mxu0 0.0
        %2626 = vmatpush1.msra.mxu0 0.0
        %2627 = vmatprep.subr.mxu0 0.0
        %2628 = vmatpush1.msra.mxu0 0.0
        %2629 = vmatprep.subr.mxu0 0.0
        %2630 = vmatpush1.msra.mxu0 0.0
        %2631 = vmatprep.subr.mxu0 0.0
        %2632 = vmatpush1.msra.mxu0 0.0
        %2633 = vmatprep.subr.mxu0 0.0
        %2634 = vmatpush1.msra.mxu0 0.0
        %2635 = vmatprep.subr.mxu0 0.0
        %2636 = vmatpush1.msra.mxu0 0.0
        %2637 = vmatprep.subr.mxu0 0.0
        %2638 = vmatpush1.msra.mxu0 0.0
        %2639 = vmatprep.subr.mxu0 0.0
        %2640 = vmatpush1.msra.mxu0 0.0
        %2641 = vmatprep.subr.mxu0 0.0
        %2642 = vmatpush1.msra.mxu0 0.0
        %2643 = vmatprep.subr.mxu0 0.0
        %2644 = vmatpush1.msra.mxu0 0.0
        %2645 = vmatprep.subr.mxu0 0.0
        %2646 = vmatpush1.msra.mxu0 0.0
        %2647 = vmatprep.subr.mxu0 0.0
        %2648 = vmatpush1.msra.mxu0 0.0
        %2649 = vmatprep.subr.mxu0 0.0
        %2650 = vmatpush1.msra.mxu0 0.0
        %2651 = vmatprep.subr.mxu0 0.0
        %2652 = vmatpush1.msra.mxu0 0.0
        %2653 = vmatprep.subr.mxu0 0.0
        %2654 = vmatpush1.msra.mxu0 0.0
        %2655 = vmatprep.subr.mxu0 0.0
        %2656 = vmatpush1.msra.mxu0 0.0
        %2657 = vmatprep.mubr.f32.mxu0 0.0
        %2658 = vmatmul.mubr.f32.gmra.mrb[0].mxu0 %v2591
        %v2659 = vpop.f32.mrb[0].mxu0
        %v2660 = vadd.f32 0.0, %v2659
        %v2661 = vpop.f32.mrb[0].mxu0
        %2662 = vdwg.mxu0
        %v2663 = vsub.f32 %v2585, %v2660
        %v2666 = vunpack.c.l.s4 1966171168
        %v2667 = vunpack.c.0.s8 %v2666
        %v2668 = vlaneseq
        %v2669 = vshrl.u32 %v2668, 7
        %v2670 = vsub.s32 %v2667, %v2669
        %v2671 = vrot.slane %v2663, %v2670
        %v2672 = vcombine.high %v2671, %v2671
        %v2674 = vunpack.c.l.s4 1966171168
        %v2675 = vunpack.c.0.s8 %v2674
        %v2676 = vlaneseq
        %v2677 = vshrl.u32 %v2676, 7
        %v2678 = vsub.s32 %v2675, %v2677
        %v2679 = vrot.slane %v2671, %v2678
        %v2681 = vunpack.c.l.s4 1966171168
        %v2682 = vunpack.c.0.s8 %v2681
        %v2683 = vlaneseq
        %v2684 = vshrl.u32 %v2683, 7
        %v2685 = vsub.s32 %v2682, %v2684
        %v2686 = vrot.slane %v2672, %v2685
        %2689 = vst.msk [vmem:[%s351 + $0x6] sm:$0x1] %vm620, %v2679
        %2690 = vst.msk [vmem:[%s351 + $0xe] sm:$0x1] %vm620, %v2686
        %2691 = vmatprep.subr.mxu0 0.0
        %2692 = vmatpush1.msra.mxu0 %v400
        %2693 = vmatprep.subr.mxu0 0.0
        %2694 = vmatpush1.msra.mxu0 %v401
        %2695 = vmatprep.subr.mxu0 0.0
        %2696 = vmatpush1.msra.mxu0 %v402
        %2697 = vmatprep.subr.mxu0 0.0
        %2698 = vmatpush1.msra.mxu0 %v403
        %2699 = vmatprep.subr.mxu0 0.0
        %2700 = vmatpush1.msra.mxu0 0.0
        %2701 = vmatprep.subr.mxu0 0.0
        %2702 = vmatpush1.msra.mxu0 0.0
        %2703 = vmatprep.subr.mxu0 0.0
        %2704 = vmatpush1.msra.mxu0 0.0
        %2705 = vmatprep.subr.mxu0 0.0
        %2706 = vmatpush1.msra.mxu0 0.0
        %2707 = vmatprep.subr.mxu0 0.0
        %2708 = vmatpush1.msra.mxu0 0.0
        %2709 = vmatprep.subr.mxu0 0.0
        %2710 = vmatpush1.msra.mxu0 0.0
        %2711 = vmatprep.subr.mxu0 0.0
        %2712 = vmatpush1.msra.mxu0 0.0
        %2713 = vmatprep.subr.mxu0 0.0
        %2714 = vmatpush1.msra.mxu0 0.0
        %2715 = vmatprep.subr.mxu0 0.0
        %2716 = vmatpush1.msra.mxu0 0.0
        %2717 = vmatprep.subr.mxu0 0.0
        %2718 = vmatpush1.msra.mxu0 0.0
        %2719 = vmatprep.subr.mxu0 0.0
        %2720 = vmatpush1.msra.mxu0 0.0
        %2721 = vmatprep.subr.mxu0 0.0
        %2722 = vmatpush1.msra.mxu0 0.0
        %2723 = vmatprep.subr.mxu0 0.0
        %2724 = vmatpush1.msra.mxu0 0.0
        %2725 = vmatprep.subr.mxu0 0.0
        %2726 = vmatpush1.msra.mxu0 0.0
        %2727 = vmatprep.subr.mxu0 0.0
        %2728 = vmatpush1.msra.mxu0 0.0
        %2729 = vmatprep.subr.mxu0 0.0
        %2730 = vmatpush1.msra.mxu0 0.0
        %2731 = vmatprep.subr.mxu0 0.0
        %2732 = vmatpush1.msra.mxu0 0.0
        %2733 = vmatprep.subr.mxu0 0.0
        %2734 = vmatpush1.msra.mxu0 0.0
        %2735 = vmatprep.subr.mxu0 0.0
        %2736 = vmatpush1.msra.mxu0 0.0
        %2737 = vmatprep.subr.mxu0 0.0
        %2738 = vmatpush1.msra.mxu0 0.0
        %2739 = vmatprep.subr.mxu0 0.0
        %2740 = vmatpush1.msra.mxu0 0.0
        %2741 = vmatprep.subr.mxu0 0.0
        %2742 = vmatpush1.msra.mxu0 0.0
        %2743 = vmatprep.subr.mxu0 0.0
        %2744 = vmatpush1.msra.mxu0 0.0
        %2745 = vmatprep.subr.mxu0 0.0
        %2746 = vmatpush1.msra.mxu0 0.0
        %2747 = vmatprep.subr.mxu0 0.0
        %2748 = vmatpush1.msra.mxu0 0.0
        %2749 = vmatprep.subr.mxu0 0.0
        %2750 = vmatpush1.msra.mxu0 0.0
        %2751 = vmatprep.subr.mxu0 0.0
        %2752 = vmatpush1.msra.mxu0 0.0
        %2753 = vmatprep.subr.mxu0 0.0
        %2754 = vmatpush1.msra.mxu0 0.0
        %2755 = vmatprep.mubr.f32.mxu0 0.0
        %2756 = vmatmul.mubr.f32.gmra.mrb[0].mxu0 %v2591
        %v2757 = vpop.f32.mrb[0].mxu0
        %v2758 = vadd.f32 0.0, %v2757
        %v2759 = vpop.f32.mrb[0].mxu0
        %2760 = vdwg.mxu0
        %2761 = vmatprep.subr.mxu0 0.0
        %2762 = vmatpush1.msra.mxu0 %v432
        %2763 = vmatprep.subr.mxu0 0.0
        %2764 = vmatpush1.msra.mxu0 %v433
        %2765 = vmatprep.subr.mxu0 0.0
        %2766 = vmatpush1.msra.mxu0 %v434
        %2767 = vmatprep.subr.mxu0 0.0
        %2768 = vmatpush1.msra.mxu0 %v435
        %2769 = vmatprep.subr.mxu0 0.0
        %2770 = vmatpush1.msra.mxu0 0.0
        %2771 = vmatprep.subr.mxu0 0.0
        %2772 = vmatpush1.msra.mxu0 0.0
        %2773 = vmatprep.subr.mxu0 0.0
        %2774 = vmatpush1.msra.mxu0 0.0
        %2775 = vmatprep.subr.mxu0 0.0
        %2776 = vmatpush1.msra.mxu0 0.0
        %2777 = vmatprep.subr.mxu0 0.0
        %2778 = vmatpush1.msra.mxu0 0.0
        %2779 = vmatprep.subr.mxu0 0.0
        %2780 = vmatpush1.msra.mxu0 0.0
        %2781 = vmatprep.subr.mxu0 0.0
        %2782 = vmatpush1.msra.mxu0 0.0
        %2783 = vmatprep.subr.mxu0 0.0
        %2784 = vmatpush1.msra.mxu0 0.0
        %2785 = vmatprep.subr.mxu0 0.0
        %2786 = vmatpush1.msra.mxu0 0.0
        %2787 = vmatprep.subr.mxu0 0.0
        %2788 = vmatpush1.msra.mxu0 0.0
        %2789 = vmatprep.subr.mxu0 0.0
        %2790 = vmatpush1.msra.mxu0 0.0
        %2791 = vmatprep.subr.mxu0 0.0
        %2792 = vmatpush1.msra.mxu0 0.0
        %2793 = vmatprep.subr.mxu0 0.0
        %2794 = vmatpush1.msra.mxu0 0.0
        %2795 = vmatprep.subr.mxu0 0.0
        %2796 = vmatpush1.msra.mxu0 0.0
        %2797 = vmatprep.subr.mxu0 0.0
        %2798 = vmatpush1.msra.mxu0 0.0
        %2799 = vmatprep.subr.mxu0 0.0
        %2800 = vmatpush1.msra.mxu0 0.0
        %2801 = vmatprep.subr.mxu0 0.0
        %2802 = vmatpush1.msra.mxu0 0.0
        %2803 = vmatprep.subr.mxu0 0.0
        %2804 = vmatpush1.msra.mxu0 0.0
        %2805 = vmatprep.subr.mxu0 0.0
        %2806 = vmatpush1.msra.mxu0 0.0
        %2807 = vmatprep.subr.mxu0 0.0
        %2808 = vmatpush1.msra.mxu0 0.0
        %2809 = vmatprep.subr.mxu0 0.0
        %2810 = vmatpush1.msra.mxu0 0.0
        %2811 = vmatprep.subr.mxu0 0.0
        %2812 = vmatpush1.msra.mxu0 0.0
        %2813 = vmatprep.subr.mxu0 0.0
        %2814 = vmatpush1.msra.mxu0 0.0
        %2815 = vmatprep.subr.mxu0 0.0
        %2816 = vmatpush1.msra.mxu0 0.0
        %2817 = vmatprep.subr.mxu0 0.0
        %2818 = vmatpush1.msra.mxu0 0.0
        %2819 = vmatprep.subr.mxu0 0.0
        %2820 = vmatpush1.msra.mxu0 0.0
        %2821 = vmatprep.subr.mxu0 0.0
        %2822 = vmatpush1.msra.mxu0 0.0
        %2823 = vmatprep.subr.mxu0 0.0
        %2824 = vmatpush1.msra.mxu0 0.0
        %2825 = vmatprep.mubr.f32.mxu0 0.0
        %2826 = vmatmul.mubr.f32.gmra.mrb[0].mxu0 %v2516
        %v2827 = vpop.f32.mrb[0].mxu0
        %v2828 = vadd.f32 %v2758, %v2827
        %v2829 = vpop.f32.mrb[0].mxu0
        %2830 = vdwg.mxu0
        %v2833 = vunpack.c.l.s4 1966171168
        %v2834 = vunpack.c.0.s8 %v2833
        %v2835 = vlaneseq
        %v2836 = vshrl.u32 %v2835, 7
        %v2837 = vsub.s32 %v2834, %v2836
        %v2838 = vrot.slane %v2828, %v2837
        %v2839 = vcombine.high %v2838, %v2838
        %v2841 = vunpack.c.l.s4 1966171168
        %v2842 = vunpack.c.0.s8 %v2841
        %v2843 = vlaneseq
        %v2844 = vshrl.u32 %v2843, 7
        %v2845 = vsub.s32 %v2842, %v2844
        %v2846 = vrot.slane %v2838, %v2845
        %v2848 = vunpack.c.l.s4 1966171168
        %v2849 = vunpack.c.0.s8 %v2848
        %v2850 = vlaneseq
        %v2851 = vshrl.u32 %v2850, 7
        %v2852 = vsub.s32 %v2849, %v2851
        %v2853 = vrot.slane %v2839, %v2852
        %2856 = vst.msk [vmem:[%s357 + $0x6] sm:$0x1] %vm620, %v2846
        %2857 = vst.msk [vmem:[%s357 + $0xe] sm:$0x1] %vm620, %v2853
        %v2858 = vrot.slane %v372, 7
        %v2859 = vrot.slane %v373, 6
        %v2860 = vsel %vm443, %v2859, %v2858
        %v2861 = vsel %vm445, %v2860, 0
        %2863 = vmatprep.subr.mxu0 0.0
        %2864 = vmatpush1.msra.mxu0 %v404
        %2865 = vmatprep.subr.mxu0 0.0
        %2866 = vmatpush1.msra.mxu0 %v405
        %2867 = vmatprep.subr.mxu0 0.0
        %2868 = vmatpush1.msra.mxu0 %v406
        %2869 = vmatprep.subr.mxu0 0.0
        %2870 = vmatpush1.msra.mxu0 %v407
        %2871 = vmatprep.subr.mxu0 0.0
        %2872 = vmatpush1.msra.mxu0 0.0
        %2873 = vmatprep.subr.mxu0 0.0
        %2874 = vmatpush1.msra.mxu0 0.0
        %2875 = vmatprep.subr.mxu0 0.0
        %2876 = vmatpush1.msra.mxu0 0.0
        %2877 = vmatprep.subr.mxu0 0.0
        %2878 = vmatpush1.msra.mxu0 0.0
        %2879 = vmatprep.subr.mxu0 0.0
        %2880 = vmatpush1.msra.mxu0 0.0
        %2881 = vmatprep.subr.mxu0 0.0
        %2882 = vmatpush1.msra.mxu0 0.0
        %2883 = vmatprep.subr.mxu0 0.0
        %2884 = vmatpush1.msra.mxu0 0.0
        %2885 = vmatprep.subr.mxu0 0.0
        %2886 = vmatpush1.msra.mxu0 0.0
        %2887 = vmatprep.subr.mxu0 0.0
        %2888 = vmatpush1.msra.mxu0 0.0
        %2889 = vmatprep.subr.mxu0 0.0
        %2890 = vmatpush1.msra.mxu0 0.0
        %2891 = vmatprep.subr.mxu0 0.0
        %2892 = vmatpush1.msra.mxu0 0.0
        %2893 = vmatprep.subr.mxu0 0.0
        %2894 = vmatpush1.msra.mxu0 0.0
        %2895 = vmatprep.subr.mxu0 0.0
        %2896 = vmatpush1.msra.mxu0 0.0
        %2897 = vmatprep.subr.mxu0 0.0
        %2898 = vmatpush1.msra.mxu0 0.0
        %2899 = vmatprep.subr.mxu0 0.0
        %2900 = vmatpush1.msra.mxu0 0.0
        %2901 = vmatprep.subr.mxu0 0.0
        %2902 = vmatpush1.msra.mxu0 0.0
        %2903 = vmatprep.subr.mxu0 0.0
        %2904 = vmatpush1.msra.mxu0 0.0
        %2905 = vmatprep.subr.mxu0 0.0
        %2906 = vmatpush1.msra.mxu0 0.0
        %2907 = vmatprep.subr.mxu0 0.0
        %2908 = vmatpush1.msra.mxu0 0.0
        %2909 = vmatprep.subr.mxu0 0.0
        %2910 = vmatpush1.msra.mxu0 0.0
        %2911 = vmatprep.subr.mxu0 0.0
        %2912 = vmatpush1.msra.mxu0 0.0
        %2913 = vmatprep.subr.mxu0 0.0
        %2914 = vmatpush1.msra.mxu0 0.0
        %2915 = vmatprep.subr.mxu0 0.0
        %2916 = vmatpush1.msra.mxu0 0.0
        %2917 = vmatprep.subr.mxu0 0.0
        %2918 = vmatpush1.msra.mxu0 0.0
        %2919 = vmatprep.subr.mxu0 0.0
        %2920 = vmatpush1.msra.mxu0 0.0
        %2921 = vmatprep.subr.mxu0 0.0
        %2922 = vmatpush1.msra.mxu0 0.0
        %2923 = vmatprep.subr.mxu0 0.0
        %2924 = vmatpush1.msra.mxu0 0.0
        %2925 = vmatprep.subr.mxu0 0.0
        %2926 = vmatpush1.msra.mxu0 0.0
        %2927 = vmatprep.mubr.f32.mxu0 0.0
        %2928 = vmatmul.mubr.f32.gmra.mrb[0].mxu0 %v2861
        %v2929 = vpop.f32.mrb[0].mxu0
        %v2930 = vadd.f32 0.0, %v2929
        %v2931 = vpop.f32.mrb[0].mxu0
        %2932 = vdwg.mxu0
        %v2933 = vrot.slane %v374, 7
        %v2934 = vrot.slane %v375, 6
        %v2935 = vsel %vm443, %v2934, %v2933
        %v2936 = vsel %vm445, %v2935, 0
        %2938 = vmatprep.subr.mxu0 0.0
        %2939 = vmatpush1.msra.mxu0 %v436
        %2940 = vmatprep.subr.mxu0 0.0
        %2941 = vmatpush1.msra.mxu0 %v437
        %2942 = vmatprep.subr.mxu0 0.0
        %2943 = vmatpush1.msra.mxu0 %v438
        %2944 = vmatprep.subr.mxu0 0.0
        %2945 = vmatpush1.msra.mxu0 %v439
        %2946 = vmatprep.subr.mxu0 0.0
        %2947 = vmatpush1.msra.mxu0 0.0
        %2948 = vmatprep.subr.mxu0 0.0
        %2949 = vmatpush1.msra.mxu0 0.0
        %2950 = vmatprep.subr.mxu0 0.0
        %2951 = vmatpush1.msra.mxu0 0.0
        %2952 = vmatprep.subr.mxu0 0.0
        %2953 = vmatpush1.msra.mxu0 0.0
        %2954 = vmatprep.subr.mxu0 0.0
        %2955 = vmatpush1.msra.mxu0 0.0
        %2956 = vmatprep.subr.mxu0 0.0
        %2957 = vmatpush1.msra.mxu0 0.0
        %2958 = vmatprep.subr.mxu0 0.0
        %2959 = vmatpush1.msra.mxu0 0.0
        %2960 = vmatprep.subr.mxu0 0.0
        %2961 = vmatpush1.msra.mxu0 0.0
        %2962 = vmatprep.subr.mxu0 0.0
        %2963 = vmatpush1.msra.mxu0 0.0
        %2964 = vmatprep.subr.mxu0 0.0
        %2965 = vmatpush1.msra.mxu0 0.0
        %2966 = vmatprep.subr.mxu0 0.0
        %2967 = vmatpush1.msra.mxu0 0.0
        %2968 = vmatprep.subr.mxu0 0.0
        %2969 = vmatpush1.msra.mxu0 0.0
        %2970 = vmatprep.subr.mxu0 0.0
        %2971 = vmatpush1.msra.mxu0 0.0
        %2972 = vmatprep.subr.mxu0 0.0
        %2973 = vmatpush1.msra.mxu0 0.0
        %2974 = vmatprep.subr.mxu0 0.0
        %2975 = vmatpush1.msra.mxu0 0.0
        %2976 = vmatprep.subr.mxu0 0.0
        %2977 = vmatpush1.msra.mxu0 0.0
        %2978 = vmatprep.subr.mxu0 0.0
        %2979 = vmatpush1.msra.mxu0 0.0
        %2980 = vmatprep.subr.mxu0 0.0
        %2981 = vmatpush1.msra.mxu0 0.0
        %2982 = vmatprep.subr.mxu0 0.0
        %2983 = vmatpush1.msra.mxu0 0.0
        %2984 = vmatprep.subr.mxu0 0.0
        %2985 = vmatpush1.msra.mxu0 0.0
        %2986 = vmatprep.subr.mxu0 0.0
        %2987 = vmatpush1.msra.mxu0 0.0
        %2988 = vmatprep.subr.mxu0 0.0
        %2989 = vmatpush1.msra.mxu0 0.0
        %2990 = vmatprep.subr.mxu0 0.0
        %2991 = vmatpush1.msra.mxu0 0.0
        %2992 = vmatprep.subr.mxu0 0.0
        %2993 = vmatpush1.msra.mxu0 0.0
        %2994 = vmatprep.subr.mxu0 0.0
        %2995 = vmatpush1.msra.mxu0 0.0
        %2996 = vmatprep.subr.mxu0 0.0
        %2997 = vmatpush1.msra.mxu0 0.0
        %2998 = vmatprep.subr.mxu0 0.0
        %2999 = vmatpush1.msra.mxu0 0.0
        %3000 = vmatprep.subr.mxu0 0.0
        %3001 = vmatpush1.msra.mxu0 0.0
        %3002 = vmatprep.mubr.f32.mxu0 0.0
        %3003 = vmatmul.mubr.f32.gmra.mrb[0].mxu0 %v2936
        %v3004 = vpop.f32.mrb[0].mxu0
        %v3005 = vadd.f32 0.0, %v3004
        %v3006 = vpop.f32.mrb[0].mxu0
        %3007 = vdwg.mxu0
        %v3008 = vsub.f32 %v2930, %v3005
        %v3011 = vunpack.c.l.s4 1966171168
        %v3012 = vunpack.c.0.s8 %v3011
        %v3013 = vlaneseq
        %v3014 = vshrl.u32 %v3013, 7
        %v3015 = vsub.s32 %v3012, %v3014
        %v3016 = vrot.slane %v3008, %v3015
        %v3017 = vcombine.high %v3016, %v3016
        %v3019 = vunpack.c.l.s4 1966171168
        %v3020 = vunpack.c.0.s8 %v3019
        %v3021 = vlaneseq
        %v3022 = vshrl.u32 %v3021, 7
        %v3023 = vsub.s32 %v3020, %v3022
        %v3024 = vrot.slane %v3016, %v3023
        %v3026 = vunpack.c.l.s4 1966171168
        %v3027 = vunpack.c.0.s8 %v3026
        %v3028 = vlaneseq
        %v3029 = vshrl.u32 %v3028, 7
        %v3030 = vsub.s32 %v3027, %v3029
        %v3031 = vrot.slane %v3017, %v3030
        %3034 = vst.msk [vmem:[%s351 + $0x7] sm:$0x1] %vm620, %v3024
        %3035 = vst.msk [vmem:[%s351 + $0xf] sm:$0x1] %vm620, %v3031
        %3036 = vmatprep.subr.mxu0 0.0
        %3037 = vmatpush1.msra.mxu0 %v404
        %3038 = vmatprep.subr.mxu0 0.0
        %3039 = vmatpush1.msra.mxu0 %v405
        %3040 = vmatprep.subr.mxu0 0.0
        %3041 = vmatpush1.msra.mxu0 %v406
        %3042 = vmatprep.subr.mxu0 0.0
        %3043 = vmatpush1.msra.mxu0 %v407
        %3044 = vmatprep.subr.mxu0 0.0
        %3045 = vmatpush1.msra.mxu0 0.0
        %3046 = vmatprep.subr.mxu0 0.0
        %3047 = vmatpush1.msra.mxu0 0.0
        %3048 = vmatprep.subr.mxu0 0.0
        %3049 = vmatpush1.msra.mxu0 0.0
        %3050 = vmatprep.subr.mxu0 0.0
        %3051 = vmatpush1.msra.mxu0 0.0
        %3052 = vmatprep.subr.mxu0 0.0
        %3053 = vmatpush1.msra.mxu0 0.0
        %3054 = vmatprep.subr.mxu0 0.0
        %3055 = vmatpush1.msra.mxu0 0.0
        %3056 = vmatprep.subr.mxu0 0.0
        %3057 = vmatpush1.msra.mxu0 0.0
        %3058 = vmatprep.subr.mxu0 0.0
        %3059 = vmatpush1.msra.mxu0 0.0
        %3060 = vmatprep.subr.mxu0 0.0
        %3061 = vmatpush1.msra.mxu0 0.0
        %3062 = vmatprep.subr.mxu0 0.0
        %3063 = vmatpush1.msra.mxu0 0.0
        %3064 = vmatprep.subr.mxu0 0.0
        %3065 = vmatpush1.msra.mxu0 0.0
        %3066 = vmatprep.subr.mxu0 0.0
        %3067 = vmatpush1.msra.mxu0 0.0
        %3068 = vmatprep.subr.mxu0 0.0
        %3069 = vmatpush1.msra.mxu0 0.0
        %3070 = vmatprep.subr.mxu0 0.0
        %3071 = vmatpush1.msra.mxu0 0.0
        %3072 = vmatprep.subr.mxu0 0.0
        %3073 = vmatpush1.msra.mxu0 0.0
        %3074 = vmatprep.subr.mxu0 0.0
        %3075 = vmatpush1.msra.mxu0 0.0
        %3076 = vmatprep.subr.mxu0 0.0
        %3077 = vmatpush1.msra.mxu0 0.0
        %3078 = vmatprep.subr.mxu0 0.0
        %3079 = vmatpush1.msra.mxu0 0.0
        %3080 = vmatprep.subr.mxu0 0.0
        %3081 = vmatpush1.msra.mxu0 0.0
        %3082 = vmatprep.subr.mxu0 0.0
        %3083 = vmatpush1.msra.mxu0 0.0
        %3084 = vmatprep.subr.mxu0 0.0
        %3085 = vmatpush1.msra.mxu0 0.0
        %3086 = vmatprep.subr.mxu0 0.0
        %3087 = vmatpush1.msra.mxu0 0.0
        %3088 = vmatprep.subr.mxu0 0.0
        %3089 = vmatpush1.msra.mxu0 0.0
        %3090 = vmatprep.subr.mxu0 0.0
        %3091 = vmatpush1.msra.mxu0 0.0
        %3092 = vmatprep.subr.mxu0 0.0
        %3093 = vmatpush1.msra.mxu0 0.0
        %3094 = vmatprep.subr.mxu0 0.0
        %3095 = vmatpush1.msra.mxu0 0.0
        %3096 = vmatprep.subr.mxu0 0.0
        %3097 = vmatpush1.msra.mxu0 0.0
        %3098 = vmatprep.subr.mxu0 0.0
        %3099 = vmatpush1.msra.mxu0 0.0
        %3100 = vmatprep.mubr.f32.mxu0 0.0
        %3101 = vmatmul.mubr.f32.gmra.mrb[0].mxu0 %v2936
        %v3102 = vpop.f32.mrb[0].mxu0
        %v3103 = vadd.f32 0.0, %v3102
        %v3104 = vpop.f32.mrb[0].mxu0
        %3105 = vdwg.mxu0
        %3106 = vmatprep.subr.mxu0 0.0
        %3107 = vmatpush1.msra.mxu0 %v436
        %3108 = vmatprep.subr.mxu0 0.0
        %3109 = vmatpush1.msra.mxu0 %v437
        %3110 = vmatprep.subr.mxu0 0.0
        %3111 = vmatpush1.msra.mxu0 %v438
        %3112 = vmatprep.subr.mxu0 0.0
        %3113 = vmatpush1.msra.mxu0 %v439
        %3114 = vmatprep.subr.mxu0 0.0
        %3115 = vmatpush1.msra.mxu0 0.0
        %3116 = vmatprep.subr.mxu0 0.0
        %3117 = vmatpush1.msra.mxu0 0.0
        %3118 = vmatprep.subr.mxu0 0.0
        %3119 = vmatpush1.msra.mxu0 0.0
        %3120 = vmatprep.subr.mxu0 0.0
        %3121 = vmatpush1.msra.mxu0 0.0
        %3122 = vmatprep.subr.mxu0 0.0
        %3123 = vmatpush1.msra.mxu0 0.0
        %3124 = vmatprep.subr.mxu0 0.0
        %3125 = vmatpush1.msra.mxu0 0.0
        %3126 = vmatprep.subr.mxu0 0.0
        %3127 = vmatpush1.msra.mxu0 0.0
        %3128 = vmatprep.subr.mxu0 0.0
        %3129 = vmatpush1.msra.mxu0 0.0
        %3130 = vmatprep.subr.mxu0 0.0
        %3131 = vmatpush1.msra.mxu0 0.0
        %3132 = vmatprep.subr.mxu0 0.0
        %3133 = vmatpush1.msra.mxu0 0.0
        %3134 = vmatprep.subr.mxu0 0.0
        %3135 = vmatpush1.msra.mxu0 0.0
        %3136 = vmatprep.subr.mxu0 0.0
        %3137 = vmatpush1.msra.mxu0 0.0
        %3138 = vmatprep.subr.mxu0 0.0
        %3139 = vmatpush1.msra.mxu0 0.0
        %3140 = vmatprep.subr.mxu0 0.0
        %3141 = vmatpush1.msra.mxu0 0.0
        %3142 = vmatprep.subr.mxu0 0.0
        %3143 = vmatpush1.msra.mxu0 0.0
        %3144 = vmatprep.subr.mxu0 0.0
        %3145 = vmatpush1.msra.mxu0 0.0
        %3146 = vmatprep.subr.mxu0 0.0
        %3147 = vmatpush1.msra.mxu0 0.0
        %3148 = vmatprep.subr.mxu0 0.0
        %3149 = vmatpush1.msra.mxu0 0.0
        %3150 = vmatprep.subr.mxu0 0.0
        %3151 = vmatpush1.msra.mxu0 0.0
        %3152 = vmatprep.subr.mxu0 0.0
        %3153 = vmatpush1.msra.mxu0 0.0
        %3154 = vmatprep.subr.mxu0 0.0
        %3155 = vmatpush1.msra.mxu0 0.0
        %3156 = vmatprep.subr.mxu0 0.0
        %3157 = vmatpush1.msra.mxu0 0.0
        %3158 = vmatprep.subr.mxu0 0.0
        %3159 = vmatpush1.msra.mxu0 0.0
        %3160 = vmatprep.subr.mxu0 0.0
        %3161 = vmatpush1.msra.mxu0 0.0
        %3162 = vmatprep.subr.mxu0 0.0
        %3163 = vmatpush1.msra.mxu0 0.0
        %3164 = vmatprep.subr.mxu0 0.0
        %3165 = vmatpush1.msra.mxu0 0.0
        %3166 = vmatprep.subr.mxu0 0.0
        %3167 = vmatpush1.msra.mxu0 0.0
        %3168 = vmatprep.subr.mxu0 0.0
        %3169 = vmatpush1.msra.mxu0 0.0
        %3170 = vmatprep.mubr.f32.mxu0 0.0
        %3171 = vmatmul.mubr.f32.gmra.mrb[0].mxu0 %v2861
        %v3172 = vpop.f32.mrb[0].mxu0
        %v3173 = vadd.f32 %v3103, %v3172
        %v3174 = vpop.f32.mrb[0].mxu0
        %3175 = vdwg.mxu0
        %v3178 = vunpack.c.l.s4 1966171168
        %v3179 = vunpack.c.0.s8 %v3178
        %v3180 = vlaneseq
        %v3181 = vshrl.u32 %v3180, 7
        %v3182 = vsub.s32 %v3179, %v3181
        %v3183 = vrot.slane %v3173, %v3182
        %v3184 = vcombine.high %v3183, %v3183
        %v3186 = vunpack.c.l.s4 1966171168
        %v3187 = vunpack.c.0.s8 %v3186
        %v3188 = vlaneseq
        %v3189 = vshrl.u32 %v3188, 7
        %v3190 = vsub.s32 %v3187, %v3189
        %v3191 = vrot.slane %v3183, %v3190
        %v3193 = vunpack.c.l.s4 1966171168
        %v3194 = vunpack.c.0.s8 %v3193
        %v3195 = vlaneseq
        %v3196 = vshrl.u32 %v3195, 7
        %v3197 = vsub.s32 %v3194, %v3196
        %v3198 = vrot.slane %v3184, %v3197
        %3201 = vst.msk [vmem:[%s357 + $0x7] sm:$0x1] %vm620, %v3191
        %3202 = vst.msk [vmem:[%s357 + $0xf] sm:$0x1] %vm620, %v3198
        %s3203 = sand.u32 %s129, 1
        %s3204 = sand.u32 %s129, 1
        %s3205 = smul.addr %s3204, 16
        %s3206 = scalar_lea.vmem [#allocation4], %s3205
        %s3207 = sand.u32 %s155, 1
        %s3208 = sand.u32 %s155, 1
        %s3209 = smul.addr %s3208, 16
        %s3210 = scalar_lea.vmem [#allocation5], %s3209
        // Predicated region
        $region113: #{_lambda_.7} parent=103 // pred_check
          %p3211 = pneg %p139
        $region114: #{_lambda_.7} parent=103 // pred_check_branch
          %3213 = sbr.rel (%p3211) target = $region116
        $region115: #{_lambda_.7} parent=103 // pred_region
          %s3214 = smul.addr %s17, 8
          %s3215 = scalar_lea.vmem %s4, %s3214
          // Predicated region
          $region117: #{_lambda_.7} parent=115 // pred_check
            _
          $region118: #{_lambda_.7} parent=115 // pred_check_branch
            %3217 = sbr.rel (0) target = $region120
          $region119: #{_lambda_.7} parent=115 // pred_region
            // Predicated region
            $region121: #{_lambda_.7} parent=119 // pred_check
              _
            $region122: #{_lambda_.7} parent=119 // pred_check_branch
              %3219 = sbr.rel (0) target = $region124
            $region123: #{_lambda_.7} parent=119 // pred_region
              // Predicated region
              $region136: #{_lambda_.7} parent=123 // pred_check
                _
              $region137: #{_lambda_.7} parent=123 // pred_check_branch
                %3236 = sbr.rel (0) target = $region139
              $region138: #{_lambda_.7} parent=123 // pred_region
                loop: start=0, step=1, limit=1
                $region140: #{_lambda_.7} parent=138 // loop_pre_header
                  _
                $region141: #{_lambda_.7} parent=138 // loop_header
                  %s3238 = sphi 0, %s3242
                  %p3239 = scmp.ge.s32.totalorder %s3238, 1
                  %s3243 = sphi %s3206, %s3206
                  %s3244 = sphi %s3215, %s3215
                $region142: #{_lambda_.7} parent=138 // loop_header_branch
                  %3241 = sbr.rel (%p3239) target = $region146
                $region143: #{_lambda_.7} parent=138 // loop_body
                  %v3245 = vld [vmem:[%s3243] sm:$0xff]
                  %3246 = vst [vmem:[%s3244] sm:$0xff] %v3245
                  %v3247 = vld [vmem:[%s3243 + $0x8] sm:$0xff]
                  %3248 = vst [vmem:[%s3244 + $0x10] sm:$0xff] %v3247
                $region144: #{_lambda_.7} parent=138 // loop_footer
                  %s3242 = sadd.s32 1, %s3238
                $region145: #{_lambda_.7} parent=138 // loop_footer_branch
                  %3237 = sbr.rel target = $region141
                $region146: #{_lambda_.7} parent=138 // loop_exit
                  _
              $region139: #{_lambda_.7} parent=123 // pred_fallthru
                _
              // Predicated region
              $region147: #{_lambda_.7} parent=123 // pred_check
                _
              $region148: #{_lambda_.7} parent=123 // pred_check_branch
                %3250 = sbr.rel target = $region150
              $region149: #{_lambda_.7} parent=123 // pred_region
                _
              $region150: #{_lambda_.7} parent=123 // pred_fallthru
                _
            $region124: #{_lambda_.7} parent=119 // pred_fallthru
              _
            // Predicated region
            $region125: #{_lambda_.7} parent=119 // pred_check
              _
            $region126: #{_lambda_.7} parent=119 // pred_check_branch
              %3221 = sbr.rel target = $region128
            $region127: #{_lambda_.7} parent=119 // pred_region
              loop: start=0, step=1, limit=1
              $region129: #{_lambda_.7} parent=127 // loop_pre_header
                _
              $region130: #{_lambda_.7} parent=127 // loop_header
                %s3224 = sphi 0, %s3228
                %p3225 = scmp.ge.s32.totalorder %s3224, 1
                %s3229 = sphi %s3206, %s3206
                %s3230 = sphi %s3215, %s3215
              $region131: #{_lambda_.7} parent=127 // loop_header_branch
                %3227 = sbr.rel (%p3225) target = $region135
              $region132: #{_lambda_.7} parent=127 // loop_body
                %v3231 = vld [vmem:[%s3229] sm:$0xff]
                %3232 = vst [vmem:[%s3230] sm:$0xff] %v3231
                %v3233 = vld [vmem:[%s3229 + $0x8] sm:$0xff]
                %3234 = vst [vmem:[%s3230 + $0x10] sm:$0xff] %v3233
              $region133: #{_lambda_.7} parent=127 // loop_footer
                %s3228 = sadd.s32 1, %s3224
              $region134: #{_lambda_.7} parent=127 // loop_footer_branch
                %3223 = sbr.rel target = $region130
              $region135: #{_lambda_.7} parent=127 // loop_exit
                _
            $region128: #{_lambda_.7} parent=119 // pred_fallthru
              _
          $region120: #{_lambda_.7} parent=115 // pred_fallthru
            _
          %3251 = vnop
        $region116: #{_lambda_.7} parent=103 // pred_fallthru
          _
        // Predicated region
        $region151: #{_lambda_.7} parent=103 // pred_check
          %p3252 = pneg %p165
        $region152: #{_lambda_.7} parent=103 // pred_check_branch
          %3254 = sbr.rel (%p3252) target = $region154
        $region153: #{_lambda_.7} parent=103 // pred_region
          %s3255 = smul.addr %s17, 8
          %s3256 = scalar_lea.vmem %s5, %s3255
          // Predicated region
          $region155: #{_lambda_.7} parent=153 // pred_check
            _
          $region156: #{_lambda_.7} parent=153 // pred_check_branch
            %3258 = sbr.rel (0) target = $region158
          $region157: #{_lambda_.7} parent=153 // pred_region
            // Predicated region
            $region159: #{_lambda_.7} parent=157 // pred_check
              _
            $region160: #{_lambda_.7} parent=157 // pred_check_branch
              %3260 = sbr.rel (0) target = $region162
            $region161: #{_lambda_.7} parent=157 // pred_region
              // Predicated region
              $region174: #{_lambda_.7} parent=161 // pred_check
                _
              $region175: #{_lambda_.7} parent=161 // pred_check_branch
                %3277 = sbr.rel (0) target = $region177
              $region176: #{_lambda_.7} parent=161 // pred_region
                loop: start=0, step=1, limit=1
                $region178: #{_lambda_.7} parent=176 // loop_pre_header
                  _
                $region179: #{_lambda_.7} parent=176 // loop_header
                  %s3279 = sphi 0, %s3283
                  %p3280 = scmp.ge.s32.totalorder %s3279, 1
                  %s3284 = sphi %s3210, %s3210
                  %s3285 = sphi %s3256, %s3256
                $region180: #{_lambda_.7} parent=176 // loop_header_branch
                  %3282 = sbr.rel (%p3280) target = $region184
                $region181: #{_lambda_.7} parent=176 // loop_body
                  %v3286 = vld [vmem:[%s3284] sm:$0xff]
                  %3287 = vst [vmem:[%s3285] sm:$0xff] %v3286
                  %v3288 = vld [vmem:[%s3284 + $0x8] sm:$0xff]
                  %3289 = vst [vmem:[%s3285 + $0x10] sm:$0xff] %v3288
                $region182: #{_lambda_.7} parent=176 // loop_footer
                  %s3283 = sadd.s32 1, %s3279
                $region183: #{_lambda_.7} parent=176 // loop_footer_branch
                  %3278 = sbr.rel target = $region179
                $region184: #{_lambda_.7} parent=176 // loop_exit
                  _
              $region177: #{_lambda_.7} parent=161 // pred_fallthru
                _
              // Predicated region
              $region185: #{_lambda_.7} parent=161 // pred_check
                _
              $region186: #{_lambda_.7} parent=161 // pred_check_branch
                %3291 = sbr.rel target = $region188
              $region187: #{_lambda_.7} parent=161 // pred_region
                _
              $region188: #{_lambda_.7} parent=161 // pred_fallthru
                _
            $region162: #{_lambda_.7} parent=157 // pred_fallthru
              _
            // Predicated region
            $region163: #{_lambda_.7} parent=157 // pred_check
              _
            $region164: #{_lambda_.7} parent=157 // pred_check_branch
              %3262 = sbr.rel target = $region166
            $region165: #{_lambda_.7} parent=157 // pred_region
              loop: start=0, step=1, limit=1
              $region167: #{_lambda_.7} parent=165 // loop_pre_header
                _
              $region168: #{_lambda_.7} parent=165 // loop_header
                %s3265 = sphi 0, %s3269
                %p3266 = scmp.ge.s32.totalorder %s3265, 1
                %s3270 = sphi %s3210, %s3210
                %s3271 = sphi %s3256, %s3256
              $region169: #{_lambda_.7} parent=165 // loop_header_branch
                %3268 = sbr.rel (%p3266) target = $region173
              $region170: #{_lambda_.7} parent=165 // loop_body
                %v3272 = vld [vmem:[%s3270] sm:$0xff]
                %3273 = vst [vmem:[%s3271] sm:$0xff] %v3272
                %v3274 = vld [vmem:[%s3270 + $0x8] sm:$0xff]
                %3275 = vst [vmem:[%s3271 + $0x10] sm:$0xff] %v3274
              $region171: #{_lambda_.7} parent=165 // loop_footer
                %s3269 = sadd.s32 1, %s3265
              $region172: #{_lambda_.7} parent=165 // loop_footer_branch
                %3264 = sbr.rel target = $region168
              $region173: #{_lambda_.7} parent=165 // loop_exit
                _
            $region166: #{_lambda_.7} parent=157 // pred_fallthru
              _
          $region158: #{_lambda_.7} parent=153 // pred_fallthru
            _
          %3292 = vnop
        $region154: #{_lambda_.7} parent=103 // pred_fallthru
          _
      $region104: #{_lambda_.7} parent=5 // pred_fallthru
        _
      %p3293 = scmp.le.s32.totalorder 2, %s12
      // Predicated region
      $region189: #{_lambda_.7} parent=5 // pred_check
        %p3294 = pneg %p3293
      $region190: #{_lambda_.7} parent=5 // pred_check_branch
        %3296 = sbr.rel (%p3294) target = $region192
      $region191: #{_lambda_.7} parent=5 // pred_region
        %s3297 = ssub.s32 %s12, 2
        // Predicated region
        $region193: #{_lambda_.7} parent=191 // pred_check
          %p3298 = pneg %p145
        $region194: #{_lambda_.7} parent=191 // pred_check_branch
          %3300 = sbr.rel (%p3298) target = $region196
        $region195: #{_lambda_.7} parent=191 // pred_region
          %s3301 = sand.u32 %s130, 1
          %s3302 = sand.u32 %s130, 1
          %s3303 = smul.addr %s3302, 16
          %s3304 = scalar_lea.vmem [#allocation4], %s3303
        $region196: #{_lambda_.7} parent=191 // pred_fallthru
          _
        // Predicated region
        $region197: #{_lambda_.7} parent=191 // pred_check
          %p3305 = pneg %p171
        $region198: #{_lambda_.7} parent=191 // pred_check_branch
          %3307 = sbr.rel (%p3305) target = $region200
        $region199: #{_lambda_.7} parent=191 // pred_region
          %s3308 = sand.u32 %s156, 1
          %s3309 = sand.u32 %s156, 1
          %s3310 = smul.addr %s3309, 16
          %s3311 = scalar_lea.vmem [#allocation5], %s3310
        $region200: #{_lambda_.7} parent=191 // pred_fallthru
          _
      $region192: #{_lambda_.7} parent=5 // pred_fallthru
        _
    $region6: #{_lambda_.7} parent=1 // loop_footer
      %s16 = sadd.s32 1, %s12
    $region7: #{_lambda_.7} parent=1 // loop_footer_branch
      %11 = sbr.rel target = $region3
    $region8: #{_lambda_.7} parent=1 // loop_exit
      _

// kernel: _lambda_.8
$region0: #{_lambda_.8}
  #allocation0 [shape = 'u32[]', space=smem, size = 0x4, offset = 0x4, fixed_abs, tag = 'smem constant byte address 0x4 - core index']
  #allocation1 [shape = 'u32[144,128]{1,0:T(1,128)}', space=vmem, size = 0x12000, scoped, tag = 'internal scratch']
  %s0 = inlined_call_operand.vmem [shape: f32[512,32], index: 0, kind: input, shape index: {}]
  %s1 = inlined_call_operand.vmem [shape: f32[32,32], index: 1, kind: input, shape index: {}]
  %s2 = inlined_call_operand.vmem [shape: f32[1,32], index: 2, kind: input, shape index: {}]
  %s3 = inlined_call_operand.vmem [shape: f32[512,32], index: 3, kind: input, shape index: {}]
  %s4 = inlined_call_operand.vmem [shape: f32[512,32], index: 4, kind: output, shape index: {}]
  %s5 = sld [smem:[#allocation0]]
  $region49: #{_lambda_.8} parent=0
    _
  %s7 = ssub.s32 1, %s5
  %s8 = scalar_select 0, %s7, %s5
  loop: start=0, step=1, limit=4
  $region2: #{_lambda_.8} parent=0 // loop_pre_header
    _
  $region3: #{_lambda_.8} parent=0 // loop_header
    %s10 = sphi 0, %s14
    %p11 = scmp.ge.s32.totalorder %s10, 4
    %s20 = sphi 0, %s22
    %s23 = sphi 0, %s20
    %s24 = sphi 0, %s23
    %s40 = sphi 0, %s24
    %s44 = sphi 0, %s44
    %s46 = sphi 0, %s44
    %s47 = sphi 0, %s46
    %s61 = sphi 0, %s47
    %s65 = sphi 0, %s65
    %s67 = sphi 0, %s65
    %s68 = sphi 0, %s67
    %s82 = sphi 0, %s68
    %s88 = sphi 0, %s90
    %s91 = sphi 0, %s88
    %s92 = sphi 0, %s91
    %s108 = sphi 0, %s92
    %s114 = sphi 0, %s116
    %s117 = sphi 0, %s114
    %s118 = sphi 0, %s117
    %s134 = sphi 0, %s118
  $region4: #{_lambda_.8} parent=0 // loop_header_branch
    %13 = sbr.rel (%p11) target = $region8
  $region5: #{_lambda_.8} parent=0 // loop_body
    %s15 = ssub.s32 %s10, 1
    %s16 = ssub.s32 %s10, 2
    %s17 = sadd.s32 %s10, 1
    %s18 = ssub.s32 %s10, %s17
    %p19 = scmp.eq.s32.totalorder %s18, 0
    %s21 = sadd.s32 %s20, 1
    %s22 = scalar_select %p19, %s20, %s21
    %p25 = pneg %p19
    %p26 = scmp.eq.s32.totalorder %s10, 1
    %p27 = por %p25, %p26
    %p28 = scmp.ne.s32.totalorder %s20, %s23
    %p29 = scmp.eq.s32.totalorder %s10, 0
    %p30 = por %p28, %p29
    %p31 = scmp.ne.s32.totalorder %s20, %s23
    %p32 = scmp.eq.s32.totalorder %s15, 1
    %p33 = por %p31, %p32
    %p34 = scmp.ne.s32.totalorder %s23, %s24
    %p35 = scmp.eq.s32.totalorder %s15, 0
    %p36 = por %p34, %p35
    %p37 = scmp.ne.s32.totalorder %s23, %s24
    %p38 = scmp.eq.s32.totalorder %s16, 1
    %p39 = por %p37, %p38
    %p41 = scmp.ne.s32.totalorder %s24, %s40
    %p42 = scmp.eq.s32.totalorder %s16, 0
    %p43 = por %p41, %p42
    %s45 = sadd.s32 %s44, 1
    %p48 = scmp.eq.s32.totalorder %s10, 1
    %p49 = scmp.ne.s32.totalorder %s44, %s46
    %p50 = scmp.eq.s32.totalorder %s10, 0
    %p51 = por %p49, %p50
    %p52 = scmp.ne.s32.totalorder %s44, %s46
    %p53 = scmp.eq.s32.totalorder %s15, 1
    %p54 = por %p52, %p53
    %p55 = scmp.ne.s32.totalorder %s46, %s47
    %p56 = scmp.eq.s32.totalorder %s15, 0
    %p57 = por %p55, %p56
    %p58 = scmp.ne.s32.totalorder %s46, %s47
    %p59 = scmp.eq.s32.totalorder %s16, 1
    %p60 = por %p58, %p59
    %p62 = scmp.ne.s32.totalorder %s47, %s61
    %p63 = scmp.eq.s32.totalorder %s16, 0
    %p64 = por %p62, %p63
    %s66 = sadd.s32 %s65, 1
    %p69 = scmp.eq.s32.totalorder %s10, 1
    %p70 = scmp.ne.s32.totalorder %s65, %s67
    %p71 = scmp.eq.s32.totalorder %s10, 0
    %p72 = por %p70, %p71
    %p73 = scmp.ne.s32.totalorder %s65, %s67
    %p74 = scmp.eq.s32.totalorder %s15, 1
    %p75 = por %p73, %p74
    %p76 = scmp.ne.s32.totalorder %s67, %s68
    %p77 = scmp.eq.s32.totalorder %s15, 0
    %p78 = por %p76, %p77
    %p79 = scmp.ne.s32.totalorder %s67, %s68
    %p80 = scmp.eq.s32.totalorder %s16, 1
    %p81 = por %p79, %p80
    %p83 = scmp.ne.s32.totalorder %s68, %s82
    %p84 = scmp.eq.s32.totalorder %s16, 0
    %p85 = por %p83, %p84
    %s86 = ssub.s32 %s10, %s17
    %p87 = scmp.eq.s32.totalorder %s86, 0
    %s89 = sadd.s32 %s88, 1
    %s90 = scalar_select %p87, %s88, %s89
    %p93 = pneg %p87
    %p94 = scmp.eq.s32.totalorder %s10, 1
    %p95 = por %p93, %p94
    %p96 = scmp.ne.s32.totalorder %s88, %s91
    %p97 = scmp.eq.s32.totalorder %s10, 0
    %p98 = por %p96, %p97
    %p99 = scmp.ne.s32.totalorder %s88, %s91
    %p100 = scmp.eq.s32.totalorder %s15, 1
    %p101 = por %p99, %p100
    %p102 = scmp.ne.s32.totalorder %s91, %s92
    %p103 = scmp.eq.s32.totalorder %s15, 0
    %p104 = por %p102, %p103
    %p105 = scmp.ne.s32.totalorder %s91, %s92
    %p106 = scmp.eq.s32.totalorder %s16, 1
    %p107 = por %p105, %p106
    %p109 = scmp.ne.s32.totalorder %s92, %s108
    %p110 = scmp.eq.s32.totalorder %s16, 0
    %p111 = por %p109, %p110
    %s112 = ssub.s32 %s10, %s17
    %p113 = scmp.eq.s32.totalorder %s112, 0
    %s115 = sadd.s32 %s114, 1
    %s116 = scalar_select %p113, %s114, %s115
    %p119 = pneg %p113
    %p120 = scmp.eq.s32.totalorder %s10, 1
    %p121 = por %p119, %p120
    %p122 = scmp.ne.s32.totalorder %s114, %s117
    %p123 = scmp.eq.s32.totalorder %s10, 0
    %p124 = por %p122, %p123
    %p125 = scmp.ne.s32.totalorder %s114, %s117
    %p126 = scmp.eq.s32.totalorder %s15, 1
    %p127 = por %p125, %p126
    %p128 = scmp.ne.s32.totalorder %s117, %s118
    %p129 = scmp.eq.s32.totalorder %s15, 0
    %p130 = por %p128, %p129
    %p131 = scmp.ne.s32.totalorder %s117, %s118
    %p132 = scmp.eq.s32.totalorder %s16, 1
    %p133 = por %p131, %p132
    %p135 = scmp.ne.s32.totalorder %s118, %s134
    %p136 = scmp.eq.s32.totalorder %s16, 0
    %p137 = por %p135, %p136
    %p138 = scmp.le.s32.totalorder 1, %s10
    %p139 = scmp.lt.s32.totalorder %s10, 3
    %p140 = pnand %p138, %p139
    %p141 = pneg %p140
    // Predicated region
    $region9: #{_lambda_.8} parent=5 // pred_check
      _
    $region10: #{_lambda_.8} parent=5 // pred_check_branch
      %143 = sbr.rel (%p140) target = $region12
    $region11: #{_lambda_.8} parent=5 // pred_region
      %s144 = ssub.s32 %s10, 1
      // Predicated region
      $region13: #{_lambda_.8} parent=11 // pred_check
        %p145 = pneg %p57
      $region14: #{_lambda_.8} parent=11 // pred_check_branch
        %147 = sbr.rel (%p145) target = $region16
      $region15: #{_lambda_.8} parent=11 // pred_region
        _
      $region16: #{_lambda_.8} parent=11 // pred_fallthru
        _
      // Predicated region
      $region17: #{_lambda_.8} parent=11 // pred_check
        %p148 = pneg %p78
      $region18: #{_lambda_.8} parent=11 // pred_check_branch
        %150 = sbr.rel (%p148) target = $region20
      $region19: #{_lambda_.8} parent=11 // pred_region
        _
      $region20: #{_lambda_.8} parent=11 // pred_fallthru
        _
    $region12: #{_lambda_.8} parent=5 // pred_fallthru
      _
    %p151 = scmp.lt.s32.totalorder %s10, 2
    // Predicated region
    $region21: #{_lambda_.8} parent=5 // pred_check
      %p152 = pneg %p151
    $region22: #{_lambda_.8} parent=5 // pred_check_branch
      %154 = sbr.rel (%p152) target = $region24
    $region23: #{_lambda_.8} parent=5 // pred_region
      // Predicated region
      $region25: #{_lambda_.8} parent=23 // pred_check
        %p155 = pneg %p30
      $region26: #{_lambda_.8} parent=23 // pred_check_branch
        %157 = sbr.rel (%p155) target = $region28
      $region27: #{_lambda_.8} parent=23 // pred_region
        %s158 = smul.u32 32, %s10
        %p159 = scmp.lt.s32.totalorder %s158, 63
        %s160 = scalar_select %p159, %s158, 63
        %s161 = smul.addr %s160, 8
        %s162 = scalar_lea.vmem %s0, %s161
        %s163 = smul.u32 32, %s10
      $region28: #{_lambda_.8} parent=23 // pred_fallthru
        _
      // Predicated region
      $region29: #{_lambda_.8} parent=23 // pred_check
        %p164 = pneg %p98
      $region30: #{_lambda_.8} parent=23 // pred_check_branch
        %166 = sbr.rel (%p164) target = $region32
      $region31: #{_lambda_.8} parent=23 // pred_region
        %s167 = smul.u32 32, %s10
        %p168 = scmp.lt.s32.totalorder %s167, 63
        %s169 = scalar_select %p168, %s167, 63
        %s170 = smul.addr %s169, 8
        %s171 = scalar_lea.vmem %s3, %s170
        %s172 = smul.u32 32, %s10
      $region32: #{_lambda_.8} parent=23 // pred_fallthru
        _
    $region24: #{_lambda_.8} parent=5 // pred_fallthru
      _
    %p173 = scmp.le.s32.totalorder 1, %s10
    %p174 = scmp.lt.s32.totalorder %s10, 3
    %p175 = pnand %p173, %p174
    %p176 = pneg %p175
    // Predicated region
    $region33: #{_lambda_.8} parent=5 // pred_check
      _
    $region34: #{_lambda_.8} parent=5 // pred_check_branch
      %178 = sbr.rel (%p175) target = $region36
    $region35: #{_lambda_.8} parent=5 // pred_region
      %s179 = ssub.s32 %s10, 1
      %s180 = smul.u32 32, %s15
      %p181 = scmp.lt.s32.totalorder %s180, 63
      %s182 = scalar_select %p181, %s180, 63
      %s183 = smul.addr %s182, 8
      %s184 = scalar_lea.vmem %s0, %s183
      %p185 = pneg %p36
      %p186 = pneg %p33
      %p187 = pneg %p57
      %p188 = pneg %p54
      %p189 = pneg %p78
      %p190 = pneg %p75
      %s191 = smul.u32 32, %s15
      %p192 = scmp.lt.s32.totalorder %s191, 63
      %s193 = scalar_select %p192, %s191, 63
      %s194 = smul.addr %s193, 8
      %s195 = scalar_lea.vmem %s3, %s194
      %p196 = pneg %p104
      %p197 = pneg %p101
      %p198 = pneg %p130
      %p199 = pneg %p127
      %s200 = smul.u32 32, %s15
      %p201 = scmp.lt.s32.totalorder %s200, 63
      %s202 = scalar_select %p201, %s200, 63
      %s203 = smul.addr %s202, 8
      %s204 = scalar_lea.vmem %s4, %s203
      %s205 = smul.u32 32, %s15
      %p206 = scmp.lt.s32.totalorder %s205, 63
      %s207 = scalar_select %p206, %s205, 63
      %s208 = smul.addr %s207, 8
      %s209 = scalar_lea.vmem %s0, %s208
      %s210 = smul.u32 32, %s15
      %s211 = smul.u32 32, %s15
      %p212 = scmp.lt.s32.totalorder %s211, 63
      %s213 = scalar_select %p212, %s211, 63
      %s214 = smul.addr %s213, 8
      %s215 = scalar_lea.vmem %s3, %s214
      %s216 = smul.u32 32, %s15
      %s217 = smul.u32 32, %s15
      %p218 = scmp.lt.s32.totalorder %s217, 63
      %s219 = scalar_select %p218, %s217, 63
      %s220 = smul.addr %s219, 8
      %s221 = scalar_lea.vmem %s4, %s220
      %s222 = smul.u32 32, %s15
      %v223 = vld [vmem:[%s209] sm:$0xff]
      %v224 = vld [vmem:[%s209 + $0x8] sm:$0xff]
      %v225 = vld [vmem:[%s209 + $0x10] sm:$0xff]
      %v226 = vld [vmem:[%s209 + $0x18] sm:$0xff]
      %v227 = vld [vmem:[%s209 + $0x20] sm:$0xff]
      %v228 = vld [vmem:[%s209 + $0x28] sm:$0xff]
      %v229 = vld [vmem:[%s209 + $0x30] sm:$0xff]
      %v230 = vld [vmem:[%s209 + $0x38] sm:$0xff]
      %v231 = vld [vmem:[%s209 + $0x40] sm:$0xff]
      %v232 = vld [vmem:[%s209 + $0x48] sm:$0xff]
      %v233 = vld [vmem:[%s209 + $0x50] sm:$0xff]
      %v234 = vld [vmem:[%s209 + $0x58] sm:$0xff]
      %v235 = vld [vmem:[%s209 + $0x60] sm:$0xff]
      %v236 = vld [vmem:[%s209 + $0x68] sm:$0xff]
      %v237 = vld [vmem:[%s209 + $0x70] sm:$0xff]
      %v238 = vld [vmem:[%s209 + $0x78] sm:$0xff]
      %v239 = vld [vmem:[%s209 + $0x80] sm:$0xff]
      %v240 = vld [vmem:[%s209 + $0x88] sm:$0xff]
      %v241 = vld [vmem:[%s209 + $0x90] sm:$0xff]
      %v242 = vld [vmem:[%s209 + $0x98] sm:$0xff]
      %v243 = vld [vmem:[%s209 + $0xa0] sm:$0xff]
      %v244 = vld [vmem:[%s209 + $0xa8] sm:$0xff]
      %v245 = vld [vmem:[%s209 + $0xb0] sm:$0xff]
      %v246 = vld [vmem:[%s209 + $0xb8] sm:$0xff]
      %v247 = vld [vmem:[%s209 + $0xc0] sm:$0xff]
      %v248 = vld [vmem:[%s209 + $0xc8] sm:$0xff]
      %v249 = vld [vmem:[%s209 + $0xd0] sm:$0xff]
      %v250 = vld [vmem:[%s209 + $0xd8] sm:$0xff]
      %v251 = vld [vmem:[%s209 + $0xe0] sm:$0xff]
      %v252 = vld [vmem:[%s209 + $0xe8] sm:$0xff]
      %v253 = vld [vmem:[%s209 + $0xf0] sm:$0xff]
      %v254 = vld [vmem:[%s209 + $0xf8] sm:$0xff]
      %v255 = vld [vmem:[%s1] sm:$0xff]
      %v256 = vld [vmem:[%s1 + $0x8] sm:$0xff]
      %v257 = vld [vmem:[%s1 + $0x10] sm:$0xff]
      %v258 = vld [vmem:[%s1 + $0x18] sm:$0xff]
      %v259 = vld [vmem:[%s2] sm:$0x1]
      %v261 = vlaneseq
      %v262 = vshrl.u32 %v261, 7
      %v263 = vsub.s32 0, %v262
      %v264 = vrot.slane %v259, %v263
      %vm266 = vcmask 261120
      %v268 = vsel %vm266, %v223, 0
      %v271 = vsel %vm266, %v224, 0
      %v274 = vsel %vm266, %v225, 0
      %v277 = vsel %vm266, %v226, 0
      %v280 = vsel %vm266, %v227, 0
      %v283 = vsel %vm266, %v228, 0
      %v286 = vsel %vm266, %v229, 0
      %v289 = vsel %vm266, %v230, 0
      %v292 = vsel %vm266, %v231, 0
      %v295 = vsel %vm266, %v232, 0
      %v298 = vsel %vm266, %v233, 0
      %v301 = vsel %vm266, %v234, 0
      %v304 = vsel %vm266, %v235, 0
      %v307 = vsel %vm266, %v236, 0
      %v310 = vsel %vm266, %v237, 0
      %v313 = vsel %vm266, %v238, 0
      %v316 = vsel %vm266, %v239, 0
      %v319 = vsel %vm266, %v240, 0
      %v322 = vsel %vm266, %v241, 0
      %v325 = vsel %vm266, %v242, 0
      %v328 = vsel %vm266, %v243, 0
      %v331 = vsel %vm266, %v244, 0
      %v334 = vsel %vm266, %v245, 0
      %v337 = vsel %vm266, %v246, 0
      %v340 = vsel %vm266, %v247, 0
      %v343 = vsel %vm266, %v248, 0
      %v346 = vsel %vm266, %v249, 0
      %v349 = vsel %vm266, %v250, 0
      %v352 = vsel %vm266, %v251, 0
      %v355 = vsel %vm266, %v252, 0
      %v358 = vsel %vm266, %v253, 0
      %v361 = vsel %vm266, %v254, 0
      %363 = vmatprep.subr.mxu0 0.0
      %364 = vmatpush1.msra.mxu0 %v255
      %365 = vmatprep.subr.mxu0 0.0
      %366 = vmatpush1.msra.mxu0 %v256
      %367 = vmatprep.subr.mxu0 0.0
      %368 = vmatpush1.msra.mxu0 %v257
      %369 = vmatprep.subr.mxu0 0.0
      %370 = vmatpush1.msra.mxu0 %v258
      %371 = vmatprep.subr.mxu0 0.0
      %372 = vmatpush1.msra.mxu0 0.0
      %373 = vmatprep.subr.mxu0 0.0
      %374 = vmatpush1.msra.mxu0 0.0
      %375 = vmatprep.subr.mxu0 0.0
      %376 = vmatpush1.msra.mxu0 0.0
      %377 = vmatprep.subr.mxu0 0.0
      %378 = vmatpush1.msra.mxu0 0.0
      %379 = vmatprep.subr.mxu0 0.0
      %380 = vmatpush1.msra.mxu0 0.0
      %381 = vmatprep.subr.mxu0 0.0
      %382 = vmatpush1.msra.mxu0 0.0
      %383 = vmatprep.subr.mxu0 0.0
      %384 = vmatpush1.msra.mxu0 0.0
      %385 = vmatprep.subr.mxu0 0.0
      %386 = vmatpush1.msra.mxu0 0.0
      %387 = vmatprep.subr.mxu0 0.0
      %388 = vmatpush1.msra.mxu0 0.0
      %389 = vmatprep.subr.mxu0 0.0
      %390 = vmatpush1.msra.mxu0 0.0
      %391 = vmatprep.subr.mxu0 0.0
      %392 = vmatpush1.msra.mxu0 0.0
      %393 = vmatprep.subr.mxu0 0.0
      %394 = vmatpush1.msra.mxu0 0.0
      %395 = vmatprep.subr.mxu0 0.0
      %396 = vmatpush1.msra.mxu0 0.0
      %397 = vmatprep.subr.mxu0 0.0
      %398 = vmatpush1.msra.mxu0 0.0
      %399 = vmatprep.subr.mxu0 0.0
      %400 = vmatpush1.msra.mxu0 0.0
      %401 = vmatprep.subr.mxu0 0.0
      %402 = vmatpush1.msra.mxu0 0.0
      %403 = vmatprep.subr.mxu0 0.0
      %404 = vmatpush1.msra.mxu0 0.0
      %405 = vmatprep.subr.mxu0 0.0
      %406 = vmatpush1.msra.mxu0 0.0
      %407 = vmatprep.subr.mxu0 0.0
      %408 = vmatpush1.msra.mxu0 0.0
      %409 = vmatprep.subr.mxu0 0.0
      %410 = vmatpush1.msra.mxu0 0.0
      %411 = vmatprep.subr.mxu0 0.0
      %412 = vmatpush1.msra.mxu0 0.0
      %413 = vmatprep.subr.mxu0 0.0
      %414 = vmatpush1.msra.mxu0 0.0
      %415 = vmatprep.subr.mxu0 0.0
      %416 = vmatpush1.msra.mxu0 0.0
      %417 = vmatprep.subr.mxu0 0.0
      %418 = vmatpush1.msra.mxu0 0.0
      %419 = vmatprep.subr.mxu0 0.0
      %420 = vmatpush1.msra.mxu0 0.0
      %421 = vmatprep.subr.mxu0 0.0
      %422 = vmatpush1.msra.mxu0 0.0
      %423 = vmatprep.subr.mxu0 0.0
      %424 = vmatpush1.msra.mxu0 0.0
      %425 = vmatprep.subr.mxu0 0.0
      %426 = vmatpush1.msra.mxu0 0.0
      %427 = vmatprep.mubr.f32.mxu0 0.0
      %428 = vmatmul.mubr.f32.gmra.mrb[0].mxu0 %v268
      %v429 = vpop.f32.mrb[0].mxu0
      %v430 = vadd.f32 %v264, %v429
      %v431 = vpop.f32.mrb[0].mxu0
      %432 = vmatprep.mubr.f32.mxu0 0.0
      %433 = vmatmul.mubr.f32.gmra.mrb[0].mxu0 %v271
      %v434 = vpop.f32.mrb[0].mxu0
      %v435 = vadd.f32 %v264, %v434
      %v436 = vpop.f32.mrb[0].mxu0
      %437 = vmatprep.mubr.f32.mxu0 0.0
      %438 = vmatmul.mubr.f32.gmra.mrb[0].mxu0 %v274
      %v439 = vpop.f32.mrb[0].mxu0
      %v440 = vadd.f32 %v264, %v439
      %v441 = vpop.f32.mrb[0].mxu0
      %442 = vmatprep.mubr.f32.mxu0 0.0
      %443 = vmatmul.mubr.f32.gmra.mrb[0].mxu0 %v277
      %v444 = vpop.f32.mrb[0].mxu0
      %v445 = vadd.f32 %v264, %v444
      %v446 = vpop.f32.mrb[0].mxu0
      %447 = vmatprep.mubr.f32.mxu0 0.0
      %448 = vmatmul.mubr.f32.gmra.mrb[0].mxu0 %v280
      %v449 = vpop.f32.mrb[0].mxu0
      %v450 = vadd.f32 %v264, %v449
      %v451 = vpop.f32.mrb[0].mxu0
      %452 = vmatprep.mubr.f32.mxu0 0.0
      %453 = vmatmul.mubr.f32.gmra.mrb[0].mxu0 %v283
      %v454 = vpop.f32.mrb[0].mxu0
      %v455 = vadd.f32 %v264, %v454
      %v456 = vpop.f32.mrb[0].mxu0
      %457 = vmatprep.mubr.f32.mxu0 0.0
      %458 = vmatmul.mubr.f32.gmra.mrb[0].mxu0 %v286
      %v459 = vpop.f32.mrb[0].mxu0
      %v460 = vadd.f32 %v264, %v459
      %v461 = vpop.f32.mrb[0].mxu0
      %462 = vmatprep.mubr.f32.mxu0 0.0
      %463 = vmatmul.mubr.f32.gmra.mrb[0].mxu0 %v289
      %v464 = vpop.f32.mrb[0].mxu0
      %v465 = vadd.f32 %v264, %v464
      %v466 = vpop.f32.mrb[0].mxu0
      %467 = vmatprep.mubr.f32.mxu0 0.0
      %468 = vmatmul.mubr.f32.gmra.mrb[0].mxu0 %v292
      %v469 = vpop.f32.mrb[0].mxu0
      %v470 = vadd.f32 %v264, %v469
      %v471 = vpop.f32.mrb[0].mxu0
      %472 = vmatprep.mubr.f32.mxu0 0.0
      %473 = vmatmul.mubr.f32.gmra.mrb[0].mxu0 %v295
      %v474 = vpop.f32.mrb[0].mxu0
      %v475 = vadd.f32 %v264, %v474
      %v476 = vpop.f32.mrb[0].mxu0
      %477 = vmatprep.mubr.f32.mxu0 0.0
      %478 = vmatmul.mubr.f32.gmra.mrb[0].mxu0 %v298
      %v479 = vpop.f32.mrb[0].mxu0
      %v480 = vadd.f32 %v264, %v479
      %v481 = vpop.f32.mrb[0].mxu0
      %482 = vmatprep.mubr.f32.mxu0 0.0
      %483 = vmatmul.mubr.f32.gmra.mrb[0].mxu0 %v301
      %v484 = vpop.f32.mrb[0].mxu0
      %v485 = vadd.f32 %v264, %v484
      %v486 = vpop.f32.mrb[0].mxu0
      %487 = vmatprep.mubr.f32.mxu0 0.0
      %488 = vmatmul.mubr.f32.gmra.mrb[0].mxu0 %v304
      %v489 = vpop.f32.mrb[0].mxu0
      %v490 = vadd.f32 %v264, %v489
      %v491 = vpop.f32.mrb[0].mxu0
      %492 = vmatprep.mubr.f32.mxu0 0.0
      %493 = vmatmul.mubr.f32.gmra.mrb[0].mxu0 %v307
      %v494 = vpop.f32.mrb[0].mxu0
      %v495 = vadd.f32 %v264, %v494
      %v496 = vpop.f32.mrb[0].mxu0
      %497 = vmatprep.mubr.f32.mxu0 0.0
      %498 = vmatmul.mubr.f32.gmra.mrb[0].mxu0 %v310
      %v499 = vpop.f32.mrb[0].mxu0
      %v500 = vadd.f32 %v264, %v499
      %v501 = vpop.f32.mrb[0].mxu0
      %502 = vmatprep.mubr.f32.mxu0 0.0
      %503 = vmatmul.mubr.f32.gmra.mrb[0].mxu0 %v313
      %v504 = vpop.f32.mrb[0].mxu0
      %v505 = vadd.f32 %v264, %v504
      %v506 = vpop.f32.mrb[0].mxu0
      %507 = vmatprep.mubr.f32.mxu0 0.0
      %508 = vmatmul.mubr.f32.gmra.mrb[0].mxu0 %v316
      %v509 = vpop.f32.mrb[0].mxu0
      %v510 = vadd.f32 %v264, %v509
      %v511 = vpop.f32.mrb[0].mxu0
      %512 = vmatprep.mubr.f32.mxu0 0.0
      %513 = vmatmul.mubr.f32.gmra.mrb[0].mxu0 %v319
      %v514 = vpop.f32.mrb[0].mxu0
      %v515 = vadd.f32 %v264, %v514
      %v516 = vpop.f32.mrb[0].mxu0
      %517 = vmatprep.mubr.f32.mxu0 0.0
      %518 = vmatmul.mubr.f32.gmra.mrb[0].mxu0 %v322
      %v519 = vpop.f32.mrb[0].mxu0
      %v520 = vadd.f32 %v264, %v519
      %v521 = vpop.f32.mrb[0].mxu0
      %522 = vmatprep.mubr.f32.mxu0 0.0
      %523 = vmatmul.mubr.f32.gmra.mrb[0].mxu0 %v325
      %v524 = vpop.f32.mrb[0].mxu0
      %v525 = vadd.f32 %v264, %v524
      %v526 = vpop.f32.mrb[0].mxu0
      %527 = vmatprep.mubr.f32.mxu0 0.0
      %528 = vmatmul.mubr.f32.gmra.mrb[0].mxu0 %v328
      %v529 = vpop.f32.mrb[0].mxu0
      %v530 = vadd.f32 %v264, %v529
      %v531 = vpop.f32.mrb[0].mxu0
      %532 = vmatprep.mubr.f32.mxu0 0.0
      %533 = vmatmul.mubr.f32.gmra.mrb[0].mxu0 %v331
      %v534 = vpop.f32.mrb[0].mxu0
      %v535 = vadd.f32 %v264, %v534
      %v536 = vpop.f32.mrb[0].mxu0
      %537 = vmatprep.mubr.f32.mxu0 0.0
      %538 = vmatmul.mubr.f32.gmra.mrb[0].mxu0 %v334
      %v539 = vpop.f32.mrb[0].mxu0
      %v540 = vadd.f32 %v264, %v539
      %v541 = vpop.f32.mrb[0].mxu0
      %542 = vmatprep.mubr.f32.mxu0 0.0
      %543 = vmatmul.mubr.f32.gmra.mrb[0].mxu0 %v337
      %v544 = vpop.f32.mrb[0].mxu0
      %v545 = vadd.f32 %v264, %v544
      %v546 = vpop.f32.mrb[0].mxu0
      %547 = vmatprep.mubr.f32.mxu0 0.0
      %548 = vmatmul.mubr.f32.gmra.mrb[0].mxu0 %v340
      %v549 = vpop.f32.mrb[0].mxu0
      %v550 = vadd.f32 %v264, %v549
      %v551 = vpop.f32.mrb[0].mxu0
      %552 = vmatprep.mubr.f32.mxu0 0.0
      %553 = vmatmul.mubr.f32.gmra.mrb[0].mxu0 %v343
      %v554 = vpop.f32.mrb[0].mxu0
      %v555 = vadd.f32 %v264, %v554
      %v556 = vpop.f32.mrb[0].mxu0
      %557 = vmatprep.mubr.f32.mxu0 0.0
      %558 = vmatmul.mubr.f32.gmra.mrb[0].mxu0 %v346
      %v559 = vpop.f32.mrb[0].mxu0
      %v560 = vadd.f32 %v264, %v559
      %v561 = vpop.f32.mrb[0].mxu0
      %562 = vmatprep.mubr.f32.mxu0 0.0
      %563 = vmatmul.mubr.f32.gmra.mrb[0].mxu0 %v349
      %v564 = vpop.f32.mrb[0].mxu0
      %v565 = vadd.f32 %v264, %v564
      %v566 = vpop.f32.mrb[0].mxu0
      %567 = vmatprep.mubr.f32.mxu0 0.0
      %568 = vmatmul.mubr.f32.gmra.mrb[0].mxu0 %v352
      %v569 = vpop.f32.mrb[0].mxu0
      %v570 = vadd.f32 %v264, %v569
      %v571 = vpop.f32.mrb[0].mxu0
      %572 = vmatprep.mubr.f32.mxu0 0.0
      %573 = vmatmul.mubr.f32.gmra.mrb[0].mxu0 %v355
      %v574 = vpop.f32.mrb[0].mxu0
      %v575 = vadd.f32 %v264, %v574
      %v576 = vpop.f32.mrb[0].mxu0
      %577 = vmatprep.mubr.f32.mxu0 0.0
      %578 = vmatmul.mubr.f32.gmra.mrb[0].mxu0 %v358
      %v579 = vpop.f32.mrb[0].mxu0
      %v580 = vadd.f32 %v264, %v579
      %v581 = vpop.f32.mrb[0].mxu0
      %582 = vmatprep.mubr.f32.mxu0 0.0
      %583 = vmatmul.mubr.f32.gmra.mrb[0].mxu0 %v361
      %v584 = vpop.f32.mrb[0].mxu0
      %v585 = vadd.f32 %v264, %v584
      %v586 = vpop.f32.mrb[0].mxu0
      %587 = vdwg.mxu0
      %v588 = vld [vmem:[%s215] sm:$0xff]
      %v589 = vld [vmem:[%s215 + $0x8] sm:$0xff]
      %v590 = vld [vmem:[%s215 + $0x10] sm:$0xff]
      %v591 = vld [vmem:[%s215 + $0x18] sm:$0xff]
      %v592 = vld [vmem:[%s215 + $0x20] sm:$0xff]
      %v593 = vld [vmem:[%s215 + $0x28] sm:$0xff]
      %v594 = vld [vmem:[%s215 + $0x30] sm:$0xff]
      %v595 = vld [vmem:[%s215 + $0x38] sm:$0xff]
      %v596 = vld [vmem:[%s215 + $0x40] sm:$0xff]
      %v597 = vld [vmem:[%s215 + $0x48] sm:$0xff]
      %v598 = vld [vmem:[%s215 + $0x50] sm:$0xff]
      %v599 = vld [vmem:[%s215 + $0x58] sm:$0xff]
      %v600 = vld [vmem:[%s215 + $0x60] sm:$0xff]
      %v601 = vld [vmem:[%s215 + $0x68] sm:$0xff]
      %v602 = vld [vmem:[%s215 + $0x70] sm:$0xff]
      %v603 = vld [vmem:[%s215 + $0x78] sm:$0xff]
      %v604 = vld [vmem:[%s215 + $0x80] sm:$0xff]
      %v605 = vld [vmem:[%s215 + $0x88] sm:$0xff]
      %v606 = vld [vmem:[%s215 + $0x90] sm:$0xff]
      %v607 = vld [vmem:[%s215 + $0x98] sm:$0xff]
      %v608 = vld [vmem:[%s215 + $0xa0] sm:$0xff]
      %v609 = vld [vmem:[%s215 + $0xa8] sm:$0xff]
      %v610 = vld [vmem:[%s215 + $0xb0] sm:$0xff]
      %v611 = vld [vmem:[%s215 + $0xb8] sm:$0xff]
      %v612 = vld [vmem:[%s215 + $0xc0] sm:$0xff]
      %v613 = vld [vmem:[%s215 + $0xc8] sm:$0xff]
      %v614 = vld [vmem:[%s215 + $0xd0] sm:$0xff]
      %v615 = vld [vmem:[%s215 + $0xd8] sm:$0xff]
      %v616 = vld [vmem:[%s215 + $0xe0] sm:$0xff]
      %v617 = vld [vmem:[%s215 + $0xe8] sm:$0xff]
      %v618 = vld [vmem:[%s215 + $0xf0] sm:$0xff]
      %v619 = vld [vmem:[%s215 + $0xf8] sm:$0xff]
      %v620 = vadd.f32 %v430, %v588
      %v621 = vadd.f32 %v435, %v589
      %v622 = vadd.f32 %v440, %v590
      %v623 = vadd.f32 %v445, %v591
      %v624 = vadd.f32 %v450, %v592
      %v625 = vadd.f32 %v455, %v593
      %v626 = vadd.f32 %v460, %v594
      %v627 = vadd.f32 %v465, %v595
      %v628 = vadd.f32 %v470, %v596
      %v629 = vadd.f32 %v475, %v597
      %v630 = vadd.f32 %v480, %v598
      %v631 = vadd.f32 %v485, %v599
      %v632 = vadd.f32 %v490, %v600
      %v633 = vadd.f32 %v495, %v601
      %v634 = vadd.f32 %v500, %v602
      %v635 = vadd.f32 %v505, %v603
      %v636 = vadd.f32 %v510, %v604
      %v637 = vadd.f32 %v515, %v605
      %v638 = vadd.f32 %v520, %v606
      %v639 = vadd.f32 %v525, %v607
      %v640 = vadd.f32 %v530, %v608
      %v641 = vadd.f32 %v535, %v609
      %v642 = vadd.f32 %v540, %v610
      %v643 = vadd.f32 %v545, %v611
      %v644 = vadd.f32 %v550, %v612
      %v645 = vadd.f32 %v555, %v613
      %v646 = vadd.f32 %v560, %v614
      %v647 = vadd.f32 %v565, %v615
      %v648 = vadd.f32 %v570, %v616
      %v649 = vadd.f32 %v575, %v617
      %v650 = vadd.f32 %v580, %v618
      %v651 = vadd.f32 %v585, %v619
      %v652 = vmax.f32 %v620, 0.0
      %v653 = vmax.f32 %v621, 0.0
      %v654 = vmax.f32 %v622, 0.0
      %v655 = vmax.f32 %v623, 0.0
      %v656 = vmax.f32 %v624, 0.0
      %v657 = vmax.f32 %v625, 0.0
      %v658 = vmax.f32 %v626, 0.0
      %v659 = vmax.f32 %v627, 0.0
      %v660 = vmax.f32 %v628, 0.0
      %v661 = vmax.f32 %v629, 0.0
      %v662 = vmax.f32 %v630, 0.0
      %v663 = vmax.f32 %v631, 0.0
      %v664 = vmax.f32 %v632, 0.0
      %v665 = vmax.f32 %v633, 0.0
      %v666 = vmax.f32 %v634, 0.0
      %v667 = vmax.f32 %v635, 0.0
      %v668 = vmax.f32 %v636, 0.0
      %v669 = vmax.f32 %v637, 0.0
      %v670 = vmax.f32 %v638, 0.0
      %v671 = vmax.f32 %v639, 0.0
      %v672 = vmax.f32 %v640, 0.0
      %v673 = vmax.f32 %v641, 0.0
      %v674 = vmax.f32 %v642, 0.0
      %v675 = vmax.f32 %v643, 0.0
      %v676 = vmax.f32 %v644, 0.0
      %v677 = vmax.f32 %v645, 0.0
      %v678 = vmax.f32 %v646, 0.0
      %v679 = vmax.f32 %v647, 0.0
      %v680 = vmax.f32 %v648, 0.0
      %v681 = vmax.f32 %v649, 0.0
      %v682 = vmax.f32 %v650, 0.0
      %v683 = vmax.f32 %v651, 0.0
      %684 = vst.msk [vmem:[%s221] sm:$0xff] %vm266, %v652
      %685 = vst.msk [vmem:[%s221 + $0x8] sm:$0xff] %vm266, %v653
      %686 = vst.msk [vmem:[%s221 + $0x10] sm:$0xff] %vm266, %v654
      %687 = vst.msk [vmem:[%s221 + $0x18] sm:$0xff] %vm266, %v655
      %688 = vst.msk [vmem:[%s221 + $0x20] sm:$0xff] %vm266, %v656
      %689 = vst.msk [vmem:[%s221 + $0x28] sm:$0xff] %vm266, %v657
      %690 = vst.msk [vmem:[%s221 + $0x30] sm:$0xff] %vm266, %v658
      %691 = vst.msk [vmem:[%s221 + $0x38] sm:$0xff] %vm266, %v659
      %692 = vst.msk [vmem:[%s221 + $0x40] sm:$0xff] %vm266, %v660
      %693 = vst.msk [vmem:[%s221 + $0x48] sm:$0xff] %vm266, %v661
      %694 = vst.msk [vmem:[%s221 + $0x50] sm:$0xff] %vm266, %v662
      %695 = vst.msk [vmem:[%s221 + $0x58] sm:$0xff] %vm266, %v663
      %696 = vst.msk [vmem:[%s221 + $0x60] sm:$0xff] %vm266, %v664
      %697 = vst.msk [vmem:[%s221 + $0x68] sm:$0xff] %vm266, %v665
      %698 = vst.msk [vmem:[%s221 + $0x70] sm:$0xff] %vm266, %v666
      %699 = vst.msk [vmem:[%s221 + $0x78] sm:$0xff] %vm266, %v667
      %700 = vst.msk [vmem:[%s221 + $0x80] sm:$0xff] %vm266, %v668
      %701 = vst.msk [vmem:[%s221 + $0x88] sm:$0xff] %vm266, %v669
      %702 = vst.msk [vmem:[%s221 + $0x90] sm:$0xff] %vm266, %v670
      %703 = vst.msk [vmem:[%s221 + $0x98] sm:$0xff] %vm266, %v671
      %704 = vst.msk [vmem:[%s221 + $0xa0] sm:$0xff] %vm266, %v672
      %705 = vst.msk [vmem:[%s221 + $0xa8] sm:$0xff] %vm266, %v673
      %706 = vst.msk [vmem:[%s221 + $0xb0] sm:$0xff] %vm266, %v674
      %707 = vst.msk [vmem:[%s221 + $0xb8] sm:$0xff] %vm266, %v675
      %708 = vst.msk [vmem:[%s221 + $0xc0] sm:$0xff] %vm266, %v676
      %709 = vst.msk [vmem:[%s221 + $0xc8] sm:$0xff] %vm266, %v677
      %710 = vst.msk [vmem:[%s221 + $0xd0] sm:$0xff] %vm266, %v678
      %711 = vst.msk [vmem:[%s221 + $0xd8] sm:$0xff] %vm266, %v679
      %712 = vst.msk [vmem:[%s221 + $0xe0] sm:$0xff] %vm266, %v680
      %713 = vst.msk [vmem:[%s221 + $0xe8] sm:$0xff] %vm266, %v681
      %714 = vst.msk [vmem:[%s221 + $0xf0] sm:$0xff] %vm266, %v682
      %715 = vst.msk [vmem:[%s221 + $0xf8] sm:$0xff] %vm266, %v683
      %s716 = smul.u32 32, %s15
      %p717 = scmp.lt.s32.totalorder %s716, 63
      %s718 = scalar_select %p717, %s716, 63
      %s719 = smul.addr %s718, 8
      %s720 = scalar_lea.vmem %s4, %s719
      // Predicated region
      $region37: #{_lambda_.8} parent=35 // pred_check
        %p721 = pneg %p127
      $region38: #{_lambda_.8} parent=35 // pred_check_branch
        %723 = sbr.rel (%p721) target = $region40
      $region39: #{_lambda_.8} parent=35 // pred_region
        %s724 = smul.u32 32, %s15
      $region40: #{_lambda_.8} parent=35 // pred_fallthru
        _
    $region36: #{_lambda_.8} parent=5 // pred_fallthru
      _
    %p725 = scmp.le.s32.totalorder 2, %s10
    // Predicated region
    $region41: #{_lambda_.8} parent=5 // pred_check
      %p726 = pneg %p725
    $region42: #{_lambda_.8} parent=5 // pred_check_branch
      %728 = sbr.rel (%p726) target = $region44
    $region43: #{_lambda_.8} parent=5 // pred_region
      %s729 = ssub.s32 %s10, 2
      // Predicated region
      $region45: #{_lambda_.8} parent=43 // pred_check
        %p730 = pneg %p133
      $region46: #{_lambda_.8} parent=43 // pred_check_branch
        %732 = sbr.rel (%p730) target = $region48
      $region47: #{_lambda_.8} parent=43 // pred_region
        %s733 = smul.u32 32, %s16
        %p734 = scmp.lt.s32.totalorder %s733, 63
        %s735 = scalar_select %p734, %s733, 63
        %s736 = smul.addr %s735, 8
        %s737 = scalar_lea.vmem %s4, %s736
      $region48: #{_lambda_.8} parent=43 // pred_fallthru
        _
    $region44: #{_lambda_.8} parent=5 // pred_fallthru
      _
  $region6: #{_lambda_.8} parent=0 // loop_footer
    %s14 = sadd.s32 1, %s10
  $region7: #{_lambda_.8} parent=0 // loop_footer_branch
    %9 = sbr.rel target = $region3
  $region8: #{_lambda_.8} parent=0 // loop_exit
    _

// kernel: _lambda_.11
$region0: #{_lambda_.11}
  #allocation0 [shape = 'u32[]', space=smem, size = 0x4, offset = 0x4, fixed_abs, tag = 'smem constant byte address 0x4 - core index']
  #allocation1 [shape = 'u32[144,128]{1,0:T(1,128)}', space=vmem, size = 0x12000, scoped, tag = 'internal scratch']
  %s0 = inlined_call_operand.vmem [shape: f32[512,32], index: 0, kind: input, shape index: {}]
  %s1 = inlined_call_operand.vmem [shape: f32[32,128], index: 1, kind: input, shape index: {}]
  %s2 = inlined_call_operand.vmem [shape: f32[1,128], index: 2, kind: input, shape index: {}]
  %s3 = inlined_call_operand.vmem [shape: f32[512,128], index: 3, kind: output, shape index: {}]
  %s4 = sld [smem:[#allocation0]]
  $region45: #{_lambda_.11} parent=0
    _
  %s6 = ssub.s32 1, %s4
  %s7 = scalar_select 0, %s6, %s4
  loop: start=0, step=1, limit=4
  $region2: #{_lambda_.11} parent=0 // loop_pre_header
    _
  $region3: #{_lambda_.11} parent=0 // loop_header
    %s9 = sphi 0, %s13
    %p10 = scmp.ge.s32.totalorder %s9, 4
    %s19 = sphi 0, %s21
    %s22 = sphi 0, %s19
    %s23 = sphi 0, %s22
    %s39 = sphi 0, %s23
    %s43 = sphi 0, %s43
    %s45 = sphi 0, %s43
    %s46 = sphi 0, %s45
    %s60 = sphi 0, %s46
    %s64 = sphi 0, %s64
    %s66 = sphi 0, %s64
    %s67 = sphi 0, %s66
    %s81 = sphi 0, %s67
    %s87 = sphi 0, %s89
    %s90 = sphi 0, %s87
    %s91 = sphi 0, %s90
    %s107 = sphi 0, %s91
  $region4: #{_lambda_.11} parent=0 // loop_header_branch
    %12 = sbr.rel (%p10) target = $region8
  $region5: #{_lambda_.11} parent=0 // loop_body
    %s14 = ssub.s32 %s9, 1
    %s15 = ssub.s32 %s9, 2
    %s16 = sadd.s32 %s9, 1
    %s17 = ssub.s32 %s9, %s16
    %p18 = scmp.eq.s32.totalorder %s17, 0
    %s20 = sadd.s32 %s19, 1
    %s21 = scalar_select %p18, %s19, %s20
    %p24 = pneg %p18
    %p25 = scmp.eq.s32.totalorder %s9, 1
    %p26 = por %p24, %p25
    %p27 = scmp.ne.s32.totalorder %s19, %s22
    %p28 = scmp.eq.s32.totalorder %s9, 0
    %p29 = por %p27, %p28
    %p30 = scmp.ne.s32.totalorder %s19, %s22
    %p31 = scmp.eq.s32.totalorder %s14, 1
    %p32 = por %p30, %p31
    %p33 = scmp.ne.s32.totalorder %s22, %s23
    %p34 = scmp.eq.s32.totalorder %s14, 0
    %p35 = por %p33, %p34
    %p36 = scmp.ne.s32.totalorder %s22, %s23
    %p37 = scmp.eq.s32.totalorder %s15, 1
    %p38 = por %p36, %p37
    %p40 = scmp.ne.s32.totalorder %s23, %s39
    %p41 = scmp.eq.s32.totalorder %s15, 0
    %p42 = por %p40, %p41
    %s44 = sadd.s32 %s43, 1
    %p47 = scmp.eq.s32.totalorder %s9, 1
    %p48 = scmp.ne.s32.totalorder %s43, %s45
    %p49 = scmp.eq.s32.totalorder %s9, 0
    %p50 = por %p48, %p49
    %p51 = scmp.ne.s32.totalorder %s43, %s45
    %p52 = scmp.eq.s32.totalorder %s14, 1
    %p53 = por %p51, %p52
    %p54 = scmp.ne.s32.totalorder %s45, %s46
    %p55 = scmp.eq.s32.totalorder %s14, 0
    %p56 = por %p54, %p55
    %p57 = scmp.ne.s32.totalorder %s45, %s46
    %p58 = scmp.eq.s32.totalorder %s15, 1
    %p59 = por %p57, %p58
    %p61 = scmp.ne.s32.totalorder %s46, %s60
    %p62 = scmp.eq.s32.totalorder %s15, 0
    %p63 = por %p61, %p62
    %s65 = sadd.s32 %s64, 1
    %p68 = scmp.eq.s32.totalorder %s9, 1
    %p69 = scmp.ne.s32.totalorder %s64, %s66
    %p70 = scmp.eq.s32.totalorder %s9, 0
    %p71 = por %p69, %p70
    %p72 = scmp.ne.s32.totalorder %s64, %s66
    %p73 = scmp.eq.s32.totalorder %s14, 1
    %p74 = por %p72, %p73
    %p75 = scmp.ne.s32.totalorder %s66, %s67
    %p76 = scmp.eq.s32.totalorder %s14, 0
    %p77 = por %p75, %p76
    %p78 = scmp.ne.s32.totalorder %s66, %s67
    %p79 = scmp.eq.s32.totalorder %s15, 1
    %p80 = por %p78, %p79
    %p82 = scmp.ne.s32.totalorder %s67, %s81
    %p83 = scmp.eq.s32.totalorder %s15, 0
    %p84 = por %p82, %p83
    %s85 = ssub.s32 %s9, %s16
    %p86 = scmp.eq.s32.totalorder %s85, 0
    %s88 = sadd.s32 %s87, 1
    %s89 = scalar_select %p86, %s87, %s88
    %p92 = pneg %p86
    %p93 = scmp.eq.s32.totalorder %s9, 1
    %p94 = por %p92, %p93
    %p95 = scmp.ne.s32.totalorder %s87, %s90
    %p96 = scmp.eq.s32.totalorder %s9, 0
    %p97 = por %p95, %p96
    %p98 = scmp.ne.s32.totalorder %s87, %s90
    %p99 = scmp.eq.s32.totalorder %s14, 1
    %p100 = por %p98, %p99
    %p101 = scmp.ne.s32.totalorder %s90, %s91
    %p102 = scmp.eq.s32.totalorder %s14, 0
    %p103 = por %p101, %p102
    %p104 = scmp.ne.s32.totalorder %s90, %s91
    %p105 = scmp.eq.s32.totalorder %s15, 1
    %p106 = por %p104, %p105
    %p108 = scmp.ne.s32.totalorder %s91, %s107
    %p109 = scmp.eq.s32.totalorder %s15, 0
    %p110 = por %p108, %p109
    %p111 = scmp.le.s32.totalorder 1, %s9
    %p112 = scmp.lt.s32.totalorder %s9, 3
    %p113 = pnand %p111, %p112
    %p114 = pneg %p113
    // Predicated region
    $region9: #{_lambda_.11} parent=5 // pred_check
      _
    $region10: #{_lambda_.11} parent=5 // pred_check_branch
      %116 = sbr.rel (%p113) target = $region12
    $region11: #{_lambda_.11} parent=5 // pred_region
      %s117 = ssub.s32 %s9, 1
      // Predicated region
      $region13: #{_lambda_.11} parent=11 // pred_check
        %p118 = pneg %p56
      $region14: #{_lambda_.11} parent=11 // pred_check_branch
        %120 = sbr.rel (%p118) target = $region16
      $region15: #{_lambda_.11} parent=11 // pred_region
        _
      $region16: #{_lambda_.11} parent=11 // pred_fallthru
        _
      // Predicated region
      $region17: #{_lambda_.11} parent=11 // pred_check
        %p121 = pneg %p77
      $region18: #{_lambda_.11} parent=11 // pred_check_branch
        %123 = sbr.rel (%p121) target = $region20
      $region19: #{_lambda_.11} parent=11 // pred_region
        _
      $region20: #{_lambda_.11} parent=11 // pred_fallthru
        _
    $region12: #{_lambda_.11} parent=5 // pred_fallthru
      _
    %p124 = scmp.lt.s32.totalorder %s9, 2
    // Predicated region
    $region21: #{_lambda_.11} parent=5 // pred_check
      %p125 = pneg %p124
    $region22: #{_lambda_.11} parent=5 // pred_check_branch
      %127 = sbr.rel (%p125) target = $region24
    $region23: #{_lambda_.11} parent=5 // pred_region
      // Predicated region
      $region25: #{_lambda_.11} parent=23 // pred_check
        %p128 = pneg %p29
      $region26: #{_lambda_.11} parent=23 // pred_check_branch
        %130 = sbr.rel (%p128) target = $region28
      $region27: #{_lambda_.11} parent=23 // pred_region
        %s131 = smul.u32 32, %s9
        %p132 = scmp.lt.s32.totalorder %s131, 63
        %s133 = scalar_select %p132, %s131, 63
        %s134 = smul.addr %s133, 8
        %s135 = scalar_lea.vmem %s0, %s134
        %s136 = smul.u32 32, %s9
      $region28: #{_lambda_.11} parent=23 // pred_fallthru
        _
    $region24: #{_lambda_.11} parent=5 // pred_fallthru
      _
    %p137 = scmp.le.s32.totalorder 1, %s9
    %p138 = scmp.lt.s32.totalorder %s9, 3
    %p139 = pnand %p137, %p138
    %p140 = pneg %p139
    // Predicated region
    $region29: #{_lambda_.11} parent=5 // pred_check
      _
    $region30: #{_lambda_.11} parent=5 // pred_check_branch
      %142 = sbr.rel (%p139) target = $region32
    $region31: #{_lambda_.11} parent=5 // pred_region
      %s143 = ssub.s32 %s9, 1
      %s144 = smul.u32 32, %s14
      %p145 = scmp.lt.s32.totalorder %s144, 63
      %s146 = scalar_select %p145, %s144, 63
      %s147 = smul.addr %s146, 8
      %s148 = scalar_lea.vmem %s0, %s147
      %p149 = pneg %p35
      %p150 = pneg %p32
      %p151 = pneg %p56
      %p152 = pneg %p53
      %p153 = pneg %p77
      %p154 = pneg %p74
      %p155 = pneg %p103
      %p156 = pneg %p100
      %s157 = smul.u32 32, %s14
      %p158 = scmp.lt.s32.totalorder %s157, 63
      %s159 = scalar_select %p158, %s157, 63
      %s160 = smul.addr %s159, 8
      %s161 = scalar_lea.vmem %s3, %s160
      %s162 = smul.u32 32, %s14
      %p163 = scmp.lt.s32.totalorder %s162, 63
      %s164 = scalar_select %p163, %s162, 63
      %s165 = smul.addr %s164, 8
      %s166 = scalar_lea.vmem %s0, %s165
      %s167 = smul.u32 32, %s14
      %s168 = smul.u32 32, %s14
      %p169 = scmp.lt.s32.totalorder %s168, 63
      %s170 = scalar_select %p169, %s168, 63
      %s171 = smul.addr %s170, 8
      %s172 = scalar_lea.vmem %s3, %s171
      %s173 = smul.u32 32, %s14
      %v174 = vld [vmem:[%s166] sm:$0xff]
      %v175 = vld [vmem:[%s166 + $0x8] sm:$0xff]
      %v176 = vld [vmem:[%s166 + $0x10] sm:$0xff]
      %v177 = vld [vmem:[%s166 + $0x18] sm:$0xff]
      %v178 = vld [vmem:[%s166 + $0x20] sm:$0xff]
      %v179 = vld [vmem:[%s166 + $0x28] sm:$0xff]
      %v180 = vld [vmem:[%s166 + $0x30] sm:$0xff]
      %v181 = vld [vmem:[%s166 + $0x38] sm:$0xff]
      %v182 = vld [vmem:[%s166 + $0x40] sm:$0xff]
      %v183 = vld [vmem:[%s166 + $0x48] sm:$0xff]
      %v184 = vld [vmem:[%s166 + $0x50] sm:$0xff]
      %v185 = vld [vmem:[%s166 + $0x58] sm:$0xff]
      %v186 = vld [vmem:[%s166 + $0x60] sm:$0xff]
      %v187 = vld [vmem:[%s166 + $0x68] sm:$0xff]
      %v188 = vld [vmem:[%s166 + $0x70] sm:$0xff]
      %v189 = vld [vmem:[%s166 + $0x78] sm:$0xff]
      %v190 = vld [vmem:[%s166 + $0x80] sm:$0xff]
      %v191 = vld [vmem:[%s166 + $0x88] sm:$0xff]
      %v192 = vld [vmem:[%s166 + $0x90] sm:$0xff]
      %v193 = vld [vmem:[%s166 + $0x98] sm:$0xff]
      %v194 = vld [vmem:[%s166 + $0xa0] sm:$0xff]
      %v195 = vld [vmem:[%s166 + $0xa8] sm:$0xff]
      %v196 = vld [vmem:[%s166 + $0xb0] sm:$0xff]
      %v197 = vld [vmem:[%s166 + $0xb8] sm:$0xff]
      %v198 = vld [vmem:[%s166 + $0xc0] sm:$0xff]
      %v199 = vld [vmem:[%s166 + $0xc8] sm:$0xff]
      %v200 = vld [vmem:[%s166 + $0xd0] sm:$0xff]
      %v201 = vld [vmem:[%s166 + $0xd8] sm:$0xff]
      %v202 = vld [vmem:[%s166 + $0xe0] sm:$0xff]
      %v203 = vld [vmem:[%s166 + $0xe8] sm:$0xff]
      %v204 = vld [vmem:[%s166 + $0xf0] sm:$0xff]
      %v205 = vld [vmem:[%s166 + $0xf8] sm:$0xff]
      %v206 = vld [vmem:[%s1] sm:$0xff]
      %v207 = vld [vmem:[%s1 + $0x8] sm:$0xff]
      %v208 = vld [vmem:[%s1 + $0x10] sm:$0xff]
      %v209 = vld [vmem:[%s1 + $0x18] sm:$0xff]
      %v210 = vld [vmem:[%s2] sm:$0x1]
      %v212 = vlaneseq
      %v213 = vshrl.u32 %v212, 7
      %v214 = vsub.s32 0, %v213
      %v215 = vrot.slane %v210, %v214
      %vm217 = vcmask 261120
      %v219 = vsel %vm217, %v174, 0
      %v222 = vsel %vm217, %v175, 0
      %v225 = vsel %vm217, %v176, 0
      %v228 = vsel %vm217, %v177, 0
      %v231 = vsel %vm217, %v178, 0
      %v234 = vsel %vm217, %v179, 0
      %v237 = vsel %vm217, %v180, 0
      %v240 = vsel %vm217, %v181, 0
      %v243 = vsel %vm217, %v182, 0
      %v246 = vsel %vm217, %v183, 0
      %v249 = vsel %vm217, %v184, 0
      %v252 = vsel %vm217, %v185, 0
      %v255 = vsel %vm217, %v186, 0
      %v258 = vsel %vm217, %v187, 0
      %v261 = vsel %vm217, %v188, 0
      %v264 = vsel %vm217, %v189, 0
      %v267 = vsel %vm217, %v190, 0
      %v270 = vsel %vm217, %v191, 0
      %v273 = vsel %vm217, %v192, 0
      %v276 = vsel %vm217, %v193, 0
      %v279 = vsel %vm217, %v194, 0
      %v282 = vsel %vm217, %v195, 0
      %v285 = vsel %vm217, %v196, 0
      %v288 = vsel %vm217, %v197, 0
      %v291 = vsel %vm217, %v198, 0
      %v294 = vsel %vm217, %v199, 0
      %v297 = vsel %vm217, %v200, 0
      %v300 = vsel %vm217, %v201, 0
      %v303 = vsel %vm217, %v202, 0
      %v306 = vsel %vm217, %v203, 0
      %v309 = vsel %vm217, %v204, 0
      %v312 = vsel %vm217, %v205, 0
      %314 = vmatprep.subr.mxu0 0.0
      %315 = vmatpush1.msra.mxu0 %v206
      %316 = vmatprep.subr.mxu0 0.0
      %317 = vmatpush1.msra.mxu0 %v207
      %318 = vmatprep.subr.mxu0 0.0
      %319 = vmatpush1.msra.mxu0 %v208
      %320 = vmatprep.subr.mxu0 0.0
      %321 = vmatpush1.msra.mxu0 %v209
      %322 = vmatprep.subr.mxu0 0.0
      %323 = vmatpush1.msra.mxu0 0.0
      %324 = vmatprep.subr.mxu0 0.0
      %325 = vmatpush1.msra.mxu0 0.0
      %326 = vmatprep.subr.mxu0 0.0
      %327 = vmatpush1.msra.mxu0 0.0
      %328 = vmatprep.subr.mxu0 0.0
      %329 = vmatpush1.msra.mxu0 0.0
      %330 = vmatprep.subr.mxu0 0.0
      %331 = vmatpush1.msra.mxu0 0.0
      %332 = vmatprep.subr.mxu0 0.0
      %333 = vmatpush1.msra.mxu0 0.0
      %334 = vmatprep.subr.mxu0 0.0
      %335 = vmatpush1.msra.mxu0 0.0
      %336 = vmatprep.subr.mxu0 0.0
      %337 = vmatpush1.msra.mxu0 0.0
      %338 = vmatprep.subr.mxu0 0.0
      %339 = vmatpush1.msra.mxu0 0.0
      %340 = vmatprep.subr.mxu0 0.0
      %341 = vmatpush1.msra.mxu0 0.0
      %342 = vmatprep.subr.mxu0 0.0
      %343 = vmatpush1.msra.mxu0 0.0
      %344 = vmatprep.subr.mxu0 0.0
      %345 = vmatpush1.msra.mxu0 0.0
      %346 = vmatprep.subr.mxu0 0.0
      %347 = vmatpush1.msra.mxu0 0.0
      %348 = vmatprep.subr.mxu0 0.0
      %349 = vmatpush1.msra.mxu0 0.0
      %350 = vmatprep.subr.mxu0 0.0
      %351 = vmatpush1.msra.mxu0 0.0
      %352 = vmatprep.subr.mxu0 0.0
      %353 = vmatpush1.msra.mxu0 0.0
      %354 = vmatprep.subr.mxu0 0.0
      %355 = vmatpush1.msra.mxu0 0.0
      %356 = vmatprep.subr.mxu0 0.0
      %357 = vmatpush1.msra.mxu0 0.0
      %358 = vmatprep.subr.mxu0 0.0
      %359 = vmatpush1.msra.mxu0 0.0
      %360 = vmatprep.subr.mxu0 0.0
      %361 = vmatpush1.msra.mxu0 0.0
      %362 = vmatprep.subr.mxu0 0.0
      %363 = vmatpush1.msra.mxu0 0.0
      %364 = vmatprep.subr.mxu0 0.0
      %365 = vmatpush1.msra.mxu0 0.0
      %366 = vmatprep.subr.mxu0 0.0
      %367 = vmatpush1.msra.mxu0 0.0
      %368 = vmatprep.subr.mxu0 0.0
      %369 = vmatpush1.msra.mxu0 0.0
      %370 = vmatprep.subr.mxu0 0.0
      %371 = vmatpush1.msra.mxu0 0.0
      %372 = vmatprep.subr.mxu0 0.0
      %373 = vmatpush1.msra.mxu0 0.0
      %374 = vmatprep.subr.mxu0 0.0
      %375 = vmatpush1.msra.mxu0 0.0
      %376 = vmatprep.subr.mxu0 0.0
      %377 = vmatpush1.msra.mxu0 0.0
      %378 = vmatprep.mubr.f32.mxu0 0.0
      %379 = vmatmul.mubr.f32.gmra.mrb[0].mxu0 %v219
      %v380 = vpop.f32.mrb[0].mxu0
      %v381 = vadd.f32 %v215, %v380
      %v382 = vpop.f32.mrb[0].mxu0
      %383 = vmatprep.mubr.f32.mxu0 0.0
      %384 = vmatmul.mubr.f32.gmra.mrb[0].mxu0 %v222
      %v385 = vpop.f32.mrb[0].mxu0
      %v386 = vadd.f32 %v215, %v385
      %v387 = vpop.f32.mrb[0].mxu0
      %388 = vmatprep.mubr.f32.mxu0 0.0
      %389 = vmatmul.mubr.f32.gmra.mrb[0].mxu0 %v225
      %v390 = vpop.f32.mrb[0].mxu0
      %v391 = vadd.f32 %v215, %v390
      %v392 = vpop.f32.mrb[0].mxu0
      %393 = vmatprep.mubr.f32.mxu0 0.0
      %394 = vmatmul.mubr.f32.gmra.mrb[0].mxu0 %v228
      %v395 = vpop.f32.mrb[0].mxu0
      %v396 = vadd.f32 %v215, %v395
      %v397 = vpop.f32.mrb[0].mxu0
      %398 = vmatprep.mubr.f32.mxu0 0.0
      %399 = vmatmul.mubr.f32.gmra.mrb[0].mxu0 %v231
      %v400 = vpop.f32.mrb[0].mxu0
      %v401 = vadd.f32 %v215, %v400
      %v402 = vpop.f32.mrb[0].mxu0
      %403 = vmatprep.mubr.f32.mxu0 0.0
      %404 = vmatmul.mubr.f32.gmra.mrb[0].mxu0 %v234
      %v405 = vpop.f32.mrb[0].mxu0
      %v406 = vadd.f32 %v215, %v405
      %v407 = vpop.f32.mrb[0].mxu0
      %408 = vmatprep.mubr.f32.mxu0 0.0
      %409 = vmatmul.mubr.f32.gmra.mrb[0].mxu0 %v237
      %v410 = vpop.f32.mrb[0].mxu0
      %v411 = vadd.f32 %v215, %v410
      %v412 = vpop.f32.mrb[0].mxu0
      %413 = vmatprep.mubr.f32.mxu0 0.0
      %414 = vmatmul.mubr.f32.gmra.mrb[0].mxu0 %v240
      %v415 = vpop.f32.mrb[0].mxu0
      %v416 = vadd.f32 %v215, %v415
      %v417 = vpop.f32.mrb[0].mxu0
      %418 = vmatprep.mubr.f32.mxu0 0.0
      %419 = vmatmul.mubr.f32.gmra.mrb[0].mxu0 %v243
      %v420 = vpop.f32.mrb[0].mxu0
      %v421 = vadd.f32 %v215, %v420
      %v422 = vpop.f32.mrb[0].mxu0
      %423 = vmatprep.mubr.f32.mxu0 0.0
      %424 = vmatmul.mubr.f32.gmra.mrb[0].mxu0 %v246
      %v425 = vpop.f32.mrb[0].mxu0
      %v426 = vadd.f32 %v215, %v425
      %v427 = vpop.f32.mrb[0].mxu0
      %428 = vmatprep.mubr.f32.mxu0 0.0
      %429 = vmatmul.mubr.f32.gmra.mrb[0].mxu0 %v249
      %v430 = vpop.f32.mrb[0].mxu0
      %v431 = vadd.f32 %v215, %v430
      %v432 = vpop.f32.mrb[0].mxu0
      %433 = vmatprep.mubr.f32.mxu0 0.0
      %434 = vmatmul.mubr.f32.gmra.mrb[0].mxu0 %v252
      %v435 = vpop.f32.mrb[0].mxu0
      %v436 = vadd.f32 %v215, %v435
      %v437 = vpop.f32.mrb[0].mxu0
      %438 = vmatprep.mubr.f32.mxu0 0.0
      %439 = vmatmul.mubr.f32.gmra.mrb[0].mxu0 %v255
      %v440 = vpop.f32.mrb[0].mxu0
      %v441 = vadd.f32 %v215, %v440
      %v442 = vpop.f32.mrb[0].mxu0
      %443 = vmatprep.mubr.f32.mxu0 0.0
      %444 = vmatmul.mubr.f32.gmra.mrb[0].mxu0 %v258
      %v445 = vpop.f32.mrb[0].mxu0
      %v446 = vadd.f32 %v215, %v445
      %v447 = vpop.f32.mrb[0].mxu0
      %448 = vmatprep.mubr.f32.mxu0 0.0
      %449 = vmatmul.mubr.f32.gmra.mrb[0].mxu0 %v261
      %v450 = vpop.f32.mrb[0].mxu0
      %v451 = vadd.f32 %v215, %v450
      %v452 = vpop.f32.mrb[0].mxu0
      %453 = vmatprep.mubr.f32.mxu0 0.0
      %454 = vmatmul.mubr.f32.gmra.mrb[0].mxu0 %v264
      %v455 = vpop.f32.mrb[0].mxu0
      %v456 = vadd.f32 %v215, %v455
      %v457 = vpop.f32.mrb[0].mxu0
      %458 = vmatprep.mubr.f32.mxu0 0.0
      %459 = vmatmul.mubr.f32.gmra.mrb[0].mxu0 %v267
      %v460 = vpop.f32.mrb[0].mxu0
      %v461 = vadd.f32 %v215, %v460
      %v462 = vpop.f32.mrb[0].mxu0
      %463 = vmatprep.mubr.f32.mxu0 0.0
      %464 = vmatmul.mubr.f32.gmra.mrb[0].mxu0 %v270
      %v465 = vpop.f32.mrb[0].mxu0
      %v466 = vadd.f32 %v215, %v465
      %v467 = vpop.f32.mrb[0].mxu0
      %468 = vmatprep.mubr.f32.mxu0 0.0
      %469 = vmatmul.mubr.f32.gmra.mrb[0].mxu0 %v273
      %v470 = vpop.f32.mrb[0].mxu0
      %v471 = vadd.f32 %v215, %v470
      %v472 = vpop.f32.mrb[0].mxu0
      %473 = vmatprep.mubr.f32.mxu0 0.0
      %474 = vmatmul.mubr.f32.gmra.mrb[0].mxu0 %v276
      %v475 = vpop.f32.mrb[0].mxu0
      %v476 = vadd.f32 %v215, %v475
      %v477 = vpop.f32.mrb[0].mxu0
      %478 = vmatprep.mubr.f32.mxu0 0.0
      %479 = vmatmul.mubr.f32.gmra.mrb[0].mxu0 %v279
      %v480 = vpop.f32.mrb[0].mxu0
      %v481 = vadd.f32 %v215, %v480
      %v482 = vpop.f32.mrb[0].mxu0
      %483 = vmatprep.mubr.f32.mxu0 0.0
      %484 = vmatmul.mubr.f32.gmra.mrb[0].mxu0 %v282
      %v485 = vpop.f32.mrb[0].mxu0
      %v486 = vadd.f32 %v215, %v485
      %v487 = vpop.f32.mrb[0].mxu0
      %488 = vmatprep.mubr.f32.mxu0 0.0
      %489 = vmatmul.mubr.f32.gmra.mrb[0].mxu0 %v285
      %v490 = vpop.f32.mrb[0].mxu0
      %v491 = vadd.f32 %v215, %v490
      %v492 = vpop.f32.mrb[0].mxu0
      %493 = vmatprep.mubr.f32.mxu0 0.0
      %494 = vmatmul.mubr.f32.gmra.mrb[0].mxu0 %v288
      %v495 = vpop.f32.mrb[0].mxu0
      %v496 = vadd.f32 %v215, %v495
      %v497 = vpop.f32.mrb[0].mxu0
      %498 = vmatprep.mubr.f32.mxu0 0.0
      %499 = vmatmul.mubr.f32.gmra.mrb[0].mxu0 %v291
      %v500 = vpop.f32.mrb[0].mxu0
      %v501 = vadd.f32 %v215, %v500
      %v502 = vpop.f32.mrb[0].mxu0
      %503 = vmatprep.mubr.f32.mxu0 0.0
      %504 = vmatmul.mubr.f32.gmra.mrb[0].mxu0 %v294
      %v505 = vpop.f32.mrb[0].mxu0
      %v506 = vadd.f32 %v215, %v505
      %v507 = vpop.f32.mrb[0].mxu0
      %508 = vmatprep.mubr.f32.mxu0 0.0
      %509 = vmatmul.mubr.f32.gmra.mrb[0].mxu0 %v297
      %v510 = vpop.f32.mrb[0].mxu0
      %v511 = vadd.f32 %v215, %v510
      %v512 = vpop.f32.mrb[0].mxu0
      %513 = vmatprep.mubr.f32.mxu0 0.0
      %514 = vmatmul.mubr.f32.gmra.mrb[0].mxu0 %v300
      %v515 = vpop.f32.mrb[0].mxu0
      %v516 = vadd.f32 %v215, %v515
      %v517 = vpop.f32.mrb[0].mxu0
      %518 = vmatprep.mubr.f32.mxu0 0.0
      %519 = vmatmul.mubr.f32.gmra.mrb[0].mxu0 %v303
      %v520 = vpop.f32.mrb[0].mxu0
      %v521 = vadd.f32 %v215, %v520
      %v522 = vpop.f32.mrb[0].mxu0
      %523 = vmatprep.mubr.f32.mxu0 0.0
      %524 = vmatmul.mubr.f32.gmra.mrb[0].mxu0 %v306
      %v525 = vpop.f32.mrb[0].mxu0
      %v526 = vadd.f32 %v215, %v525
      %v527 = vpop.f32.mrb[0].mxu0
      %528 = vmatprep.mubr.f32.mxu0 0.0
      %529 = vmatmul.mubr.f32.gmra.mrb[0].mxu0 %v309
      %v530 = vpop.f32.mrb[0].mxu0
      %v531 = vadd.f32 %v215, %v530
      %v532 = vpop.f32.mrb[0].mxu0
      %533 = vmatprep.mubr.f32.mxu0 0.0
      %534 = vmatmul.mubr.f32.gmra.mrb[0].mxu0 %v312
      %v535 = vpop.f32.mrb[0].mxu0
      %v536 = vadd.f32 %v215, %v535
      %v537 = vpop.f32.mrb[0].mxu0
      %538 = vdwg.mxu0
      %539 = vst [vmem:[%s172] sm:$0xff] %v381
      %540 = vst [vmem:[%s172 + $0x8] sm:$0xff] %v386
      %541 = vst [vmem:[%s172 + $0x10] sm:$0xff] %v391
      %542 = vst [vmem:[%s172 + $0x18] sm:$0xff] %v396
      %543 = vst [vmem:[%s172 + $0x20] sm:$0xff] %v401
      %544 = vst [vmem:[%s172 + $0x28] sm:$0xff] %v406
      %545 = vst [vmem:[%s172 + $0x30] sm:$0xff] %v411
      %546 = vst [vmem:[%s172 + $0x38] sm:$0xff] %v416
      %547 = vst [vmem:[%s172 + $0x40] sm:$0xff] %v421
      %548 = vst [vmem:[%s172 + $0x48] sm:$0xff] %v426
      %549 = vst [vmem:[%s172 + $0x50] sm:$0xff] %v431
      %550 = vst [vmem:[%s172 + $0x58] sm:$0xff] %v436
      %551 = vst [vmem:[%s172 + $0x60] sm:$0xff] %v441
      %552 = vst [vmem:[%s172 + $0x68] sm:$0xff] %v446
      %553 = vst [vmem:[%s172 + $0x70] sm:$0xff] %v451
      %554 = vst [vmem:[%s172 + $0x78] sm:$0xff] %v456
      %555 = vst [vmem:[%s172 + $0x80] sm:$0xff] %v461
      %556 = vst [vmem:[%s172 + $0x88] sm:$0xff] %v466
      %557 = vst [vmem:[%s172 + $0x90] sm:$0xff] %v471
      %558 = vst [vmem:[%s172 + $0x98] sm:$0xff] %v476
      %559 = vst [vmem:[%s172 + $0xa0] sm:$0xff] %v481
      %560 = vst [vmem:[%s172 + $0xa8] sm:$0xff] %v486
      %561 = vst [vmem:[%s172 + $0xb0] sm:$0xff] %v491
      %562 = vst [vmem:[%s172 + $0xb8] sm:$0xff] %v496
      %563 = vst [vmem:[%s172 + $0xc0] sm:$0xff] %v501
      %564 = vst [vmem:[%s172 + $0xc8] sm:$0xff] %v506
      %565 = vst [vmem:[%s172 + $0xd0] sm:$0xff] %v511
      %566 = vst [vmem:[%s172 + $0xd8] sm:$0xff] %v516
      %567 = vst [vmem:[%s172 + $0xe0] sm:$0xff] %v521
      %568 = vst [vmem:[%s172 + $0xe8] sm:$0xff] %v526
      %569 = vst [vmem:[%s172 + $0xf0] sm:$0xff] %v531
      %570 = vst [vmem:[%s172 + $0xf8] sm:$0xff] %v536
      %s571 = smul.u32 32, %s14
      %p572 = scmp.lt.s32.totalorder %s571, 63
      %s573 = scalar_select %p572, %s571, 63
      %s574 = smul.addr %s573, 8
      %s575 = scalar_lea.vmem %s3, %s574
      // Predicated region
      $region33: #{_lambda_.11} parent=31 // pred_check
        %p576 = pneg %p100
      $region34: #{_lambda_.11} parent=31 // pred_check_branch
        %578 = sbr.rel (%p576) target = $region36
      $region35: #{_lambda_.11} parent=31 // pred_region
        %s579 = smul.u32 32, %s14
      $region36: #{_lambda_.11} parent=31 // pred_fallthru
        _
    $region32: #{_lambda_.11} parent=5 // pred_fallthru
      _
    %p580 = scmp.le.s32.totalorder 2, %s9
    // Predicated region
    $region37: #{_lambda_.11} parent=5 // pred_check
      %p581 = pneg %p580
    $region38: #{_lambda_.11} parent=5 // pred_check_branch
      %583 = sbr.rel (%p581) target = $region40
    $region39: #{_lambda_.11} parent=5 // pred_region
      %s584 = ssub.s32 %s9, 2
      // Predicated region
      $region41: #{_lambda_.11} parent=39 // pred_check
        %p585 = pneg %p106
      $region42: #{_lambda_.11} parent=39 // pred_check_branch
        %587 = sbr.rel (%p585) target = $region44
      $region43: #{_lambda_.11} parent=39 // pred_region
        %s588 = smul.u32 32, %s15
        %p589 = scmp.lt.s32.totalorder %s588, 63
        %s590 = scalar_select %p589, %s588, 63
        %s591 = smul.addr %s590, 8
        %s592 = scalar_lea.vmem %s3, %s591
      $region44: #{_lambda_.11} parent=39 // pred_fallthru
        _
    $region40: #{_lambda_.11} parent=5 // pred_fallthru
      _
  $region6: #{_lambda_.11} parent=0 // loop_footer
    %s13 = sadd.s32 1, %s9
  $region7: #{_lambda_.11} parent=0 // loop_footer_branch
    %8 = sbr.rel target = $region3
  $region8: #{_lambda_.11} parent=0 // loop_exit
    _

</llo_original>
